<compile_context>
chip_gen: v7x
topology: tpu7x:2x2x1
jax: 0.10.0
libtpu: 0.0.40
codegen_flags: <defaults>
</compile_context>

<pallas_src>
import functools

import jax
import jax.numpy as jnp
import numpy as np
from jax import lax
from jax.experimental import pallas as pl
from jax.experimental.pallas import tpu as pltpu


def _round_up(x, m):
    return ((x + m - 1) // m) * m


def _crf_loss_kernel(em_ref, tags_ref, ptags_ref, len_ref, trans_s_ref,
                     etrans_ref, cmax_ref, start_ref, end_ref,
                     out_ref, alpha_ref, score_ref, *, chunk):
    tT, K, B = em_ref.shape
    tb = pl.program_id(1)            # time-tile index (inner, "arbitrary")
    nb = pl.num_programs(1)
    t0 = tb * tT
    f32 = jnp.float32

    lengths = len_ref[...]           # [1, B] int32: #valid timesteps per example
    etrans = etrans_ref[...]         # [K, K]  etrans[j, i] = exp(trans[i, j] - cmax[j])
    cmax = cmax_ref[...]             # [K, 1]  cmax[j] = max_i trans[i, j]
    start = start_ref[...]           # [K, 1]
    end = end_ref[...]               # [K, 1]

    # Loop-invariant lane-broadcast columns for the per-step VPU MAC:
    # erows[i][j, b] = exp(trans[i, j] - cmax[j])  (hoisted out of the loops).
    erows = [jnp.broadcast_to(etrans[:, i:i + 1], (K, B)) for i in range(K)]

    @pl.when(tb == 0)
    def _init():
        # t == 0 hoisted out of the recursion: alpha_0 = start + emissions[0].
        alpha_ref[...] = start + em_ref[0]
        score_ref[...] = jnp.zeros_like(score_ref)

    n_chunks = tT // chunk

    def chunk_body(c, carry):
        alpha, score = carry
        off = pl.multiple_of(c * chunk, chunk)

        # ---------- gold-path (numerator) score: vectorized over the chunk ------
        em_c = em_ref[pl.ds(off, chunk)]                       # [chunk, K, B]
        tags_c = tags_ref[pl.ds(off, chunk), :]                # [chunk, B]
        ptags_c = ptags_ref[pl.ds(off, chunk), :]              # [chunk, B]

        tg = t0 + off + lax.broadcasted_iota(jnp.int32, (chunk, B), 0)
        m = (tg < lengths).astype(f32)                         # emission mask
        mt = jnp.where(tg >= 1, m, 0.0)                        # transition mask
        is_first = (tg == 0).astype(f32)
        is_last = (tg == lengths - 1).astype(f32)

        iota_k = lax.broadcasted_iota(jnp.int32, (chunk, K, B), 1)
        oh_cur = (iota_k == tags_c[:, None, :]).astype(f32)    # one-hot(tag_t)
        emit_g = jnp.sum(em_c * oh_cur, axis=1)                # em[t, tag_t, b]
        start_g = jnp.sum(start[None] * oh_cur, axis=1)        # start[tag_t]
        end_g = jnp.sum(end[None] * oh_cur, axis=1)            # end[tag_t]

        # trans[tag_{t-1}, tag_t] via flattened-index scalar selects.  Stays
        # lane-dense in [chunk, B] (no [.., B, K] relayout, no tiny-N MXU matmul);
        # K*K static scalar reads from the SMEM transition table.
        idx = ptags_c * K + tags_c
        trans_g = jnp.zeros((chunk, B), f32)
        for i in range(K):
            for j in range(K):
                trans_g = trans_g + jnp.where(idx == (i * K + j),
                                              trans_s_ref[i, j], 0.0)

        blk = emit_g * m + trans_g * mt + start_g * is_first + end_g * is_last
        score = score + jnp.sum(blk, axis=0, keepdims=True)    # [1, B]

        # ---------- forward recursion (the only serial part), unrolled x chunk --
        for r in range(chunk):
            t = t0 + off + r
            em_t = em_ref[off + r]                              # [K, B]
            amax = jnp.max(alpha, axis=0, keepdims=True)        # [1, B] (XLU)
            ea = jnp.exp(alpha - amax)                          # [K, B] (EUP)
            # s[j, b] = sum_i exp(trans[i, j] - cmax[j]) * ea[i, b]
            # K broadcast MACs on the VPU (tiny K: keeps MXU push / result-FIFO
            # pop latency off the serial chain on v5e/v6e).
            s = None
            q = 0
            while q + 1 < K:
                term = (erows[q] * ea[q:q + 1, :]
                        + erows[q + 1] * ea[q + 1:q + 2, :])
                s = term if s is None else s + term
                q += 2
            if q < K:
                term = erows[q] * ea[q:q + 1, :]
                s = term if s is None else s + term
            alpha_new = (em_t + cmax) + (amax + jnp.log(s))
            # t == 0 is handled at init; alpha is frozen past each seq's length.
            keep = jnp.logical_and(t > 0, t < lengths)          # [1, B]
            alpha = jnp.where(keep, alpha_new, alpha)

        return alpha, score

    alpha, score = lax.fori_loop(0, n_chunks, chunk_body,
                                 (alpha_ref[...], score_ref[...]))
    alpha_ref[...] = alpha
    score_ref[...] = score

    # ---------- finalize: log-partition and per-example loss --------------------
    @pl.when(tb == nb - 1)
    def _finalize():
        af = alpha + end                                        # [K, B]
        am = jnp.max(af, axis=0, keepdims=True)
        logz = am + jnp.log(jnp.sum(jnp.exp(af - am), axis=0, keepdims=True))
        out_ref[...] = logz - score                             # [1, B]


def crf_loss(y_true, y_pred, mask, transitions, start_trans, end_trans,
             *, block_t=None, block_b=None, chunk=8):
    """CRF negative log-likelihood per example.

    y_true: [B, T] int gold tags;  y_pred: [B, T, K] float emissions;
    mask:   [B, T] right-padded (mask[:, 0] == 1).  Returns [B] float32.
    """
    B, T, K = y_pred.shape

    # time-major, batch-on-lanes layouts
    em = jnp.transpose(y_pred.astype(jnp.float32), (1, 2, 0))        # [T, K, B]
    tags = jnp.transpose(y_true.astype(jnp.int32), (1, 0))           # [T, B]
    ptags = jnp.concatenate([tags[:1], tags[:-1]], axis=0)           # tag_{t-1}
    lengths = jnp.sum(mask.astype(jnp.int32), axis=1)[None, :]       # [1, B]

    # ---- tile sizes ----
    # Large time tiles amortize per-grid-step overhead; the in-kernel chunk loop
    # keeps code size bounded regardless of block_t.
    if block_t is None:
        block_t = min(128, _round_up(T, chunk))
    block_t = max(chunk, _round_up(block_t, chunk))
    assert block_t % chunk == 0
    if block_b is None:
        if B <= 128:
            # NOTE: at B << 128 every vector op runs at reduced lane occupancy;
            # batch >= 128 sequences per call for full throughput.
            block_b = _round_up(max(B, 8), 8)
        else:
            # 2-4 independent 128-lane slabs per step (overlaps the serial-chain
            # latency) while keeping >=2 batch tiles so both v7x cores get work.
            block_b = min(512, max(128, _round_up((B + 1) // 2, 128)))
    Bp = _round_up(B, block_b)
    Tp = _round_up(T, block_t)

    if Tp != T:
        em = jnp.pad(em, ((0, Tp - T), (0, 0), (0, 0)))
        tags = jnp.pad(tags, ((0, Tp - T), (0, 0)))
        ptags = jnp.pad(ptags, ((0, Tp - T), (0, 0)))
    if Bp != B:
        em = jnp.pad(em, ((0, 0), (0, 0), (0, Bp - B)))
        tags = jnp.pad(tags, ((0, 0), (0, Bp - B)))
        ptags = jnp.pad(ptags, ((0, 0), (0, Bp - B)))
        lengths = jnp.pad(lengths, ((0, 0), (0, Bp - B)), constant_values=1)

    # loop-invariant CRF parameters (stabilized transition exponentials)
    trans = transitions.astype(jnp.float32)                          # [K, K]
    cmax = jnp.max(trans, axis=0)                                    # [K]
    etrans = jnp.exp(trans.T - cmax[:, None])                        # [K, K]
    cmax = cmax[:, None]                                             # [K, 1]
    start = start_trans.astype(jnp.float32)[:, None]                 # [K, 1]
    end = end_trans.astype(jnp.float32)[:, None]                     # [K, 1]

    # explicit scoped-VMEM budget: double-buffered streams + scratch + headroom
    em_tile = block_t * K * block_b * 4
    tag_tile = block_t * block_b * 4
    vmem_limit = int(max(32 * 1024 * 1024,
                         2 * (em_tile + 2 * tag_tile + block_b * 4)
                         + (K + 1) * block_b * 4 + (8 << 20)))

    grid = (Bp // block_b, Tp // block_t)
    kernel = functools.partial(_crf_loss_kernel, chunk=chunk)
    out = pl.pallas_call(
        kernel,
        out_shape=jax.ShapeDtypeStruct((1, Bp), jnp.float32),
        grid=grid,
        in_specs=[
            pl.BlockSpec((block_t, K, block_b), lambda b, t: (t, 0, b)),   # em
            pl.BlockSpec((block_t, block_b), lambda b, t: (t, b)),         # tags
            pl.BlockSpec((block_t, block_b), lambda b, t: (t, b)),         # ptags
            pl.BlockSpec((1, block_b), lambda b, t: (0, b)),               # lengths
            pl.BlockSpec(memory_space=pltpu.MemorySpace.SMEM),             # raw trans (scalars)
            pl.BlockSpec((K, K), lambda b, t: (0, 0)),                     # exp(trans.T - cmax)
            pl.BlockSpec((K, 1), lambda b, t: (0, 0)),                     # cmax
            pl.BlockSpec((K, 1), lambda b, t: (0, 0)),                     # start
            pl.BlockSpec((K, 1), lambda b, t: (0, 0)),                     # end
        ],
        out_specs=pl.BlockSpec((1, block_b), lambda b, t: (0, b)),
        scratch_shapes=[pltpu.VMEM((K, block_b), jnp.float32),             # alpha
                        pltpu.VMEM((1, block_b), jnp.float32)],            # gold score
        compiler_params=pltpu.CompilerParams(
            dimension_semantics=("parallel", "arbitrary"),
            vmem_limit_bytes=vmem_limit),
    )(em, tags, ptags, lengths, trans, etrans, cmax, start, end)
    return out[0, :B]


def crf_loss_ref(y_true, y_pred, mask, transitions, start_trans, end_trans):
    """Pure-JAX reference (torchcrf-style NLL) for validation."""
    B, T, K = y_pred.shape
    em = y_pred.astype(jnp.float32)
    tags = y_true.astype(jnp.int32)
    m = mask.astype(jnp.float32)

    # gold score
    score = start_trans[tags[:, 0]] + em[jnp.arange(B), 0, tags[:, 0]]
    for t in range(1, T):
        score = score + (transitions[tags[:, t - 1], tags[:, t]]
                         + em[jnp.arange(B), t, tags[:, t]]) * m[:, t]
    seq_ends = jnp.sum(m, axis=1).astype(jnp.int32) - 1
    last_tags = tags[jnp.arange(B), seq_ends]
    score = score + end_trans[last_tags]

    # partition function
    alpha = start_trans[None, :] + em[:, 0]
    for t in range(1, T):
        b3 = alpha[:, :, None] + transitions[None, :, :] + em[:, t][:, None, :]
        nxt = jax.scipy.special.logsumexp(b3, axis=1)
        alpha = jnp.where(m[:, t][:, None] > 0, nxt, alpha)
    alpha = alpha + end_trans[None, :]
    log_z = jax.scipy.special.logsumexp(alpha, axis=-1)
    return log_z - score


if __name__ == "__main__":
    B, T, K = 8, 12, 8  # batch, sequence length, number of tags

    key = jax.random.PRNGKey(0)
    k_em, k_tag, k_tr, k_st, k_en = jax.random.split(key, 5)

    y_pred = jax.random.normal(k_em, (B, T, K), dtype=jnp.float32)
    y_true = jax.random.randint(k_tag, (B, T), 0, K, dtype=jnp.int32)

    # right-padded mask with varied lengths (includes length-1 and full-length)
    lengths = jnp.array([12, 7, 1, 9, 12, 3, 5, 10], dtype=jnp.int32)
    mask = (jnp.arange(T)[None, :] < lengths[:, None]).astype(jnp.float32)

    # deterministic synthetic CRF parameters
    transitions = 0.1 * jax.random.normal(k_tr, (K, K), dtype=jnp.float32)
    start_trans = 0.1 * jax.random.normal(k_st, (K,), dtype=jnp.float32)
    end_trans = 0.1 * jax.random.normal(k_en, (K,), dtype=jnp.float32)

    loss = crf_loss(y_true, y_pred, mask, transitions, start_trans, end_trans)
    loss = jax.block_until_ready(loss)

    ref = crf_loss_ref(y_true, y_pred, mask, transitions, start_trans, end_trans)
    np.testing.assert_allclose(np.asarray(loss), np.asarray(ref),
                               rtol=2e-3, atol=2e-3)

    print("KERNEL_OK")
</pallas_src>

<mosaic_0001>
module attributes {stable_mosaic.version = 11 : i64} {
  func.func @_crf_loss_kernel(%arg0: i32, %arg1: i32, %arg2: memref<16x8x8xf32, #tpu.memory_space<vmem>>, %arg3: memref<16x8xi32, #tpu.memory_space<vmem>>, %arg4: memref<16x8xi32, #tpu.memory_space<vmem>>, %arg5: memref<1x8xi32, #tpu.memory_space<vmem>>, %arg6: memref<8x8xf32, #tpu.memory_space<smem>>, %arg7: memref<8x8xf32, #tpu.memory_space<vmem>>, %arg8: memref<8x1xf32, #tpu.memory_space<vmem>>, %arg9: memref<8x1xf32, #tpu.memory_space<vmem>>, %arg10: memref<8x1xf32, #tpu.memory_space<vmem>>, %arg11: memref<1x8xf32, #tpu.memory_space<vmem>>, %arg12: memref<8x8xf32, #tpu.memory_space<vmem>>, %arg13: memref<1x8xf32, #tpu.memory_space<vmem>>) attributes {dimension_semantics = [#tpu.dimension_semantics<parallel>, #tpu.dimension_semantics<arbitrary>], iteration_bounds = array<i64: 1, 1>, scalar_prefetch = 0 : i64, scratch_operands = 2 : i64, tpu.core_type = #tpu.core_type<tc>, window_params = [{transform_indices = @transform_0, window_bounds = array<i64: 16, 8, 8>}, {transform_indices = @transform_1, window_bounds = array<i64: 16, 8>}, {transform_indices = @transform_2, window_bounds = array<i64: 16, 8>}, {transform_indices = @transform_3, window_bounds = array<i64: 1, 8>}, {transform_indices = @transform_4, window_bounds = array<i64: 8, 8>}, {pipeline_mode = #tpu.pipeline_mode<synchronous>, transform_indices = @transform_5, window_bounds = array<i64: 8, 8>}, {pipeline_mode = #tpu.pipeline_mode<synchronous>, transform_indices = @transform_6, window_bounds = array<i64: 8, 1>}, {pipeline_mode = #tpu.pipeline_mode<synchronous>, transform_indices = @transform_7, window_bounds = array<i64: 8, 1>}, {pipeline_mode = #tpu.pipeline_mode<synchronous>, transform_indices = @transform_8, window_bounds = array<i64: 8, 1>}, {transform_indices = @transform_9, window_bounds = array<i64: 1, 8>}]} {
    %c16_i32 = arith.constant 16 : i32
    %0 = arith.muli %arg1, %c16_i32 : i32
    %c0 = arith.constant 0 : index
    %c0_0 = arith.constant 0 : index
    %1 = vector.load %arg5[%c0, %c0_0] : memref<1x8xi32, #tpu.memory_space<vmem>>, vector<1x8xi32>
    %c0_1 = arith.constant 0 : index
    %c0_2 = arith.constant 0 : index
    %2 = vector.load %arg7[%c0_1, %c0_2] : memref<8x8xf32, #tpu.memory_space<vmem>>, vector<8x8xf32>
    %c0_3 = arith.constant 0 : index
    %c0_4 = arith.constant 0 : index
    %3 = vector.load %arg8[%c0_3, %c0_4] : memref<8x1xf32, #tpu.memory_space<vmem>>, vector<8x1xf32>
    %c0_5 = arith.constant 0 : index
    %c0_6 = arith.constant 0 : index
    %4 = vector.load %arg9[%c0_5, %c0_6] : memref<8x1xf32, #tpu.memory_space<vmem>>, vector<8x1xf32>
    %c0_7 = arith.constant 0 : index
    %c0_8 = arith.constant 0 : index
    %5 = vector.load %arg10[%c0_7, %c0_8] : memref<8x1xf32, #tpu.memory_space<vmem>>, vector<8x1xf32>
    %6 = vector.extract_strided_slice %2 {offsets = [0, 0], sizes = [8, 1], strides = [1, 1]} : vector<8x8xf32> to vector<8x1xf32>
    %7 = vector.shape_cast %6 : vector<8x1xf32> to vector<8x1xf32>
    %8 = vector.broadcast %7 : vector<8x1xf32> to vector<8x8xf32>
    %9 = vector.extract_strided_slice %2 {offsets = [0, 1], sizes = [8, 1], strides = [1, 1]} : vector<8x8xf32> to vector<8x1xf32>
    %10 = vector.shape_cast %9 : vector<8x1xf32> to vector<8x1xf32>
    %11 = vector.broadcast %10 : vector<8x1xf32> to vector<8x8xf32>
    %12 = vector.extract_strided_slice %2 {offsets = [0, 2], sizes = [8, 1], strides = [1, 1]} : vector<8x8xf32> to vector<8x1xf32>
    %13 = vector.shape_cast %12 : vector<8x1xf32> to vector<8x1xf32>
    %14 = vector.broadcast %13 : vector<8x1xf32> to vector<8x8xf32>
    %15 = vector.extract_strided_slice %2 {offsets = [0, 3], sizes = [8, 1], strides = [1, 1]} : vector<8x8xf32> to vector<8x1xf32>
    %16 = vector.shape_cast %15 : vector<8x1xf32> to vector<8x1xf32>
    %17 = vector.broadcast %16 : vector<8x1xf32> to vector<8x8xf32>
    %18 = vector.extract_strided_slice %2 {offsets = [0, 4], sizes = [8, 1], strides = [1, 1]} : vector<8x8xf32> to vector<8x1xf32>
    %19 = vector.shape_cast %18 : vector<8x1xf32> to vector<8x1xf32>
    %20 = vector.broadcast %19 : vector<8x1xf32> to vector<8x8xf32>
    %21 = vector.extract_strided_slice %2 {offsets = [0, 5], sizes = [8, 1], strides = [1, 1]} : vector<8x8xf32> to vector<8x1xf32>
    %22 = vector.shape_cast %21 : vector<8x1xf32> to vector<8x1xf32>
    %23 = vector.broadcast %22 : vector<8x1xf32> to vector<8x8xf32>
    %24 = vector.extract_strided_slice %2 {offsets = [0, 6], sizes = [8, 1], strides = [1, 1]} : vector<8x8xf32> to vector<8x1xf32>
    %25 = vector.shape_cast %24 : vector<8x1xf32> to vector<8x1xf32>
    %26 = vector.broadcast %25 : vector<8x1xf32> to vector<8x8xf32>
    %27 = vector.extract_strided_slice %2 {offsets = [0, 7], sizes = [8, 1], strides = [1, 1]} : vector<8x8xf32> to vector<8x1xf32>
    %28 = vector.shape_cast %27 : vector<8x1xf32> to vector<8x1xf32>
    %29 = vector.broadcast %28 : vector<8x1xf32> to vector<8x8xf32>
    %c0_i32 = arith.constant 0 : i32
    %30 = arith.cmpi eq, %arg1, %c0_i32 : i32
    %31 = arith.extui %30 : i1 to i32
    %c0_i32_9 = arith.constant 0 : i32
    %32 = arith.cmpi ne, %31, %c0_i32_9 : i32
    scf.if %32 {
      %c0_22 = arith.constant 0 : index
      %c0_23 = arith.constant 0 : index
      %c0_24 = arith.constant 0 : index
      %42 = vector.load %arg2[%c0_22, %c0_23, %c0_24] : memref<16x8x8xf32, #tpu.memory_space<vmem>>, vector<1x8x8xf32>
      %43 = vector.shape_cast %42 : vector<1x8x8xf32> to vector<8x8xf32>
      %44 = vector.broadcast %4 : vector<8x1xf32> to vector<8x8xf32>
      %45 = arith.addf %44, %43 : vector<8x8xf32>
      %c0_25 = arith.constant 0 : index
      %c0_26 = arith.constant 0 : index
      %46 = vector.load %arg12[%c0_25, %c0_26] : memref<8x8xf32, #tpu.memory_space<vmem>>, vector<8x8xf32>
      tpu.vector_store %arg12[%c0_25, %c0_26], %45 {strides = array<i32>} : memref<8x8xf32, #tpu.memory_space<vmem>>, vector<8x8xf32>,
      %cst = arith.constant 0.000000e+00 : f32
      %47 = vector.broadcast %cst : f32 to vector<1x8xf32>
      %c0_27 = arith.constant 0 : index
      %c0_28 = arith.constant 0 : index
      %48 = vector.load %arg13[%c0_27, %c0_28] : memref<1x8xf32, #tpu.memory_space<vmem>>, vector<1x8xf32>
      tpu.vector_store %arg13[%c0_27, %c0_28], %47 {strides = array<i32>} : memref<1x8xf32, #tpu.memory_space<vmem>>, vector<1x8xf32>,
    } else {
    }
    %c0_10 = arith.constant 0 : index
    %c0_11 = arith.constant 0 : index
    %33 = vector.load %arg12[%c0_10, %c0_11] : memref<8x8xf32, #tpu.memory_space<vmem>>, vector<8x8xf32>
    %c0_12 = arith.constant 0 : index
    %c0_13 = arith.constant 0 : index
    %34 = vector.load %arg13[%c0_12, %c0_13] : memref<1x8xf32, #tpu.memory_space<vmem>>, vector<1x8xf32>
    %c0_i32_14 = arith.constant 0 : i32
    %c2_i32 = arith.constant 2 : i32
    %35 = arith.addi %c0_i32_14, %c2_i32 : i32
    %c1_i32 = arith.constant 1 : i32
    %36:2 = scf.for %arg14 = %c0_i32_14 to %35 step %c1_i32 iter_args(%arg15 = %33, %arg16 = %34) -> (vector<8x8xf32>, vector<1x8xf32>)  : i32 {
      %c8_i32 = arith.constant 8 : i32
      %42 = arith.muli %arg14, %c8_i32 : i32
      %43 = tpu.assume_multiple %42, 8 : i32
      %44 = arith.index_cast %43 : i32 to index
      %c0_22 = arith.constant 0 : index
      %c0_23 = arith.constant 0 : index
      %45 = vector.load %arg2[%44, %c0_22, %c0_23] : memref<16x8x8xf32, #tpu.memory_space<vmem>>, vector<8x8x8xf32>
      %46 = arith.index_cast %43 : i32 to index
      %c0_24 = arith.constant 0 : index
      %47 = vector.load %arg3[%46, %c0_24] : memref<16x8xi32, #tpu.memory_space<vmem>>, vector<8x8xi32>
      %48 = arith.index_cast %43 : i32 to index
      %c0_25 = arith.constant 0 : index
      %49 = vector.load %arg4[%48, %c0_25] : memref<16x8xi32, #tpu.memory_space<vmem>>, vector<8x8xi32>
      %50 = arith.addi %0, %43 : i32
      %51 = tpu.iota {dimensions = array<i32: 0>} : vector<8x8xi32>
      %52 = vector.broadcast %50 : i32 to vector<8x8xi32>
      %53 = arith.addi %52, %51 : vector<8x8xi32>
      %54 = vector.broadcast %1 : vector<1x8xi32> to vector<8x8xi32>
      %55 = arith.cmpi slt, %53, %54 : vector<8x8xi32>
      %56 = arith.extui %55 : vector<8x8xi1> to vector<8x8xi32>
      %57 = arith.sitofp %56 : vector<8x8xi32> to vector<8x8xf32>
      %c1_i32_26 = arith.constant 1 : i32
      %58 = vector.broadcast %c1_i32_26 : i32 to vector<8x8xi32>
      %59 = arith.cmpi sge, %53, %58 : vector<8x8xi32>
      %cst = arith.constant 0.000000e+00 : f32
      %60 = vector.broadcast %cst : f32 to vector<8x8xf32>
      %61 = arith.select %59, %57, %60 : vector<8x8xi1>, vector<8x8xf32>
      %c0_i32_27 = arith.constant 0 : i32
      %62 = vector.broadcast %c0_i32_27 : i32 to vector<8x8xi32>
      %63 = arith.cmpi eq, %53, %62 : vector<8x8xi32>
      %64 = arith.extui %63 : vector<8x8xi1> to vector<8x8xi32>
      %65 = arith.sitofp %64 : vector<8x8xi32> to vector<8x8xf32>
      %c1_i32_28 = arith.constant 1 : i32
      %66 = vector.broadcast %c1_i32_28 : i32 to vector<1x8xi32>
      %67 = arith.subi %1, %66 : vector<1x8xi32>
      %68 = vector.broadcast %67 : vector<1x8xi32> to vector<8x8xi32>
      %69 = arith.cmpi eq, %53, %68 : vector<8x8xi32>
      %70 = arith.extui %69 : vector<8x8xi1> to vector<8x8xi32>
      %71 = arith.sitofp %70 : vector<8x8xi32> to vector<8x8xf32>
      %72 = tpu.iota {dimensions = array<i32: 1>} : vector<8x8x8xi32>
      %73 = vector.shape_cast %47 : vector<8x8xi32> to vector<8x1x8xi32>
      %74 = vector.broadcast %73 : vector<8x1x8xi32> to vector<8x8x8xi32>
      %75 = arith.cmpi eq, %72, %74 : vector<8x8x8xi32>
      %76 = arith.extui %75 : vector<8x8x8xi1> to vector<8x8x8xi32>
      %77 = arith.sitofp %76 : vector<8x8x8xi32> to vector<8x8x8xf32>
      %78 = arith.mulf %45, %77 : vector<8x8x8xf32>
      %cst_29 = arith.constant dense<0.000000e+00> : vector<8x8xf32>
      %79 = vector.multi_reduction <add>, %78, %cst_29 [1] : vector<8x8x8xf32> to vector<8x8xf32>
      %80 = vector.shape_cast %4 : vector<8x1xf32> to vector<1x8x1xf32>
      %81 = vector.broadcast %80 : vector<1x8x1xf32> to vector<8x8x8xf32>
      %82 = arith.mulf %81, %77 : vector<8x8x8xf32>
      %cst_30 = arith.constant dense<0.000000e+00> : vector<8x8xf32>
      %83 = vector.multi_reduction <add>, %82, %cst_30 [1] : vector<8x8x8xf32> to vector<8x8xf32>
      %84 = vector.shape_cast %5 : vector<8x1xf32> to vector<1x8x1xf32>
      %85 = vector.broadcast %84 : vector<1x8x1xf32> to vector<8x8x8xf32>
      %86 = arith.mulf %85, %77 : vector<8x8x8xf32>
      %cst_31 = arith.constant dense<0.000000e+00> : vector<8x8xf32>
      %87 = vector.multi_reduction <add>, %86, %cst_31 [1] : vector<8x8x8xf32> to vector<8x8xf32>
      %c8_i32_32 = arith.constant 8 : i32
      %88 = vector.broadcast %c8_i32_32 : i32 to vector<8x8xi32>
      %89 = arith.muli %49, %88 : vector<8x8xi32>
      %90 = arith.addi %89, %47 : vector<8x8xi32>
      %cst_33 = arith.constant 0.000000e+00 : f32
      %91 = vector.broadcast %cst_33 : f32 to vector<8x8xf32>
      %c0_i32_34 = arith.constant 0 : i32
      %92 = vector.broadcast %c0_i32_34 : i32 to vector<8x8xi32>
      %93 = arith.cmpi eq, %90, %92 : vector<8x8xi32>
      %c0_35 = arith.constant 0 : index
      %c0_36 = arith.constant 0 : index
      %94 = memref.load %arg6[%c0_35, %c0_36] : memref<8x8xf32, #tpu.memory_space<smem>>
      %cst_37 = arith.constant 0.000000e+00 : f32
      %95 = vector.broadcast %94 : f32 to vector<8x8xf32>
      %96 = vector.broadcast %cst_37 : f32 to vector<8x8xf32>
      %97 = arith.select %93, %95, %96 : vector<8x8xi1>, vector<8x8xf32>
      %98 = arith.addf %91, %97 : vector<8x8xf32>
      %c1_i32_38 = arith.constant 1 : i32
      %99 = vector.broadcast %c1_i32_38 : i32 to vector<8x8xi32>
      %100 = arith.cmpi eq, %90, %99 : vector<8x8xi32>
      %c0_39 = arith.constant 0 : index
      %c1 = arith.constant 1 : index
      %101 = memref.load %arg6[%c0_39, %c1] : memref<8x8xf32, #tpu.memory_space<smem>>
      %cst_40 = arith.constant 0.000000e+00 : f32
      %102 = vector.broadcast %101 : f32 to vector<8x8xf32>
      %103 = vector.broadcast %cst_40 : f32 to vector<8x8xf32>
      %104 = arith.select %100, %102, %103 : vector<8x8xi1>, vector<8x8xf32>
      %105 = arith.addf %98, %104 : vector<8x8xf32>
      %c2_i32_41 = arith.constant 2 : i32
      %106 = vector.broadcast %c2_i32_41 : i32 to vector<8x8xi32>
      %107 = arith.cmpi eq, %90, %106 : vector<8x8xi32>
      %c0_42 = arith.constant 0 : index
      %c2 = arith.constant 2 : index
      %108 = memref.load %arg6[%c0_42, %c2] : memref<8x8xf32, #tpu.memory_space<smem>>
      %cst_43 = arith.constant 0.000000e+00 : f32
      %109 = vector.broadcast %108 : f32 to vector<8x8xf32>
      %110 = vector.broadcast %cst_43 : f32 to vector<8x8xf32>
      %111 = arith.select %107, %109, %110 : vector<8x8xi1>, vector<8x8xf32>
      %112 = arith.addf %105, %111 : vector<8x8xf32>
      %c3_i32 = arith.constant 3 : i32
      %113 = vector.broadcast %c3_i32 : i32 to vector<8x8xi32>
      %114 = arith.cmpi eq, %90, %113 : vector<8x8xi32>
      %c0_44 = arith.constant 0 : index
      %c3 = arith.constant 3 : index
      %115 = memref.load %arg6[%c0_44, %c3] : memref<8x8xf32, #tpu.memory_space<smem>>
      %cst_45 = arith.constant 0.000000e+00 : f32
      %116 = vector.broadcast %115 : f32 to vector<8x8xf32>
      %117 = vector.broadcast %cst_45 : f32 to vector<8x8xf32>
      %118 = arith.select %114, %116, %117 : vector<8x8xi1>, vector<8x8xf32>
      %119 = arith.addf %112, %118 : vector<8x8xf32>
      %c4_i32 = arith.constant 4 : i32
      %120 = vector.broadcast %c4_i32 : i32 to vector<8x8xi32>
      %121 = arith.cmpi eq, %90, %120 : vector<8x8xi32>
      %c0_46 = arith.constant 0 : index
      %c4 = arith.constant 4 : index
      %122 = memref.load %arg6[%c0_46, %c4] : memref<8x8xf32, #tpu.memory_space<smem>>
      %cst_47 = arith.constant 0.000000e+00 : f32
      %123 = vector.broadcast %122 : f32 to vector<8x8xf32>
      %124 = vector.broadcast %cst_47 : f32 to vector<8x8xf32>
      %125 = arith.select %121, %123, %124 : vector<8x8xi1>, vector<8x8xf32>
      %126 = arith.addf %119, %125 : vector<8x8xf32>
      %c5_i32 = arith.constant 5 : i32
      %127 = vector.broadcast %c5_i32 : i32 to vector<8x8xi32>
      %128 = arith.cmpi eq, %90, %127 : vector<8x8xi32>
      %c0_48 = arith.constant 0 : index
      %c5 = arith.constant 5 : index
      %129 = memref.load %arg6[%c0_48, %c5] : memref<8x8xf32, #tpu.memory_space<smem>>
      %cst_49 = arith.constant 0.000000e+00 : f32
      %130 = vector.broadcast %129 : f32 to vector<8x8xf32>
      %131 = vector.broadcast %cst_49 : f32 to vector<8x8xf32>
      %132 = arith.select %128, %130, %131 : vector<8x8xi1>, vector<8x8xf32>
      %133 = arith.addf %126, %132 : vector<8x8xf32>
      %c6_i32 = arith.constant 6 : i32
      %134 = vector.broadcast %c6_i32 : i32 to vector<8x8xi32>
      %135 = arith.cmpi eq, %90, %134 : vector<8x8xi32>
      %c0_50 = arith.constant 0 : index
      %c6 = arith.constant 6 : index
      %136 = memref.load %arg6[%c0_50, %c6] : memref<8x8xf32, #tpu.memory_space<smem>>
      %cst_51 = arith.constant 0.000000e+00 : f32
      %137 = vector.broadcast %136 : f32 to vector<8x8xf32>
      %138 = vector.broadcast %cst_51 : f32 to vector<8x8xf32>
      %139 = arith.select %135, %137, %138 : vector<8x8xi1>, vector<8x8xf32>
      %140 = arith.addf %133, %139 : vector<8x8xf32>
      %c7_i32 = arith.constant 7 : i32
      %141 = vector.broadcast %c7_i32 : i32 to vector<8x8xi32>
      %142 = arith.cmpi eq, %90, %141 : vector<8x8xi32>
      %c0_52 = arith.constant 0 : index
      %c7 = arith.constant 7 : index
      %143 = memref.load %arg6[%c0_52, %c7] : memref<8x8xf32, #tpu.memory_space<smem>>
      %cst_53 = arith.constant 0.000000e+00 : f32
      %144 = vector.broadcast %143 : f32 to vector<8x8xf32>
      %145 = vector.broadcast %cst_53 : f32 to vector<8x8xf32>
      %146 = arith.select %142, %144, %145 : vector<8x8xi1>, vector<8x8xf32>
      %147 = arith.addf %140, %146 : vector<8x8xf32>
      %c8_i32_54 = arith.constant 8 : i32
      %148 = vector.broadcast %c8_i32_54 : i32 to vector<8x8xi32>
      %149 = arith.cmpi eq, %90, %148 : vector<8x8xi32>
      %c1_55 = arith.constant 1 : index
      %c0_56 = arith.constant 0 : index
      %150 = memref.load %arg6[%c1_55, %c0_56] : memref<8x8xf32, #tpu.memory_space<smem>>
      %cst_57 = arith.constant 0.000000e+00 : f32
      %151 = vector.broadcast %150 : f32 to vector<8x8xf32>
      %152 = vector.broadcast %cst_57 : f32 to vector<8x8xf32>
      %153 = arith.select %149, %151, %152 : vector<8x8xi1>, vector<8x8xf32>
      %154 = arith.addf %147, %153 : vector<8x8xf32>
      %c9_i32 = arith.constant 9 : i32
      %155 = vector.broadcast %c9_i32 : i32 to vector<8x8xi32>
      %156 = arith.cmpi eq, %90, %155 : vector<8x8xi32>
      %c1_58 = arith.constant 1 : index
      %c1_59 = arith.constant 1 : index
      %157 = memref.load %arg6[%c1_58, %c1_59] : memref<8x8xf32, #tpu.memory_space<smem>>
      %cst_60 = arith.constant 0.000000e+00 : f32
      %158 = vector.broadcast %157 : f32 to vector<8x8xf32>
      %159 = vector.broadcast %cst_60 : f32 to vector<8x8xf32>
      %160 = arith.select %156, %158, %159 : vector<8x8xi1>, vector<8x8xf32>
      %161 = arith.addf %154, %160 : vector<8x8xf32>
      %c10_i32 = arith.constant 10 : i32
      %162 = vector.broadcast %c10_i32 : i32 to vector<8x8xi32>
      %163 = arith.cmpi eq, %90, %162 : vector<8x8xi32>
      %c1_61 = arith.constant 1 : index
      %c2_62 = arith.constant 2 : index
      %164 = memref.load %arg6[%c1_61, %c2_62] : memref<8x8xf32, #tpu.memory_space<smem>>
      %cst_63 = arith.constant 0.000000e+00 : f32
      %165 = vector.broadcast %164 : f32 to vector<8x8xf32>
      %166 = vector.broadcast %cst_63 : f32 to vector<8x8xf32>
      %167 = arith.select %163, %165, %166 : vector<8x8xi1>, vector<8x8xf32>
      %168 = arith.addf %161, %167 : vector<8x8xf32>
      %c11_i32 = arith.constant 11 : i32
      %169 = vector.broadcast %c11_i32 : i32 to vector<8x8xi32>
      %170 = arith.cmpi eq, %90, %169 : vector<8x8xi32>
      %c1_64 = arith.constant 1 : index
      %c3_65 = arith.constant 3 : index
      %171 = memref.load %arg6[%c1_64, %c3_65] : memref<8x8xf32, #tpu.memory_space<smem>>
      %cst_66 = arith.constant 0.000000e+00 : f32
      %172 = vector.broadcast %171 : f32 to vector<8x8xf32>
      %173 = vector.broadcast %cst_66 : f32 to vector<8x8xf32>
      %174 = arith.select %170, %172, %173 : vector<8x8xi1>, vector<8x8xf32>
      %175 = arith.addf %168, %174 : vector<8x8xf32>
      %c12_i32 = arith.constant 12 : i32
      %176 = vector.broadcast %c12_i32 : i32 to vector<8x8xi32>
      %177 = arith.cmpi eq, %90, %176 : vector<8x8xi32>
      %c1_67 = arith.constant 1 : index
      %c4_68 = arith.constant 4 : index
      %178 = memref.load %arg6[%c1_67, %c4_68] : memref<8x8xf32, #tpu.memory_space<smem>>
      %cst_69 = arith.constant 0.000000e+00 : f32
      %179 = vector.broadcast %178 : f32 to vector<8x8xf32>
      %180 = vector.broadcast %cst_69 : f32 to vector<8x8xf32>
      %181 = arith.select %177, %179, %180 : vector<8x8xi1>, vector<8x8xf32>
      %182 = arith.addf %175, %181 : vector<8x8xf32>
      %c13_i32 = arith.constant 13 : i32
      %183 = vector.broadcast %c13_i32 : i32 to vector<8x8xi32>
      %184 = arith.cmpi eq, %90, %183 : vector<8x8xi32>
      %c1_70 = arith.constant 1 : index
      %c5_71 = arith.constant 5 : index
      %185 = memref.load %arg6[%c1_70, %c5_71] : memref<8x8xf32, #tpu.memory_space<smem>>
      %cst_72 = arith.constant 0.000000e+00 : f32
      %186 = vector.broadcast %185 : f32 to vector<8x8xf32>
      %187 = vector.broadcast %cst_72 : f32 to vector<8x8xf32>
      %188 = arith.select %184, %186, %187 : vector<8x8xi1>, vector<8x8xf32>
      %189 = arith.addf %182, %188 : vector<8x8xf32>
      %c14_i32 = arith.constant 14 : i32
      %190 = vector.broadcast %c14_i32 : i32 to vector<8x8xi32>
      %191 = arith.cmpi eq, %90, %190 : vector<8x8xi32>
      %c1_73 = arith.constant 1 : index
      %c6_74 = arith.constant 6 : index
      %192 = memref.load %arg6[%c1_73, %c6_74] : memref<8x8xf32, #tpu.memory_space<smem>>
      %cst_75 = arith.constant 0.000000e+00 : f32
      %193 = vector.broadcast %192 : f32 to vector<8x8xf32>
      %194 = vector.broadcast %cst_75 : f32 to vector<8x8xf32>
      %195 = arith.select %191, %193, %194 : vector<8x8xi1>, vector<8x8xf32>
      %196 = arith.addf %189, %195 : vector<8x8xf32>
      %c15_i32 = arith.constant 15 : i32
      %197 = vector.broadcast %c15_i32 : i32 to vector<8x8xi32>
      %198 = arith.cmpi eq, %90, %197 : vector<8x8xi32>
      %c1_76 = arith.constant 1 : index
      %c7_77 = arith.constant 7 : index
      %199 = memref.load %arg6[%c1_76, %c7_77] : memref<8x8xf32, #tpu.memory_space<smem>>
      %cst_78 = arith.constant 0.000000e+00 : f32
      %200 = vector.broadcast %199 : f32 to vector<8x8xf32>
      %201 = vector.broadcast %cst_78 : f32 to vector<8x8xf32>
      %202 = arith.select %198, %200, %201 : vector<8x8xi1>, vector<8x8xf32>
      %203 = arith.addf %196, %202 : vector<8x8xf32>
      %c16_i32_79 = arith.constant 16 : i32
      %204 = vector.broadcast %c16_i32_79 : i32 to vector<8x8xi32>
      %205 = arith.cmpi eq, %90, %204 : vector<8x8xi32>
      %c2_80 = arith.constant 2 : index
      %c0_81 = arith.constant 0 : index
      %206 = memref.load %arg6[%c2_80, %c0_81] : memref<8x8xf32, #tpu.memory_space<smem>>
      %cst_82 = arith.constant 0.000000e+00 : f32
      %207 = vector.broadcast %206 : f32 to vector<8x8xf32>
      %208 = vector.broadcast %cst_82 : f32 to vector<8x8xf32>
      %209 = arith.select %205, %207, %208 : vector<8x8xi1>, vector<8x8xf32>
      %210 = arith.addf %203, %209 : vector<8x8xf32>
      %c17_i32 = arith.constant 17 : i32
      %211 = vector.broadcast %c17_i32 : i32 to vector<8x8xi32>
      %212 = arith.cmpi eq, %90, %211 : vector<8x8xi32>
      %c2_83 = arith.constant 2 : index
      %c1_84 = arith.constant 1 : index
      %213 = memref.load %arg6[%c2_83, %c1_84] : memref<8x8xf32, #tpu.memory_space<smem>>
      %cst_85 = arith.constant 0.000000e+00 : f32
      %214 = vector.broadcast %213 : f32 to vector<8x8xf32>
      %215 = vector.broadcast %cst_85 : f32 to vector<8x8xf32>
      %216 = arith.select %212, %214, %215 : vector<8x8xi1>, vector<8x8xf32>
      %217 = arith.addf %210, %216 : vector<8x8xf32>
      %c18_i32 = arith.constant 18 : i32
      %218 = vector.broadcast %c18_i32 : i32 to vector<8x8xi32>
      %219 = arith.cmpi eq, %90, %218 : vector<8x8xi32>
      %c2_86 = arith.constant 2 : index
      %c2_87 = arith.constant 2 : index
      %220 = memref.load %arg6[%c2_86, %c2_87] : memref<8x8xf32, #tpu.memory_space<smem>>
      %cst_88 = arith.constant 0.000000e+00 : f32
      %221 = vector.broadcast %220 : f32 to vector<8x8xf32>
      %222 = vector.broadcast %cst_88 : f32 to vector<8x8xf32>
      %223 = arith.select %219, %221, %222 : vector<8x8xi1>, vector<8x8xf32>
      %224 = arith.addf %217, %223 : vector<8x8xf32>
      %c19_i32 = arith.constant 19 : i32
      %225 = vector.broadcast %c19_i32 : i32 to vector<8x8xi32>
      %226 = arith.cmpi eq, %90, %225 : vector<8x8xi32>
      %c2_89 = arith.constant 2 : index
      %c3_90 = arith.constant 3 : index
      %227 = memref.load %arg6[%c2_89, %c3_90] : memref<8x8xf32, #tpu.memory_space<smem>>
      %cst_91 = arith.constant 0.000000e+00 : f32
      %228 = vector.broadcast %227 : f32 to vector<8x8xf32>
      %229 = vector.broadcast %cst_91 : f32 to vector<8x8xf32>
      %230 = arith.select %226, %228, %229 : vector<8x8xi1>, vector<8x8xf32>
      %231 = arith.addf %224, %230 : vector<8x8xf32>
      %c20_i32 = arith.constant 20 : i32
      %232 = vector.broadcast %c20_i32 : i32 to vector<8x8xi32>
      %233 = arith.cmpi eq, %90, %232 : vector<8x8xi32>
      %c2_92 = arith.constant 2 : index
      %c4_93 = arith.constant 4 : index
      %234 = memref.load %arg6[%c2_92, %c4_93] : memref<8x8xf32, #tpu.memory_space<smem>>
      %cst_94 = arith.constant 0.000000e+00 : f32
      %235 = vector.broadcast %234 : f32 to vector<8x8xf32>
      %236 = vector.broadcast %cst_94 : f32 to vector<8x8xf32>
      %237 = arith.select %233, %235, %236 : vector<8x8xi1>, vector<8x8xf32>
      %238 = arith.addf %231, %237 : vector<8x8xf32>
      %c21_i32 = arith.constant 21 : i32
      %239 = vector.broadcast %c21_i32 : i32 to vector<8x8xi32>
      %240 = arith.cmpi eq, %90, %239 : vector<8x8xi32>
      %c2_95 = arith.constant 2 : index
      %c5_96 = arith.constant 5 : index
      %241 = memref.load %arg6[%c2_95, %c5_96] : memref<8x8xf32, #tpu.memory_space<smem>>
      %cst_97 = arith.constant 0.000000e+00 : f32
      %242 = vector.broadcast %241 : f32 to vector<8x8xf32>
      %243 = vector.broadcast %cst_97 : f32 to vector<8x8xf32>
      %244 = arith.select %240, %242, %243 : vector<8x8xi1>, vector<8x8xf32>
      %245 = arith.addf %238, %244 : vector<8x8xf32>
      %c22_i32 = arith.constant 22 : i32
      %246 = vector.broadcast %c22_i32 : i32 to vector<8x8xi32>
      %247 = arith.cmpi eq, %90, %246 : vector<8x8xi32>
      %c2_98 = arith.constant 2 : index
      %c6_99 = arith.constant 6 : index
      %248 = memref.load %arg6[%c2_98, %c6_99] : memref<8x8xf32, #tpu.memory_space<smem>>
      %cst_100 = arith.constant 0.000000e+00 : f32
      %249 = vector.broadcast %248 : f32 to vector<8x8xf32>
      %250 = vector.broadcast %cst_100 : f32 to vector<8x8xf32>
      %251 = arith.select %247, %249, %250 : vector<8x8xi1>, vector<8x8xf32>
      %252 = arith.addf %245, %251 : vector<8x8xf32>
      %c23_i32 = arith.constant 23 : i32
      %253 = vector.broadcast %c23_i32 : i32 to vector<8x8xi32>
      %254 = arith.cmpi eq, %90, %253 : vector<8x8xi32>
      %c2_101 = arith.constant 2 : index
      %c7_102 = arith.constant 7 : index
      %255 = memref.load %arg6[%c2_101, %c7_102] : memref<8x8xf32, #tpu.memory_space<smem>>
      %cst_103 = arith.constant 0.000000e+00 : f32
      %256 = vector.broadcast %255 : f32 to vector<8x8xf32>
      %257 = vector.broadcast %cst_103 : f32 to vector<8x8xf32>
      %258 = arith.select %254, %256, %257 : vector<8x8xi1>, vector<8x8xf32>
      %259 = arith.addf %252, %258 : vector<8x8xf32>
      %c24_i32 = arith.constant 24 : i32
      %260 = vector.broadcast %c24_i32 : i32 to vector<8x8xi32>
      %261 = arith.cmpi eq, %90, %260 : vector<8x8xi32>
      %c3_104 = arith.constant 3 : index
      %c0_105 = arith.constant 0 : index
      %262 = memref.load %arg6[%c3_104, %c0_105] : memref<8x8xf32, #tpu.memory_space<smem>>
      %cst_106 = arith.constant 0.000000e+00 : f32
      %263 = vector.broadcast %262 : f32 to vector<8x8xf32>
      %264 = vector.broadcast %cst_106 : f32 to vector<8x8xf32>
      %265 = arith.select %261, %263, %264 : vector<8x8xi1>, vector<8x8xf32>
      %266 = arith.addf %259, %265 : vector<8x8xf32>
      %c25_i32 = arith.constant 25 : i32
      %267 = vector.broadcast %c25_i32 : i32 to vector<8x8xi32>
      %268 = arith.cmpi eq, %90, %267 : vector<8x8xi32>
      %c3_107 = arith.constant 3 : index
      %c1_108 = arith.constant 1 : index
      %269 = memref.load %arg6[%c3_107, %c1_108] : memref<8x8xf32, #tpu.memory_space<smem>>
      %cst_109 = arith.constant 0.000000e+00 : f32
      %270 = vector.broadcast %269 : f32 to vector<8x8xf32>
      %271 = vector.broadcast %cst_109 : f32 to vector<8x8xf32>
      %272 = arith.select %268, %270, %271 : vector<8x8xi1>, vector<8x8xf32>
      %273 = arith.addf %266, %272 : vector<8x8xf32>
      %c26_i32 = arith.constant 26 : i32
      %274 = vector.broadcast %c26_i32 : i32 to vector<8x8xi32>
      %275 = arith.cmpi eq, %90, %274 : vector<8x8xi32>
      %c3_110 = arith.constant 3 : index
      %c2_111 = arith.constant 2 : index
      %276 = memref.load %arg6[%c3_110, %c2_111] : memref<8x8xf32, #tpu.memory_space<smem>>
      %cst_112 = arith.constant 0.000000e+00 : f32
      %277 = vector.broadcast %276 : f32 to vector<8x8xf32>
      %278 = vector.broadcast %cst_112 : f32 to vector<8x8xf32>
      %279 = arith.select %275, %277, %278 : vector<8x8xi1>, vector<8x8xf32>
      %280 = arith.addf %273, %279 : vector<8x8xf32>
      %c27_i32 = arith.constant 27 : i32
      %281 = vector.broadcast %c27_i32 : i32 to vector<8x8xi32>
      %282 = arith.cmpi eq, %90, %281 : vector<8x8xi32>
      %c3_113 = arith.constant 3 : index
      %c3_114 = arith.constant 3 : index
      %283 = memref.load %arg6[%c3_113, %c3_114] : memref<8x8xf32, #tpu.memory_space<smem>>
      %cst_115 = arith.constant 0.000000e+00 : f32
      %284 = vector.broadcast %283 : f32 to vector<8x8xf32>
      %285 = vector.broadcast %cst_115 : f32 to vector<8x8xf32>
      %286 = arith.select %282, %284, %285 : vector<8x8xi1>, vector<8x8xf32>
      %287 = arith.addf %280, %286 : vector<8x8xf32>
      %c28_i32 = arith.constant 28 : i32
      %288 = vector.broadcast %c28_i32 : i32 to vector<8x8xi32>
      %289 = arith.cmpi eq, %90, %288 : vector<8x8xi32>
      %c3_116 = arith.constant 3 : index
      %c4_117 = arith.constant 4 : index
      %290 = memref.load %arg6[%c3_116, %c4_117] : memref<8x8xf32, #tpu.memory_space<smem>>
      %cst_118 = arith.constant 0.000000e+00 : f32
      %291 = vector.broadcast %290 : f32 to vector<8x8xf32>
      %292 = vector.broadcast %cst_118 : f32 to vector<8x8xf32>
      %293 = arith.select %289, %291, %292 : vector<8x8xi1>, vector<8x8xf32>
      %294 = arith.addf %287, %293 : vector<8x8xf32>
      %c29_i32 = arith.constant 29 : i32
      %295 = vector.broadcast %c29_i32 : i32 to vector<8x8xi32>
      %296 = arith.cmpi eq, %90, %295 : vector<8x8xi32>
      %c3_119 = arith.constant 3 : index
      %c5_120 = arith.constant 5 : index
      %297 = memref.load %arg6[%c3_119, %c5_120] : memref<8x8xf32, #tpu.memory_space<smem>>
      %cst_121 = arith.constant 0.000000e+00 : f32
      %298 = vector.broadcast %297 : f32 to vector<8x8xf32>
      %299 = vector.broadcast %cst_121 : f32 to vector<8x8xf32>
      %300 = arith.select %296, %298, %299 : vector<8x8xi1>, vector<8x8xf32>
      %301 = arith.addf %294, %300 : vector<8x8xf32>
      %c30_i32 = arith.constant 30 : i32
      %302 = vector.broadcast %c30_i32 : i32 to vector<8x8xi32>
      %303 = arith.cmpi eq, %90, %302 : vector<8x8xi32>
      %c3_122 = arith.constant 3 : index
      %c6_123 = arith.constant 6 : index
      %304 = memref.load %arg6[%c3_122, %c6_123] : memref<8x8xf32, #tpu.memory_space<smem>>
      %cst_124 = arith.constant 0.000000e+00 : f32
      %305 = vector.broadcast %304 : f32 to vector<8x8xf32>
      %306 = vector.broadcast %cst_124 : f32 to vector<8x8xf32>
      %307 = arith.select %303, %305, %306 : vector<8x8xi1>, vector<8x8xf32>
      %308 = arith.addf %301, %307 : vector<8x8xf32>
      %c31_i32 = arith.constant 31 : i32
      %309 = vector.broadcast %c31_i32 : i32 to vector<8x8xi32>
      %310 = arith.cmpi eq, %90, %309 : vector<8x8xi32>
      %c3_125 = arith.constant 3 : index
      %c7_126 = arith.constant 7 : index
      %311 = memref.load %arg6[%c3_125, %c7_126] : memref<8x8xf32, #tpu.memory_space<smem>>
      %cst_127 = arith.constant 0.000000e+00 : f32
      %312 = vector.broadcast %311 : f32 to vector<8x8xf32>
      %313 = vector.broadcast %cst_127 : f32 to vector<8x8xf32>
      %314 = arith.select %310, %312, %313 : vector<8x8xi1>, vector<8x8xf32>
      %315 = arith.addf %308, %314 : vector<8x8xf32>
      %c32_i32 = arith.constant 32 : i32
      %316 = vector.broadcast %c32_i32 : i32 to vector<8x8xi32>
      %317 = arith.cmpi eq, %90, %316 : vector<8x8xi32>
      %c4_128 = arith.constant 4 : index
      %c0_129 = arith.constant 0 : index
      %318 = memref.load %arg6[%c4_128, %c0_129] : memref<8x8xf32, #tpu.memory_space<smem>>
      %cst_130 = arith.constant 0.000000e+00 : f32
      %319 = vector.broadcast %318 : f32 to vector<8x8xf32>
      %320 = vector.broadcast %cst_130 : f32 to vector<8x8xf32>
      %321 = arith.select %317, %319, %320 : vector<8x8xi1>, vector<8x8xf32>
      %322 = arith.addf %315, %321 : vector<8x8xf32>
      %c33_i32 = arith.constant 33 : i32
      %323 = vector.broadcast %c33_i32 : i32 to vector<8x8xi32>
      %324 = arith.cmpi eq, %90, %323 : vector<8x8xi32>
      %c4_131 = arith.constant 4 : index
      %c1_132 = arith.constant 1 : index
      %325 = memref.load %arg6[%c4_131, %c1_132] : memref<8x8xf32, #tpu.memory_space<smem>>
      %cst_133 = arith.constant 0.000000e+00 : f32
      %326 = vector.broadcast %325 : f32 to vector<8x8xf32>
      %327 = vector.broadcast %cst_133 : f32 to vector<8x8xf32>
      %328 = arith.select %324, %326, %327 : vector<8x8xi1>, vector<8x8xf32>
      %329 = arith.addf %322, %328 : vector<8x8xf32>
      %c34_i32 = arith.constant 34 : i32
      %330 = vector.broadcast %c34_i32 : i32 to vector<8x8xi32>
      %331 = arith.cmpi eq, %90, %330 : vector<8x8xi32>
      %c4_134 = arith.constant 4 : index
      %c2_135 = arith.constant 2 : index
      %332 = memref.load %arg6[%c4_134, %c2_135] : memref<8x8xf32, #tpu.memory_space<smem>>
      %cst_136 = arith.constant 0.000000e+00 : f32
      %333 = vector.broadcast %332 : f32 to vector<8x8xf32>
      %334 = vector.broadcast %cst_136 : f32 to vector<8x8xf32>
      %335 = arith.select %331, %333, %334 : vector<8x8xi1>, vector<8x8xf32>
      %336 = arith.addf %329, %335 : vector<8x8xf32>
      %c35_i32 = arith.constant 35 : i32
      %337 = vector.broadcast %c35_i32 : i32 to vector<8x8xi32>
      %338 = arith.cmpi eq, %90, %337 : vector<8x8xi32>
      %c4_137 = arith.constant 4 : index
      %c3_138 = arith.constant 3 : index
      %339 = memref.load %arg6[%c4_137, %c3_138] : memref<8x8xf32, #tpu.memory_space<smem>>
      %cst_139 = arith.constant 0.000000e+00 : f32
      %340 = vector.broadcast %339 : f32 to vector<8x8xf32>
      %341 = vector.broadcast %cst_139 : f32 to vector<8x8xf32>
      %342 = arith.select %338, %340, %341 : vector<8x8xi1>, vector<8x8xf32>
      %343 = arith.addf %336, %342 : vector<8x8xf32>
      %c36_i32 = arith.constant 36 : i32
      %344 = vector.broadcast %c36_i32 : i32 to vector<8x8xi32>
      %345 = arith.cmpi eq, %90, %344 : vector<8x8xi32>
      %c4_140 = arith.constant 4 : index
      %c4_141 = arith.constant 4 : index
      %346 = memref.load %arg6[%c4_140, %c4_141] : memref<8x8xf32, #tpu.memory_space<smem>>
      %cst_142 = arith.constant 0.000000e+00 : f32
      %347 = vector.broadcast %346 : f32 to vector<8x8xf32>
      %348 = vector.broadcast %cst_142 : f32 to vector<8x8xf32>
      %349 = arith.select %345, %347, %348 : vector<8x8xi1>, vector<8x8xf32>
      %350 = arith.addf %343, %349 : vector<8x8xf32>
      %c37_i32 = arith.constant 37 : i32
      %351 = vector.broadcast %c37_i32 : i32 to vector<8x8xi32>
      %352 = arith.cmpi eq, %90, %351 : vector<8x8xi32>
      %c4_143 = arith.constant 4 : index
      %c5_144 = arith.constant 5 : index
      %353 = memref.load %arg6[%c4_143, %c5_144] : memref<8x8xf32, #tpu.memory_space<smem>>
      %cst_145 = arith.constant 0.000000e+00 : f32
      %354 = vector.broadcast %353 : f32 to vector<8x8xf32>
      %355 = vector.broadcast %cst_145 : f32 to vector<8x8xf32>
      %356 = arith.select %352, %354, %355 : vector<8x8xi1>, vector<8x8xf32>
      %357 = arith.addf %350, %356 : vector<8x8xf32>
      %c38_i32 = arith.constant 38 : i32
      %358 = vector.broadcast %c38_i32 : i32 to vector<8x8xi32>
      %359 = arith.cmpi eq, %90, %358 : vector<8x8xi32>
      %c4_146 = arith.constant 4 : index
      %c6_147 = arith.constant 6 : index
      %360 = memref.load %arg6[%c4_146, %c6_147] : memref<8x8xf32, #tpu.memory_space<smem>>
      %cst_148 = arith.constant 0.000000e+00 : f32
      %361 = vector.broadcast %360 : f32 to vector<8x8xf32>
      %362 = vector.broadcast %cst_148 : f32 to vector<8x8xf32>
      %363 = arith.select %359, %361, %362 : vector<8x8xi1>, vector<8x8xf32>
      %364 = arith.addf %357, %363 : vector<8x8xf32>
      %c39_i32 = arith.constant 39 : i32
      %365 = vector.broadcast %c39_i32 : i32 to vector<8x8xi32>
      %366 = arith.cmpi eq, %90, %365 : vector<8x8xi32>
      %c4_149 = arith.constant 4 : index
      %c7_150 = arith.constant 7 : index
      %367 = memref.load %arg6[%c4_149, %c7_150] : memref<8x8xf32, #tpu.memory_space<smem>>
      %cst_151 = arith.constant 0.000000e+00 : f32
      %368 = vector.broadcast %367 : f32 to vector<8x8xf32>
      %369 = vector.broadcast %cst_151 : f32 to vector<8x8xf32>
      %370 = arith.select %366, %368, %369 : vector<8x8xi1>, vector<8x8xf32>
      %371 = arith.addf %364, %370 : vector<8x8xf32>
      %c40_i32 = arith.constant 40 : i32
      %372 = vector.broadcast %c40_i32 : i32 to vector<8x8xi32>
      %373 = arith.cmpi eq, %90, %372 : vector<8x8xi32>
      %c5_152 = arith.constant 5 : index
      %c0_153 = arith.constant 0 : index
      %374 = memref.load %arg6[%c5_152, %c0_153] : memref<8x8xf32, #tpu.memory_space<smem>>
      %cst_154 = arith.constant 0.000000e+00 : f32
      %375 = vector.broadcast %374 : f32 to vector<8x8xf32>
      %376 = vector.broadcast %cst_154 : f32 to vector<8x8xf32>
      %377 = arith.select %373, %375, %376 : vector<8x8xi1>, vector<8x8xf32>
      %378 = arith.addf %371, %377 : vector<8x8xf32>
      %c41_i32 = arith.constant 41 : i32
      %379 = vector.broadcast %c41_i32 : i32 to vector<8x8xi32>
      %380 = arith.cmpi eq, %90, %379 : vector<8x8xi32>
      %c5_155 = arith.constant 5 : index
      %c1_156 = arith.constant 1 : index
      %381 = memref.load %arg6[%c5_155, %c1_156] : memref<8x8xf32, #tpu.memory_space<smem>>
      %cst_157 = arith.constant 0.000000e+00 : f32
      %382 = vector.broadcast %381 : f32 to vector<8x8xf32>
      %383 = vector.broadcast %cst_157 : f32 to vector<8x8xf32>
      %384 = arith.select %380, %382, %383 : vector<8x8xi1>, vector<8x8xf32>
      %385 = arith.addf %378, %384 : vector<8x8xf32>
      %c42_i32 = arith.constant 42 : i32
      %386 = vector.broadcast %c42_i32 : i32 to vector<8x8xi32>
      %387 = arith.cmpi eq, %90, %386 : vector<8x8xi32>
      %c5_158 = arith.constant 5 : index
      %c2_159 = arith.constant 2 : index
      %388 = memref.load %arg6[%c5_158, %c2_159] : memref<8x8xf32, #tpu.memory_space<smem>>
      %cst_160 = arith.constant 0.000000e+00 : f32
      %389 = vector.broadcast %388 : f32 to vector<8x8xf32>
      %390 = vector.broadcast %cst_160 : f32 to vector<8x8xf32>
      %391 = arith.select %387, %389, %390 : vector<8x8xi1>, vector<8x8xf32>
      %392 = arith.addf %385, %391 : vector<8x8xf32>
      %c43_i32 = arith.constant 43 : i32
      %393 = vector.broadcast %c43_i32 : i32 to vector<8x8xi32>
      %394 = arith.cmpi eq, %90, %393 : vector<8x8xi32>
      %c5_161 = arith.constant 5 : index
      %c3_162 = arith.constant 3 : index
      %395 = memref.load %arg6[%c5_161, %c3_162] : memref<8x8xf32, #tpu.memory_space<smem>>
      %cst_163 = arith.constant 0.000000e+00 : f32
      %396 = vector.broadcast %395 : f32 to vector<8x8xf32>
      %397 = vector.broadcast %cst_163 : f32 to vector<8x8xf32>
      %398 = arith.select %394, %396, %397 : vector<8x8xi1>, vector<8x8xf32>
      %399 = arith.addf %392, %398 : vector<8x8xf32>
      %c44_i32 = arith.constant 44 : i32
      %400 = vector.broadcast %c44_i32 : i32 to vector<8x8xi32>
      %401 = arith.cmpi eq, %90, %400 : vector<8x8xi32>
      %c5_164 = arith.constant 5 : index
      %c4_165 = arith.constant 4 : index
      %402 = memref.load %arg6[%c5_164, %c4_165] : memref<8x8xf32, #tpu.memory_space<smem>>
      %cst_166 = arith.constant 0.000000e+00 : f32
      %403 = vector.broadcast %402 : f32 to vector<8x8xf32>
      %404 = vector.broadcast %cst_166 : f32 to vector<8x8xf32>
      %405 = arith.select %401, %403, %404 : vector<8x8xi1>, vector<8x8xf32>
      %406 = arith.addf %399, %405 : vector<8x8xf32>
      %c45_i32 = arith.constant 45 : i32
      %407 = vector.broadcast %c45_i32 : i32 to vector<8x8xi32>
      %408 = arith.cmpi eq, %90, %407 : vector<8x8xi32>
      %c5_167 = arith.constant 5 : index
      %c5_168 = arith.constant 5 : index
      %409 = memref.load %arg6[%c5_167, %c5_168] : memref<8x8xf32, #tpu.memory_space<smem>>
      %cst_169 = arith.constant 0.000000e+00 : f32
      %410 = vector.broadcast %409 : f32 to vector<8x8xf32>
      %411 = vector.broadcast %cst_169 : f32 to vector<8x8xf32>
      %412 = arith.select %408, %410, %411 : vector<8x8xi1>, vector<8x8xf32>
      %413 = arith.addf %406, %412 : vector<8x8xf32>
      %c46_i32 = arith.constant 46 : i32
      %414 = vector.broadcast %c46_i32 : i32 to vector<8x8xi32>
      %415 = arith.cmpi eq, %90, %414 : vector<8x8xi32>
      %c5_170 = arith.constant 5 : index
      %c6_171 = arith.constant 6 : index
      %416 = memref.load %arg6[%c5_170, %c6_171] : memref<8x8xf32, #tpu.memory_space<smem>>
      %cst_172 = arith.constant 0.000000e+00 : f32
      %417 = vector.broadcast %416 : f32 to vector<8x8xf32>
      %418 = vector.broadcast %cst_172 : f32 to vector<8x8xf32>
      %419 = arith.select %415, %417, %418 : vector<8x8xi1>, vector<8x8xf32>
      %420 = arith.addf %413, %419 : vector<8x8xf32>
      %c47_i32 = arith.constant 47 : i32
      %421 = vector.broadcast %c47_i32 : i32 to vector<8x8xi32>
      %422 = arith.cmpi eq, %90, %421 : vector<8x8xi32>
      %c5_173 = arith.constant 5 : index
      %c7_174 = arith.constant 7 : index
      %423 = memref.load %arg6[%c5_173, %c7_174] : memref<8x8xf32, #tpu.memory_space<smem>>
      %cst_175 = arith.constant 0.000000e+00 : f32
      %424 = vector.broadcast %423 : f32 to vector<8x8xf32>
      %425 = vector.broadcast %cst_175 : f32 to vector<8x8xf32>
      %426 = arith.select %422, %424, %425 : vector<8x8xi1>, vector<8x8xf32>
      %427 = arith.addf %420, %426 : vector<8x8xf32>
      %c48_i32 = arith.constant 48 : i32
      %428 = vector.broadcast %c48_i32 : i32 to vector<8x8xi32>
      %429 = arith.cmpi eq, %90, %428 : vector<8x8xi32>
      %c6_176 = arith.constant 6 : index
      %c0_177 = arith.constant 0 : index
      %430 = memref.load %arg6[%c6_176, %c0_177] : memref<8x8xf32, #tpu.memory_space<smem>>
      %cst_178 = arith.constant 0.000000e+00 : f32
      %431 = vector.broadcast %430 : f32 to vector<8x8xf32>
      %432 = vector.broadcast %cst_178 : f32 to vector<8x8xf32>
      %433 = arith.select %429, %431, %432 : vector<8x8xi1>, vector<8x8xf32>
      %434 = arith.addf %427, %433 : vector<8x8xf32>
      %c49_i32 = arith.constant 49 : i32
      %435 = vector.broadcast %c49_i32 : i32 to vector<8x8xi32>
      %436 = arith.cmpi eq, %90, %435 : vector<8x8xi32>
      %c6_179 = arith.constant 6 : index
      %c1_180 = arith.constant 1 : index
      %437 = memref.load %arg6[%c6_179, %c1_180] : memref<8x8xf32, #tpu.memory_space<smem>>
      %cst_181 = arith.constant 0.000000e+00 : f32
      %438 = vector.broadcast %437 : f32 to vector<8x8xf32>
      %439 = vector.broadcast %cst_181 : f32 to vector<8x8xf32>
      %440 = arith.select %436, %438, %439 : vector<8x8xi1>, vector<8x8xf32>
      %441 = arith.addf %434, %440 : vector<8x8xf32>
      %c50_i32 = arith.constant 50 : i32
      %442 = vector.broadcast %c50_i32 : i32 to vector<8x8xi32>
      %443 = arith.cmpi eq, %90, %442 : vector<8x8xi32>
      %c6_182 = arith.constant 6 : index
      %c2_183 = arith.constant 2 : index
      %444 = memref.load %arg6[%c6_182, %c2_183] : memref<8x8xf32, #tpu.memory_space<smem>>
      %cst_184 = arith.constant 0.000000e+00 : f32
      %445 = vector.broadcast %444 : f32 to vector<8x8xf32>
      %446 = vector.broadcast %cst_184 : f32 to vector<8x8xf32>
      %447 = arith.select %443, %445, %446 : vector<8x8xi1>, vector<8x8xf32>
      %448 = arith.addf %441, %447 : vector<8x8xf32>
      %c51_i32 = arith.constant 51 : i32
      %449 = vector.broadcast %c51_i32 : i32 to vector<8x8xi32>
      %450 = arith.cmpi eq, %90, %449 : vector<8x8xi32>
      %c6_185 = arith.constant 6 : index
      %c3_186 = arith.constant 3 : index
      %451 = memref.load %arg6[%c6_185, %c3_186] : memref<8x8xf32, #tpu.memory_space<smem>>
      %cst_187 = arith.constant 0.000000e+00 : f32
      %452 = vector.broadcast %451 : f32 to vector<8x8xf32>
      %453 = vector.broadcast %cst_187 : f32 to vector<8x8xf32>
      %454 = arith.select %450, %452, %453 : vector<8x8xi1>, vector<8x8xf32>
      %455 = arith.addf %448, %454 : vector<8x8xf32>
      %c52_i32 = arith.constant 52 : i32
      %456 = vector.broadcast %c52_i32 : i32 to vector<8x8xi32>
      %457 = arith.cmpi eq, %90, %456 : vector<8x8xi32>
      %c6_188 = arith.constant 6 : index
      %c4_189 = arith.constant 4 : index
      %458 = memref.load %arg6[%c6_188, %c4_189] : memref<8x8xf32, #tpu.memory_space<smem>>
      %cst_190 = arith.constant 0.000000e+00 : f32
      %459 = vector.broadcast %458 : f32 to vector<8x8xf32>
      %460 = vector.broadcast %cst_190 : f32 to vector<8x8xf32>
      %461 = arith.select %457, %459, %460 : vector<8x8xi1>, vector<8x8xf32>
      %462 = arith.addf %455, %461 : vector<8x8xf32>
      %c53_i32 = arith.constant 53 : i32
      %463 = vector.broadcast %c53_i32 : i32 to vector<8x8xi32>
      %464 = arith.cmpi eq, %90, %463 : vector<8x8xi32>
      %c6_191 = arith.constant 6 : index
      %c5_192 = arith.constant 5 : index
      %465 = memref.load %arg6[%c6_191, %c5_192] : memref<8x8xf32, #tpu.memory_space<smem>>
      %cst_193 = arith.constant 0.000000e+00 : f32
      %466 = vector.broadcast %465 : f32 to vector<8x8xf32>
      %467 = vector.broadcast %cst_193 : f32 to vector<8x8xf32>
      %468 = arith.select %464, %466, %467 : vector<8x8xi1>, vector<8x8xf32>
      %469 = arith.addf %462, %468 : vector<8x8xf32>
      %c54_i32 = arith.constant 54 : i32
      %470 = vector.broadcast %c54_i32 : i32 to vector<8x8xi32>
      %471 = arith.cmpi eq, %90, %470 : vector<8x8xi32>
      %c6_194 = arith.constant 6 : index
      %c6_195 = arith.constant 6 : index
      %472 = memref.load %arg6[%c6_194, %c6_195] : memref<8x8xf32, #tpu.memory_space<smem>>
      %cst_196 = arith.constant 0.000000e+00 : f32
      %473 = vector.broadcast %472 : f32 to vector<8x8xf32>
      %474 = vector.broadcast %cst_196 : f32 to vector<8x8xf32>
      %475 = arith.select %471, %473, %474 : vector<8x8xi1>, vector<8x8xf32>
      %476 = arith.addf %469, %475 : vector<8x8xf32>
      %c55_i32 = arith.constant 55 : i32
      %477 = vector.broadcast %c55_i32 : i32 to vector<8x8xi32>
      %478 = arith.cmpi eq, %90, %477 : vector<8x8xi32>
      %c6_197 = arith.constant 6 : index
      %c7_198 = arith.constant 7 : index
      %479 = memref.load %arg6[%c6_197, %c7_198] : memref<8x8xf32, #tpu.memory_space<smem>>
      %cst_199 = arith.constant 0.000000e+00 : f32
      %480 = vector.broadcast %479 : f32 to vector<8x8xf32>
      %481 = vector.broadcast %cst_199 : f32 to vector<8x8xf32>
      %482 = arith.select %478, %480, %481 : vector<8x8xi1>, vector<8x8xf32>
      %483 = arith.addf %476, %482 : vector<8x8xf32>
      %c56_i32 = arith.constant 56 : i32
      %484 = vector.broadcast %c56_i32 : i32 to vector<8x8xi32>
      %485 = arith.cmpi eq, %90, %484 : vector<8x8xi32>
      %c7_200 = arith.constant 7 : index
      %c0_201 = arith.constant 0 : index
      %486 = memref.load %arg6[%c7_200, %c0_201] : memref<8x8xf32, #tpu.memory_space<smem>>
      %cst_202 = arith.constant 0.000000e+00 : f32
      %487 = vector.broadcast %486 : f32 to vector<8x8xf32>
      %488 = vector.broadcast %cst_202 : f32 to vector<8x8xf32>
      %489 = arith.select %485, %487, %488 : vector<8x8xi1>, vector<8x8xf32>
      %490 = arith.addf %483, %489 : vector<8x8xf32>
      %c57_i32 = arith.constant 57 : i32
      %491 = vector.broadcast %c57_i32 : i32 to vector<8x8xi32>
      %492 = arith.cmpi eq, %90, %491 : vector<8x8xi32>
      %c7_203 = arith.constant 7 : index
      %c1_204 = arith.constant 1 : index
      %493 = memref.load %arg6[%c7_203, %c1_204] : memref<8x8xf32, #tpu.memory_space<smem>>
      %cst_205 = arith.constant 0.000000e+00 : f32
      %494 = vector.broadcast %493 : f32 to vector<8x8xf32>
      %495 = vector.broadcast %cst_205 : f32 to vector<8x8xf32>
      %496 = arith.select %492, %494, %495 : vector<8x8xi1>, vector<8x8xf32>
      %497 = arith.addf %490, %496 : vector<8x8xf32>
      %c58_i32 = arith.constant 58 : i32
      %498 = vector.broadcast %c58_i32 : i32 to vector<8x8xi32>
      %499 = arith.cmpi eq, %90, %498 : vector<8x8xi32>
      %c7_206 = arith.constant 7 : index
      %c2_207 = arith.constant 2 : index
      %500 = memref.load %arg6[%c7_206, %c2_207] : memref<8x8xf32, #tpu.memory_space<smem>>
      %cst_208 = arith.constant 0.000000e+00 : f32
      %501 = vector.broadcast %500 : f32 to vector<8x8xf32>
      %502 = vector.broadcast %cst_208 : f32 to vector<8x8xf32>
      %503 = arith.select %499, %501, %502 : vector<8x8xi1>, vector<8x8xf32>
      %504 = arith.addf %497, %503 : vector<8x8xf32>
      %c59_i32 = arith.constant 59 : i32
      %505 = vector.broadcast %c59_i32 : i32 to vector<8x8xi32>
      %506 = arith.cmpi eq, %90, %505 : vector<8x8xi32>
      %c7_209 = arith.constant 7 : index
      %c3_210 = arith.constant 3 : index
      %507 = memref.load %arg6[%c7_209, %c3_210] : memref<8x8xf32, #tpu.memory_space<smem>>
      %cst_211 = arith.constant 0.000000e+00 : f32
      %508 = vector.broadcast %507 : f32 to vector<8x8xf32>
      %509 = vector.broadcast %cst_211 : f32 to vector<8x8xf32>
      %510 = arith.select %506, %508, %509 : vector<8x8xi1>, vector<8x8xf32>
      %511 = arith.addf %504, %510 : vector<8x8xf32>
      %c60_i32 = arith.constant 60 : i32
      %512 = vector.broadcast %c60_i32 : i32 to vector<8x8xi32>
      %513 = arith.cmpi eq, %90, %512 : vector<8x8xi32>
      %c7_212 = arith.constant 7 : index
      %c4_213 = arith.constant 4 : index
      %514 = memref.load %arg6[%c7_212, %c4_213] : memref<8x8xf32, #tpu.memory_space<smem>>
      %cst_214 = arith.constant 0.000000e+00 : f32
      %515 = vector.broadcast %514 : f32 to vector<8x8xf32>
      %516 = vector.broadcast %cst_214 : f32 to vector<8x8xf32>
      %517 = arith.select %513, %515, %516 : vector<8x8xi1>, vector<8x8xf32>
      %518 = arith.addf %511, %517 : vector<8x8xf32>
      %c61_i32 = arith.constant 61 : i32
      %519 = vector.broadcast %c61_i32 : i32 to vector<8x8xi32>
      %520 = arith.cmpi eq, %90, %519 : vector<8x8xi32>
      %c7_215 = arith.constant 7 : index
      %c5_216 = arith.constant 5 : index
      %521 = memref.load %arg6[%c7_215, %c5_216] : memref<8x8xf32, #tpu.memory_space<smem>>
      %cst_217 = arith.constant 0.000000e+00 : f32
      %522 = vector.broadcast %521 : f32 to vector<8x8xf32>
      %523 = vector.broadcast %cst_217 : f32 to vector<8x8xf32>
      %524 = arith.select %520, %522, %523 : vector<8x8xi1>, vector<8x8xf32>
      %525 = arith.addf %518, %524 : vector<8x8xf32>
      %c62_i32 = arith.constant 62 : i32
      %526 = vector.broadcast %c62_i32 : i32 to vector<8x8xi32>
      %527 = arith.cmpi eq, %90, %526 : vector<8x8xi32>
      %c7_218 = arith.constant 7 : index
      %c6_219 = arith.constant 6 : index
      %528 = memref.load %arg6[%c7_218, %c6_219] : memref<8x8xf32, #tpu.memory_space<smem>>
      %cst_220 = arith.constant 0.000000e+00 : f32
      %529 = vector.broadcast %528 : f32 to vector<8x8xf32>
      %530 = vector.broadcast %cst_220 : f32 to vector<8x8xf32>
      %531 = arith.select %527, %529, %530 : vector<8x8xi1>, vector<8x8xf32>
      %532 = arith.addf %525, %531 : vector<8x8xf32>
      %c63_i32 = arith.constant 63 : i32
      %533 = vector.broadcast %c63_i32 : i32 to vector<8x8xi32>
      %534 = arith.cmpi eq, %90, %533 : vector<8x8xi32>
      %c7_221 = arith.constant 7 : index
      %c7_222 = arith.constant 7 : index
      %535 = memref.load %arg6[%c7_221, %c7_222] : memref<8x8xf32, #tpu.memory_space<smem>>
      %cst_223 = arith.constant 0.000000e+00 : f32
      %536 = vector.broadcast %535 : f32 to vector<8x8xf32>
      %537 = vector.broadcast %cst_223 : f32 to vector<8x8xf32>
      %538 = arith.select %534, %536, %537 : vector<8x8xi1>, vector<8x8xf32>
      %539 = arith.addf %532, %538 : vector<8x8xf32>
      %540 = arith.mulf %79, %57 : vector<8x8xf32>
      %541 = arith.mulf %539, %61 : vector<8x8xf32>
      %542 = arith.addf %540, %541 : vector<8x8xf32>
      %543 = arith.mulf %83, %65 : vector<8x8xf32>
      %544 = arith.addf %542, %543 : vector<8x8xf32>
      %545 = arith.mulf %87, %71 : vector<8x8xf32>
      %546 = arith.addf %544, %545 : vector<8x8xf32>
      %cst_224 = arith.constant dense<0.000000e+00> : vector<8xf32>
      %547 = vector.multi_reduction <add>, %546, %cst_224 [0] : vector<8x8xf32> to vector<8xf32>
      %548 = vector.shape_cast %547 : vector<8xf32> to vector<1x8xf32>
      %549 = arith.addf %arg16, %548 : vector<1x8xf32>
      %550 = arith.addi %0, %43 : i32
      %c0_i32_225 = arith.constant 0 : i32
      %551 = arith.addi %550, %c0_i32_225 : i32
      %c0_i32_226 = arith.constant 0 : i32
      %552 = arith.addi %43, %c0_i32_226 : i32
      %553 = arith.index_cast %552 : i32 to index
      %c0_227 = arith.constant 0 : index
      %c0_228 = arith.constant 0 : index
      %554 = vector.load %arg2[%553, %c0_227, %c0_228] : memref<16x8x8xf32, #tpu.memory_space<vmem>>, vector<1x8x8xf32>
      %555 = vector.shape_cast %554 : vector<1x8x8xf32> to vector<8x8xf32>
      %cst_229 = arith.constant dense<0xFF800000> : vector<8xf32>
      %556 = vector.multi_reduction <maximumf>, %arg15, %cst_229 [0] : vector<8x8xf32> to vector<8xf32>
      %557 = vector.shape_cast %556 : vector<8xf32> to vector<1x8xf32>
      %558 = vector.broadcast %557 : vector<1x8xf32> to vector<8x8xf32>
      %559 = arith.subf %arg15, %558 : vector<8x8xf32>
      %560 = math.exp %559 : vector<8x8xf32>
      %561 = vector.extract_strided_slice %560 {offsets = [0, 0], sizes = [1, 8], strides = [1, 1]} : vector<8x8xf32> to vector<1x8xf32>
      %562 = vector.broadcast %561 : vector<1x8xf32> to vector<8x8xf32>
      %563 = arith.mulf %8, %562 : vector<8x8xf32>
      %564 = vector.extract_strided_slice %560 {offsets = [1, 0], sizes = [1, 8], strides = [1, 1]} : vector<8x8xf32> to vector<1x8xf32>
      %565 = vector.broadcast %564 : vector<1x8xf32> to vector<8x8xf32>
      %566 = arith.mulf %11, %565 : vector<8x8xf32>
      %567 = arith.addf %563, %566 : vector<8x8xf32>
      %568 = vector.extract_strided_slice %560 {offsets = [2, 0], sizes = [1, 8], strides = [1, 1]} : vector<8x8xf32> to vector<1x8xf32>
      %569 = vector.broadcast %568 : vector<1x8xf32> to vector<8x8xf32>
      %570 = arith.mulf %14, %569 : vector<8x8xf32>
      %571 = vector.extract_strided_slice %560 {offsets = [3, 0], sizes = [1, 8], strides = [1, 1]} : vector<8x8xf32> to vector<1x8xf32>
      %572 = vector.broadcast %571 : vector<1x8xf32> to vector<8x8xf32>
      %573 = arith.mulf %17, %572 : vector<8x8xf32>
      %574 = arith.addf %570, %573 : vector<8x8xf32>
      %575 = arith.addf %567, %574 : vector<8x8xf32>
      %576 = vector.extract_strided_slice %560 {offsets = [4, 0], sizes = [1, 8], strides = [1, 1]} : vector<8x8xf32> to vector<1x8xf32>
      %577 = vector.broadcast %576 : vector<1x8xf32> to vector<8x8xf32>
      %578 = arith.mulf %20, %577 : vector<8x8xf32>
      %579 = vector.extract_strided_slice %560 {offsets = [5, 0], sizes = [1, 8], strides = [1, 1]} : vector<8x8xf32> to vector<1x8xf32>
      %580 = vector.broadcast %579 : vector<1x8xf32> to vector<8x8xf32>
      %581 = arith.mulf %23, %580 : vector<8x8xf32>
      %582 = arith.addf %578, %581 : vector<8x8xf32>
      %583 = arith.addf %575, %582 : vector<8x8xf32>
      %584 = vector.extract_strided_slice %560 {offsets = [6, 0], sizes = [1, 8], strides = [1, 1]} : vector<8x8xf32> to vector<1x8xf32>
      %585 = vector.broadcast %584 : vector<1x8xf32> to vector<8x8xf32>
      %586 = arith.mulf %26, %585 : vector<8x8xf32>
      %587 = vector.extract_strided_slice %560 {offsets = [7, 0], sizes = [1, 8], strides = [1, 1]} : vector<8x8xf32> to vector<1x8xf32>
      %588 = vector.broadcast %587 : vector<1x8xf32> to vector<8x8xf32>
      %589 = arith.mulf %29, %588 : vector<8x8xf32>
      %590 = arith.addf %586, %589 : vector<8x8xf32>
      %591 = arith.addf %583, %590 : vector<8x8xf32>
      %592 = vector.broadcast %3 : vector<8x1xf32> to vector<8x8xf32>
      %593 = arith.addf %555, %592 : vector<8x8xf32>
      %594 = math.log %591 : vector<8x8xf32>
      %595 = vector.broadcast %557 : vector<1x8xf32> to vector<8x8xf32>
      %596 = arith.addf %595, %594 : vector<8x8xf32>
      %597 = arith.addf %593, %596 : vector<8x8xf32>
      %c0_i32_230 = arith.constant 0 : i32
      %598 = arith.cmpi sgt, %551, %c0_i32_230 : i32
      %599 = vector.broadcast %551 : i32 to vector<1x8xi32>
      %600 = arith.cmpi slt, %599, %1 : vector<1x8xi32>
      %601 = vector.broadcast %598 : i1 to vector<1x8xi1>
      %602 = arith.andi %601, %600 : vector<1x8xi1>
      %603 = vector.shape_cast %602 : vector<1x8xi1> to vector<1x8xi1>
      %604 = vector.broadcast %603 : vector<1x8xi1> to vector<8x8xi1>
      %605 = arith.select %604, %597, %arg15 : vector<8x8xi1>, vector<8x8xf32>
      %606 = arith.addi %0, %43 : i32
      %c1_i32_231 = arith.constant 1 : i32
      %607 = arith.addi %606, %c1_i32_231 : i32
      %c1_i32_232 = arith.constant 1 : i32
      %608 = arith.addi %43, %c1_i32_232 : i32
      %609 = arith.index_cast %608 : i32 to index
      %c0_233 = arith.constant 0 : index
      %c0_234 = arith.constant 0 : index
      %610 = vector.load %arg2[%609, %c0_233, %c0_234] : memref<16x8x8xf32, #tpu.memory_space<vmem>>, vector<1x8x8xf32>
      %611 = vector.shape_cast %610 : vector<1x8x8xf32> to vector<8x8xf32>
      %cst_235 = arith.constant dense<0xFF800000> : vector<8xf32>
      %612 = vector.multi_reduction <maximumf>, %605, %cst_235 [0] : vector<8x8xf32> to vector<8xf32>
      %613 = vector.shape_cast %612 : vector<8xf32> to vector<1x8xf32>
      %614 = vector.broadcast %613 : vector<1x8xf32> to vector<8x8xf32>
      %615 = arith.subf %605, %614 : vector<8x8xf32>
      %616 = math.exp %615 : vector<8x8xf32>
      %617 = vector.extract_strided_slice %616 {offsets = [0, 0], sizes = [1, 8], strides = [1, 1]} : vector<8x8xf32> to vector<1x8xf32>
      %618 = vector.broadcast %617 : vector<1x8xf32> to vector<8x8xf32>
      %619 = arith.mulf %8, %618 : vector<8x8xf32>
      %620 = vector.extract_strided_slice %616 {offsets = [1, 0], sizes = [1, 8], strides = [1, 1]} : vector<8x8xf32> to vector<1x8xf32>
      %621 = vector.broadcast %620 : vector<1x8xf32> to vector<8x8xf32>
      %622 = arith.mulf %11, %621 : vector<8x8xf32>
      %623 = arith.addf %619, %622 : vector<8x8xf32>
      %624 = vector.extract_strided_slice %616 {offsets = [2, 0], sizes = [1, 8], strides = [1, 1]} : vector<8x8xf32> to vector<1x8xf32>
      %625 = vector.broadcast %624 : vector<1x8xf32> to vector<8x8xf32>
      %626 = arith.mulf %14, %625 : vector<8x8xf32>
      %627 = vector.extract_strided_slice %616 {offsets = [3, 0], sizes = [1, 8], strides = [1, 1]} : vector<8x8xf32> to vector<1x8xf32>
      %628 = vector.broadcast %627 : vector<1x8xf32> to vector<8x8xf32>
      %629 = arith.mulf %17, %628 : vector<8x8xf32>
      %630 = arith.addf %626, %629 : vector<8x8xf32>
      %631 = arith.addf %623, %630 : vector<8x8xf32>
      %632 = vector.extract_strided_slice %616 {offsets = [4, 0], sizes = [1, 8], strides = [1, 1]} : vector<8x8xf32> to vector<1x8xf32>
      %633 = vector.broadcast %632 : vector<1x8xf32> to vector<8x8xf32>
      %634 = arith.mulf %20, %633 : vector<8x8xf32>
      %635 = vector.extract_strided_slice %616 {offsets = [5, 0], sizes = [1, 8], strides = [1, 1]} : vector<8x8xf32> to vector<1x8xf32>
      %636 = vector.broadcast %635 : vector<1x8xf32> to vector<8x8xf32>
      %637 = arith.mulf %23, %636 : vector<8x8xf32>
      %638 = arith.addf %634, %637 : vector<8x8xf32>
      %639 = arith.addf %631, %638 : vector<8x8xf32>
      %640 = vector.extract_strided_slice %616 {offsets = [6, 0], sizes = [1, 8], strides = [1, 1]} : vector<8x8xf32> to vector<1x8xf32>
      %641 = vector.broadcast %640 : vector<1x8xf32> to vector<8x8xf32>
      %642 = arith.mulf %26, %641 : vector<8x8xf32>
      %643 = vector.extract_strided_slice %616 {offsets = [7, 0], sizes = [1, 8], strides = [1, 1]} : vector<8x8xf32> to vector<1x8xf32>
      %644 = vector.broadcast %643 : vector<1x8xf32> to vector<8x8xf32>
      %645 = arith.mulf %29, %644 : vector<8x8xf32>
      %646 = arith.addf %642, %645 : vector<8x8xf32>
      %647 = arith.addf %639, %646 : vector<8x8xf32>
      %648 = vector.broadcast %3 : vector<8x1xf32> to vector<8x8xf32>
      %649 = arith.addf %611, %648 : vector<8x8xf32>
      %650 = math.log %647 : vector<8x8xf32>
      %651 = vector.broadcast %613 : vector<1x8xf32> to vector<8x8xf32>
      %652 = arith.addf %651, %650 : vector<8x8xf32>
      %653 = arith.addf %649, %652 : vector<8x8xf32>
      %c0_i32_236 = arith.constant 0 : i32
      %654 = arith.cmpi sgt, %607, %c0_i32_236 : i32
      %655 = vector.broadcast %607 : i32 to vector<1x8xi32>
      %656 = arith.cmpi slt, %655, %1 : vector<1x8xi32>
      %657 = vector.broadcast %654 : i1 to vector<1x8xi1>
      %658 = arith.andi %657, %656 : vector<1x8xi1>
      %659 = vector.shape_cast %658 : vector<1x8xi1> to vector<1x8xi1>
      %660 = vector.broadcast %659 : vector<1x8xi1> to vector<8x8xi1>
      %661 = arith.select %660, %653, %605 : vector<8x8xi1>, vector<8x8xf32>
      %662 = arith.addi %0, %43 : i32
      %c2_i32_237 = arith.constant 2 : i32
      %663 = arith.addi %662, %c2_i32_237 : i32
      %c2_i32_238 = arith.constant 2 : i32
      %664 = arith.addi %43, %c2_i32_238 : i32
      %665 = arith.index_cast %664 : i32 to index
      %c0_239 = arith.constant 0 : index
      %c0_240 = arith.constant 0 : index
      %666 = vector.load %arg2[%665, %c0_239, %c0_240] : memref<16x8x8xf32, #tpu.memory_space<vmem>>, vector<1x8x8xf32>
      %667 = vector.shape_cast %666 : vector<1x8x8xf32> to vector<8x8xf32>
      %cst_241 = arith.constant dense<0xFF800000> : vector<8xf32>
      %668 = vector.multi_reduction <maximumf>, %661, %cst_241 [0] : vector<8x8xf32> to vector<8xf32>
      %669 = vector.shape_cast %668 : vector<8xf32> to vector<1x8xf32>
      %670 = vector.broadcast %669 : vector<1x8xf32> to vector<8x8xf32>
      %671 = arith.subf %661, %670 : vector<8x8xf32>
      %672 = math.exp %671 : vector<8x8xf32>
      %673 = vector.extract_strided_slice %672 {offsets = [0, 0], sizes = [1, 8], strides = [1, 1]} : vector<8x8xf32> to vector<1x8xf32>
      %674 = vector.broadcast %673 : vector<1x8xf32> to vector<8x8xf32>
      %675 = arith.mulf %8, %674 : vector<8x8xf32>
      %676 = vector.extract_strided_slice %672 {offsets = [1, 0], sizes = [1, 8], strides = [1, 1]} : vector<8x8xf32> to vector<1x8xf32>
      %677 = vector.broadcast %676 : vector<1x8xf32> to vector<8x8xf32>
      %678 = arith.mulf %11, %677 : vector<8x8xf32>
      %679 = arith.addf %675, %678 : vector<8x8xf32>
      %680 = vector.extract_strided_slice %672 {offsets = [2, 0], sizes = [1, 8], strides = [1, 1]} : vector<8x8xf32> to vector<1x8xf32>
      %681 = vector.broadcast %680 : vector<1x8xf32> to vector<8x8xf32>
      %682 = arith.mulf %14, %681 : vector<8x8xf32>
      %683 = vector.extract_strided_slice %672 {offsets = [3, 0], sizes = [1, 8], strides = [1, 1]} : vector<8x8xf32> to vector<1x8xf32>
      %684 = vector.broadcast %683 : vector<1x8xf32> to vector<8x8xf32>
      %685 = arith.mulf %17, %684 : vector<8x8xf32>
      %686 = arith.addf %682, %685 : vector<8x8xf32>
      %687 = arith.addf %679, %686 : vector<8x8xf32>
      %688 = vector.extract_strided_slice %672 {offsets = [4, 0], sizes = [1, 8], strides = [1, 1]} : vector<8x8xf32> to vector<1x8xf32>
      %689 = vector.broadcast %688 : vector<1x8xf32> to vector<8x8xf32>
      %690 = arith.mulf %20, %689 : vector<8x8xf32>
      %691 = vector.extract_strided_slice %672 {offsets = [5, 0], sizes = [1, 8], strides = [1, 1]} : vector<8x8xf32> to vector<1x8xf32>
      %692 = vector.broadcast %691 : vector<1x8xf32> to vector<8x8xf32>
      %693 = arith.mulf %23, %692 : vector<8x8xf32>
      %694 = arith.addf %690, %693 : vector<8x8xf32>
      %695 = arith.addf %687, %694 : vector<8x8xf32>
      %696 = vector.extract_strided_slice %672 {offsets = [6, 0], sizes = [1, 8], strides = [1, 1]} : vector<8x8xf32> to vector<1x8xf32>
      %697 = vector.broadcast %696 : vector<1x8xf32> to vector<8x8xf32>
      %698 = arith.mulf %26, %697 : vector<8x8xf32>
      %699 = vector.extract_strided_slice %672 {offsets = [7, 0], sizes = [1, 8], strides = [1, 1]} : vector<8x8xf32> to vector<1x8xf32>
      %700 = vector.broadcast %699 : vector<1x8xf32> to vector<8x8xf32>
      %701 = arith.mulf %29, %700 : vector<8x8xf32>
      %702 = arith.addf %698, %701 : vector<8x8xf32>
      %703 = arith.addf %695, %702 : vector<8x8xf32>
      %704 = vector.broadcast %3 : vector<8x1xf32> to vector<8x8xf32>
      %705 = arith.addf %667, %704 : vector<8x8xf32>
      %706 = math.log %703 : vector<8x8xf32>
      %707 = vector.broadcast %669 : vector<1x8xf32> to vector<8x8xf32>
      %708 = arith.addf %707, %706 : vector<8x8xf32>
      %709 = arith.addf %705, %708 : vector<8x8xf32>
      %c0_i32_242 = arith.constant 0 : i32
      %710 = arith.cmpi sgt, %663, %c0_i32_242 : i32
      %711 = vector.broadcast %663 : i32 to vector<1x8xi32>
      %712 = arith.cmpi slt, %711, %1 : vector<1x8xi32>
      %713 = vector.broadcast %710 : i1 to vector<1x8xi1>
      %714 = arith.andi %713, %712 : vector<1x8xi1>
      %715 = vector.shape_cast %714 : vector<1x8xi1> to vector<1x8xi1>
      %716 = vector.broadcast %715 : vector<1x8xi1> to vector<8x8xi1>
      %717 = arith.select %716, %709, %661 : vector<8x8xi1>, vector<8x8xf32>
      %718 = arith.addi %0, %43 : i32
      %c3_i32_243 = arith.constant 3 : i32
      %719 = arith.addi %718, %c3_i32_243 : i32
      %c3_i32_244 = arith.constant 3 : i32
      %720 = arith.addi %43, %c3_i32_244 : i32
      %721 = arith.index_cast %720 : i32 to index
      %c0_245 = arith.constant 0 : index
      %c0_246 = arith.constant 0 : index
      %722 = vector.load %arg2[%721, %c0_245, %c0_246] : memref<16x8x8xf32, #tpu.memory_space<vmem>>, vector<1x8x8xf32>
      %723 = vector.shape_cast %722 : vector<1x8x8xf32> to vector<8x8xf32>
      %cst_247 = arith.constant dense<0xFF800000> : vector<8xf32>
      %724 = vector.multi_reduction <maximumf>, %717, %cst_247 [0] : vector<8x8xf32> to vector<8xf32>
      %725 = vector.shape_cast %724 : vector<8xf32> to vector<1x8xf32>
      %726 = vector.broadcast %725 : vector<1x8xf32> to vector<8x8xf32>
      %727 = arith.subf %717, %726 : vector<8x8xf32>
      %728 = math.exp %727 : vector<8x8xf32>
      %729 = vector.extract_strided_slice %728 {offsets = [0, 0], sizes = [1, 8], strides = [1, 1]} : vector<8x8xf32> to vector<1x8xf32>
      %730 = vector.broadcast %729 : vector<1x8xf32> to vector<8x8xf32>
      %731 = arith.mulf %8, %730 : vector<8x8xf32>
      %732 = vector.extract_strided_slice %728 {offsets = [1, 0], sizes = [1, 8], strides = [1, 1]} : vector<8x8xf32> to vector<1x8xf32>
      %733 = vector.broadcast %732 : vector<1x8xf32> to vector<8x8xf32>
      %734 = arith.mulf %11, %733 : vector<8x8xf32>
      %735 = arith.addf %731, %734 : vector<8x8xf32>
      %736 = vector.extract_strided_slice %728 {offsets = [2, 0], sizes = [1, 8], strides = [1, 1]} : vector<8x8xf32> to vector<1x8xf32>
      %737 = vector.broadcast %736 : vector<1x8xf32> to vector<8x8xf32>
      %738 = arith.mulf %14, %737 : vector<8x8xf32>
      %739 = vector.extract_strided_slice %728 {offsets = [3, 0], sizes = [1, 8], strides = [1, 1]} : vector<8x8xf32> to vector<1x8xf32>
      %740 = vector.broadcast %739 : vector<1x8xf32> to vector<8x8xf32>
      %741 = arith.mulf %17, %740 : vector<8x8xf32>
      %742 = arith.addf %738, %741 : vector<8x8xf32>
      %743 = arith.addf %735, %742 : vector<8x8xf32>
      %744 = vector.extract_strided_slice %728 {offsets = [4, 0], sizes = [1, 8], strides = [1, 1]} : vector<8x8xf32> to vector<1x8xf32>
      %745 = vector.broadcast %744 : vector<1x8xf32> to vector<8x8xf32>
      %746 = arith.mulf %20, %745 : vector<8x8xf32>
      %747 = vector.extract_strided_slice %728 {offsets = [5, 0], sizes = [1, 8], strides = [1, 1]} : vector<8x8xf32> to vector<1x8xf32>
      %748 = vector.broadcast %747 : vector<1x8xf32> to vector<8x8xf32>
      %749 = arith.mulf %23, %748 : vector<8x8xf32>
      %750 = arith.addf %746, %749 : vector<8x8xf32>
      %751 = arith.addf %743, %750 : vector<8x8xf32>
      %752 = vector.extract_strided_slice %728 {offsets = [6, 0], sizes = [1, 8], strides = [1, 1]} : vector<8x8xf32> to vector<1x8xf32>
      %753 = vector.broadcast %752 : vector<1x8xf32> to vector<8x8xf32>
      %754 = arith.mulf %26, %753 : vector<8x8xf32>
      %755 = vector.extract_strided_slice %728 {offsets = [7, 0], sizes = [1, 8], strides = [1, 1]} : vector<8x8xf32> to vector<1x8xf32>
      %756 = vector.broadcast %755 : vector<1x8xf32> to vector<8x8xf32>
      %757 = arith.mulf %29, %756 : vector<8x8xf32>
      %758 = arith.addf %754, %757 : vector<8x8xf32>
      %759 = arith.addf %751, %758 : vector<8x8xf32>
      %760 = vector.broadcast %3 : vector<8x1xf32> to vector<8x8xf32>
      %761 = arith.addf %723, %760 : vector<8x8xf32>
      %762 = math.log %759 : vector<8x8xf32>
      %763 = vector.broadcast %725 : vector<1x8xf32> to vector<8x8xf32>
      %764 = arith.addf %763, %762 : vector<8x8xf32>
      %765 = arith.addf %761, %764 : vector<8x8xf32>
      %c0_i32_248 = arith.constant 0 : i32
      %766 = arith.cmpi sgt, %719, %c0_i32_248 : i32
      %767 = vector.broadcast %719 : i32 to vector<1x8xi32>
      %768 = arith.cmpi slt, %767, %1 : vector<1x8xi32>
      %769 = vector.broadcast %766 : i1 to vector<1x8xi1>
      %770 = arith.andi %769, %768 : vector<1x8xi1>
      %771 = vector.shape_cast %770 : vector<1x8xi1> to vector<1x8xi1>
      %772 = vector.broadcast %771 : vector<1x8xi1> to vector<8x8xi1>
      %773 = arith.select %772, %765, %717 : vector<8x8xi1>, vector<8x8xf32>
      %774 = arith.addi %0, %43 : i32
      %c4_i32_249 = arith.constant 4 : i32
      %775 = arith.addi %774, %c4_i32_249 : i32
      %c4_i32_250 = arith.constant 4 : i32
      %776 = arith.addi %43, %c4_i32_250 : i32
      %777 = arith.index_cast %776 : i32 to index
      %c0_251 = arith.constant 0 : index
      %c0_252 = arith.constant 0 : index
      %778 = vector.load %arg2[%777, %c0_251, %c0_252] : memref<16x8x8xf32, #tpu.memory_space<vmem>>, vector<1x8x8xf32>
      %779 = vector.shape_cast %778 : vector<1x8x8xf32> to vector<8x8xf32>
      %cst_253 = arith.constant dense<0xFF800000> : vector<8xf32>
      %780 = vector.multi_reduction <maximumf>, %773, %cst_253 [0] : vector<8x8xf32> to vector<8xf32>
      %781 = vector.shape_cast %780 : vector<8xf32> to vector<1x8xf32>
      %782 = vector.broadcast %781 : vector<1x8xf32> to vector<8x8xf32>
      %783 = arith.subf %773, %782 : vector<8x8xf32>
      %784 = math.exp %783 : vector<8x8xf32>
      %785 = vector.extract_strided_slice %784 {offsets = [0, 0], sizes = [1, 8], strides = [1, 1]} : vector<8x8xf32> to vector<1x8xf32>
      %786 = vector.broadcast %785 : vector<1x8xf32> to vector<8x8xf32>
      %787 = arith.mulf %8, %786 : vector<8x8xf32>
      %788 = vector.extract_strided_slice %784 {offsets = [1, 0], sizes = [1, 8], strides = [1, 1]} : vector<8x8xf32> to vector<1x8xf32>
      %789 = vector.broadcast %788 : vector<1x8xf32> to vector<8x8xf32>
      %790 = arith.mulf %11, %789 : vector<8x8xf32>
      %791 = arith.addf %787, %790 : vector<8x8xf32>
      %792 = vector.extract_strided_slice %784 {offsets = [2, 0], sizes = [1, 8], strides = [1, 1]} : vector<8x8xf32> to vector<1x8xf32>
      %793 = vector.broadcast %792 : vector<1x8xf32> to vector<8x8xf32>
      %794 = arith.mulf %14, %793 : vector<8x8xf32>
      %795 = vector.extract_strided_slice %784 {offsets = [3, 0], sizes = [1, 8], strides = [1, 1]} : vector<8x8xf32> to vector<1x8xf32>
      %796 = vector.broadcast %795 : vector<1x8xf32> to vector<8x8xf32>
      %797 = arith.mulf %17, %796 : vector<8x8xf32>
      %798 = arith.addf %794, %797 : vector<8x8xf32>
      %799 = arith.addf %791, %798 : vector<8x8xf32>
      %800 = vector.extract_strided_slice %784 {offsets = [4, 0], sizes = [1, 8], strides = [1, 1]} : vector<8x8xf32> to vector<1x8xf32>
      %801 = vector.broadcast %800 : vector<1x8xf32> to vector<8x8xf32>
      %802 = arith.mulf %20, %801 : vector<8x8xf32>
      %803 = vector.extract_strided_slice %784 {offsets = [5, 0], sizes = [1, 8], strides = [1, 1]} : vector<8x8xf32> to vector<1x8xf32>
      %804 = vector.broadcast %803 : vector<1x8xf32> to vector<8x8xf32>
      %805 = arith.mulf %23, %804 : vector<8x8xf32>
      %806 = arith.addf %802, %805 : vector<8x8xf32>
      %807 = arith.addf %799, %806 : vector<8x8xf32>
      %808 = vector.extract_strided_slice %784 {offsets = [6, 0], sizes = [1, 8], strides = [1, 1]} : vector<8x8xf32> to vector<1x8xf32>
      %809 = vector.broadcast %808 : vector<1x8xf32> to vector<8x8xf32>
      %810 = arith.mulf %26, %809 : vector<8x8xf32>
      %811 = vector.extract_strided_slice %784 {offsets = [7, 0], sizes = [1, 8], strides = [1, 1]} : vector<8x8xf32> to vector<1x8xf32>
      %812 = vector.broadcast %811 : vector<1x8xf32> to vector<8x8xf32>
      %813 = arith.mulf %29, %812 : vector<8x8xf32>
      %814 = arith.addf %810, %813 : vector<8x8xf32>
      %815 = arith.addf %807, %814 : vector<8x8xf32>
      %816 = vector.broadcast %3 : vector<8x1xf32> to vector<8x8xf32>
      %817 = arith.addf %779, %816 : vector<8x8xf32>
      %818 = math.log %815 : vector<8x8xf32>
      %819 = vector.broadcast %781 : vector<1x8xf32> to vector<8x8xf32>
      %820 = arith.addf %819, %818 : vector<8x8xf32>
      %821 = arith.addf %817, %820 : vector<8x8xf32>
      %c0_i32_254 = arith.constant 0 : i32
      %822 = arith.cmpi sgt, %775, %c0_i32_254 : i32
      %823 = vector.broadcast %775 : i32 to vector<1x8xi32>
      %824 = arith.cmpi slt, %823, %1 : vector<1x8xi32>
      %825 = vector.broadcast %822 : i1 to vector<1x8xi1>
      %826 = arith.andi %825, %824 : vector<1x8xi1>
      %827 = vector.shape_cast %826 : vector<1x8xi1> to vector<1x8xi1>
      %828 = vector.broadcast %827 : vector<1x8xi1> to vector<8x8xi1>
      %829 = arith.select %828, %821, %773 : vector<8x8xi1>, vector<8x8xf32>
      %830 = arith.addi %0, %43 : i32
      %c5_i32_255 = arith.constant 5 : i32
      %831 = arith.addi %830, %c5_i32_255 : i32
      %c5_i32_256 = arith.constant 5 : i32
      %832 = arith.addi %43, %c5_i32_256 : i32
      %833 = arith.index_cast %832 : i32 to index
      %c0_257 = arith.constant 0 : index
      %c0_258 = arith.constant 0 : index
      %834 = vector.load %arg2[%833, %c0_257, %c0_258] : memref<16x8x8xf32, #tpu.memory_space<vmem>>, vector<1x8x8xf32>
      %835 = vector.shape_cast %834 : vector<1x8x8xf32> to vector<8x8xf32>
      %cst_259 = arith.constant dense<0xFF800000> : vector<8xf32>
      %836 = vector.multi_reduction <maximumf>, %829, %cst_259 [0] : vector<8x8xf32> to vector<8xf32>
      %837 = vector.shape_cast %836 : vector<8xf32> to vector<1x8xf32>
      %838 = vector.broadcast %837 : vector<1x8xf32> to vector<8x8xf32>
      %839 = arith.subf %829, %838 : vector<8x8xf32>
      %840 = math.exp %839 : vector<8x8xf32>
      %841 = vector.extract_strided_slice %840 {offsets = [0, 0], sizes = [1, 8], strides = [1, 1]} : vector<8x8xf32> to vector<1x8xf32>
      %842 = vector.broadcast %841 : vector<1x8xf32> to vector<8x8xf32>
      %843 = arith.mulf %8, %842 : vector<8x8xf32>
      %844 = vector.extract_strided_slice %840 {offsets = [1, 0], sizes = [1, 8], strides = [1, 1]} : vector<8x8xf32> to vector<1x8xf32>
      %845 = vector.broadcast %844 : vector<1x8xf32> to vector<8x8xf32>
      %846 = arith.mulf %11, %845 : vector<8x8xf32>
      %847 = arith.addf %843, %846 : vector<8x8xf32>
      %848 = vector.extract_strided_slice %840 {offsets = [2, 0], sizes = [1, 8], strides = [1, 1]} : vector<8x8xf32> to vector<1x8xf32>
      %849 = vector.broadcast %848 : vector<1x8xf32> to vector<8x8xf32>
      %850 = arith.mulf %14, %849 : vector<8x8xf32>
      %851 = vector.extract_strided_slice %840 {offsets = [3, 0], sizes = [1, 8], strides = [1, 1]} : vector<8x8xf32> to vector<1x8xf32>
      %852 = vector.broadcast %851 : vector<1x8xf32> to vector<8x8xf32>
      %853 = arith.mulf %17, %852 : vector<8x8xf32>
      %854 = arith.addf %850, %853 : vector<8x8xf32>
      %855 = arith.addf %847, %854 : vector<8x8xf32>
      %856 = vector.extract_strided_slice %840 {offsets = [4, 0], sizes = [1, 8], strides = [1, 1]} : vector<8x8xf32> to vector<1x8xf32>
      %857 = vector.broadcast %856 : vector<1x8xf32> to vector<8x8xf32>
      %858 = arith.mulf %20, %857 : vector<8x8xf32>
      %859 = vector.extract_strided_slice %840 {offsets = [5, 0], sizes = [1, 8], strides = [1, 1]} : vector<8x8xf32> to vector<1x8xf32>
      %860 = vector.broadcast %859 : vector<1x8xf32> to vector<8x8xf32>
      %861 = arith.mulf %23, %860 : vector<8x8xf32>
      %862 = arith.addf %858, %861 : vector<8x8xf32>
      %863 = arith.addf %855, %862 : vector<8x8xf32>
      %864 = vector.extract_strided_slice %840 {offsets = [6, 0], sizes = [1, 8], strides = [1, 1]} : vector<8x8xf32> to vector<1x8xf32>
      %865 = vector.broadcast %864 : vector<1x8xf32> to vector<8x8xf32>
      %866 = arith.mulf %26, %865 : vector<8x8xf32>
      %867 = vector.extract_strided_slice %840 {offsets = [7, 0], sizes = [1, 8], strides = [1, 1]} : vector<8x8xf32> to vector<1x8xf32>
      %868 = vector.broadcast %867 : vector<1x8xf32> to vector<8x8xf32>
      %869 = arith.mulf %29, %868 : vector<8x8xf32>
      %870 = arith.addf %866, %869 : vector<8x8xf32>
      %871 = arith.addf %863, %870 : vector<8x8xf32>
      %872 = vector.broadcast %3 : vector<8x1xf32> to vector<8x8xf32>
      %873 = arith.addf %835, %872 : vector<8x8xf32>
      %874 = math.log %871 : vector<8x8xf32>
      %875 = vector.broadcast %837 : vector<1x8xf32> to vector<8x8xf32>
      %876 = arith.addf %875, %874 : vector<8x8xf32>
      %877 = arith.addf %873, %876 : vector<8x8xf32>
      %c0_i32_260 = arith.constant 0 : i32
      %878 = arith.cmpi sgt, %831, %c0_i32_260 : i32
      %879 = vector.broadcast %831 : i32 to vector<1x8xi32>
      %880 = arith.cmpi slt, %879, %1 : vector<1x8xi32>
      %881 = vector.broadcast %878 : i1 to vector<1x8xi1>
      %882 = arith.andi %881, %880 : vector<1x8xi1>
      %883 = vector.shape_cast %882 : vector<1x8xi1> to vector<1x8xi1>
      %884 = vector.broadcast %883 : vector<1x8xi1> to vector<8x8xi1>
      %885 = arith.select %884, %877, %829 : vector<8x8xi1>, vector<8x8xf32>
      %886 = arith.addi %0, %43 : i32
      %c6_i32_261 = arith.constant 6 : i32
      %887 = arith.addi %886, %c6_i32_261 : i32
      %c6_i32_262 = arith.constant 6 : i32
      %888 = arith.addi %43, %c6_i32_262 : i32
      %889 = arith.index_cast %888 : i32 to index
      %c0_263 = arith.constant 0 : index
      %c0_264 = arith.constant 0 : index
      %890 = vector.load %arg2[%889, %c0_263, %c0_264] : memref<16x8x8xf32, #tpu.memory_space<vmem>>, vector<1x8x8xf32>
      %891 = vector.shape_cast %890 : vector<1x8x8xf32> to vector<8x8xf32>
      %cst_265 = arith.constant dense<0xFF800000> : vector<8xf32>
      %892 = vector.multi_reduction <maximumf>, %885, %cst_265 [0] : vector<8x8xf32> to vector<8xf32>
      %893 = vector.shape_cast %892 : vector<8xf32> to vector<1x8xf32>
      %894 = vector.broadcast %893 : vector<1x8xf32> to vector<8x8xf32>
      %895 = arith.subf %885, %894 : vector<8x8xf32>
      %896 = math.exp %895 : vector<8x8xf32>
      %897 = vector.extract_strided_slice %896 {offsets = [0, 0], sizes = [1, 8], strides = [1, 1]} : vector<8x8xf32> to vector<1x8xf32>
      %898 = vector.broadcast %897 : vector<1x8xf32> to vector<8x8xf32>
      %899 = arith.mulf %8, %898 : vector<8x8xf32>
      %900 = vector.extract_strided_slice %896 {offsets = [1, 0], sizes = [1, 8], strides = [1, 1]} : vector<8x8xf32> to vector<1x8xf32>
      %901 = vector.broadcast %900 : vector<1x8xf32> to vector<8x8xf32>
      %902 = arith.mulf %11, %901 : vector<8x8xf32>
      %903 = arith.addf %899, %902 : vector<8x8xf32>
      %904 = vector.extract_strided_slice %896 {offsets = [2, 0], sizes = [1, 8], strides = [1, 1]} : vector<8x8xf32> to vector<1x8xf32>
      %905 = vector.broadcast %904 : vector<1x8xf32> to vector<8x8xf32>
      %906 = arith.mulf %14, %905 : vector<8x8xf32>
      %907 = vector.extract_strided_slice %896 {offsets = [3, 0], sizes = [1, 8], strides = [1, 1]} : vector<8x8xf32> to vector<1x8xf32>
      %908 = vector.broadcast %907 : vector<1x8xf32> to vector<8x8xf32>
      %909 = arith.mulf %17, %908 : vector<8x8xf32>
      %910 = arith.addf %906, %909 : vector<8x8xf32>
      %911 = arith.addf %903, %910 : vector<8x8xf32>
      %912 = vector.extract_strided_slice %896 {offsets = [4, 0], sizes = [1, 8], strides = [1, 1]} : vector<8x8xf32> to vector<1x8xf32>
      %913 = vector.broadcast %912 : vector<1x8xf32> to vector<8x8xf32>
      %914 = arith.mulf %20, %913 : vector<8x8xf32>
      %915 = vector.extract_strided_slice %896 {offsets = [5, 0], sizes = [1, 8], strides = [1, 1]} : vector<8x8xf32> to vector<1x8xf32>
      %916 = vector.broadcast %915 : vector<1x8xf32> to vector<8x8xf32>
      %917 = arith.mulf %23, %916 : vector<8x8xf32>
      %918 = arith.addf %914, %917 : vector<8x8xf32>
      %919 = arith.addf %911, %918 : vector<8x8xf32>
      %920 = vector.extract_strided_slice %896 {offsets = [6, 0], sizes = [1, 8], strides = [1, 1]} : vector<8x8xf32> to vector<1x8xf32>
      %921 = vector.broadcast %920 : vector<1x8xf32> to vector<8x8xf32>
      %922 = arith.mulf %26, %921 : vector<8x8xf32>
      %923 = vector.extract_strided_slice %896 {offsets = [7, 0], sizes = [1, 8], strides = [1, 1]} : vector<8x8xf32> to vector<1x8xf32>
      %924 = vector.broadcast %923 : vector<1x8xf32> to vector<8x8xf32>
      %925 = arith.mulf %29, %924 : vector<8x8xf32>
      %926 = arith.addf %922, %925 : vector<8x8xf32>
      %927 = arith.addf %919, %926 : vector<8x8xf32>
      %928 = vector.broadcast %3 : vector<8x1xf32> to vector<8x8xf32>
      %929 = arith.addf %891, %928 : vector<8x8xf32>
      %930 = math.log %927 : vector<8x8xf32>
      %931 = vector.broadcast %893 : vector<1x8xf32> to vector<8x8xf32>
      %932 = arith.addf %931, %930 : vector<8x8xf32>
      %933 = arith.addf %929, %932 : vector<8x8xf32>
      %c0_i32_266 = arith.constant 0 : i32
      %934 = arith.cmpi sgt, %887, %c0_i32_266 : i32
      %935 = vector.broadcast %887 : i32 to vector<1x8xi32>
      %936 = arith.cmpi slt, %935, %1 : vector<1x8xi32>
      %937 = vector.broadcast %934 : i1 to vector<1x8xi1>
      %938 = arith.andi %937, %936 : vector<1x8xi1>
      %939 = vector.shape_cast %938 : vector<1x8xi1> to vector<1x8xi1>
      %940 = vector.broadcast %939 : vector<1x8xi1> to vector<8x8xi1>
      %941 = arith.select %940, %933, %885 : vector<8x8xi1>, vector<8x8xf32>
      %942 = arith.addi %0, %43 : i32
      %c7_i32_267 = arith.constant 7 : i32
      %943 = arith.addi %942, %c7_i32_267 : i32
      %c7_i32_268 = arith.constant 7 : i32
      %944 = arith.addi %43, %c7_i32_268 : i32
      %945 = arith.index_cast %944 : i32 to index
      %c0_269 = arith.constant 0 : index
      %c0_270 = arith.constant 0 : index
      %946 = vector.load %arg2[%945, %c0_269, %c0_270] : memref<16x8x8xf32, #tpu.memory_space<vmem>>, vector<1x8x8xf32>
      %947 = vector.shape_cast %946 : vector<1x8x8xf32> to vector<8x8xf32>
      %cst_271 = arith.constant dense<0xFF800000> : vector<8xf32>
      %948 = vector.multi_reduction <maximumf>, %941, %cst_271 [0] : vector<8x8xf32> to vector<8xf32>
      %949 = vector.shape_cast %948 : vector<8xf32> to vector<1x8xf32>
      %950 = vector.broadcast %949 : vector<1x8xf32> to vector<8x8xf32>
      %951 = arith.subf %941, %950 : vector<8x8xf32>
      %952 = math.exp %951 : vector<8x8xf32>
      %953 = vector.extract_strided_slice %952 {offsets = [0, 0], sizes = [1, 8], strides = [1, 1]} : vector<8x8xf32> to vector<1x8xf32>
      %954 = vector.broadcast %953 : vector<1x8xf32> to vector<8x8xf32>
      %955 = arith.mulf %8, %954 : vector<8x8xf32>
      %956 = vector.extract_strided_slice %952 {offsets = [1, 0], sizes = [1, 8], strides = [1, 1]} : vector<8x8xf32> to vector<1x8xf32>
      %957 = vector.broadcast %956 : vector<1x8xf32> to vector<8x8xf32>
      %958 = arith.mulf %11, %957 : vector<8x8xf32>
      %959 = arith.addf %955, %958 : vector<8x8xf32>
      %960 = vector.extract_strided_slice %952 {offsets = [2, 0], sizes = [1, 8], strides = [1, 1]} : vector<8x8xf32> to vector<1x8xf32>
      %961 = vector.broadcast %960 : vector<1x8xf32> to vector<8x8xf32>
      %962 = arith.mulf %14, %961 : vector<8x8xf32>
      %963 = vector.extract_strided_slice %952 {offsets = [3, 0], sizes = [1, 8], strides = [1, 1]} : vector<8x8xf32> to vector<1x8xf32>
      %964 = vector.broadcast %963 : vector<1x8xf32> to vector<8x8xf32>
      %965 = arith.mulf %17, %964 : vector<8x8xf32>
      %966 = arith.addf %962, %965 : vector<8x8xf32>
      %967 = arith.addf %959, %966 : vector<8x8xf32>
      %968 = vector.extract_strided_slice %952 {offsets = [4, 0], sizes = [1, 8], strides = [1, 1]} : vector<8x8xf32> to vector<1x8xf32>
      %969 = vector.broadcast %968 : vector<1x8xf32> to vector<8x8xf32>
      %970 = arith.mulf %20, %969 : vector<8x8xf32>
      %971 = vector.extract_strided_slice %952 {offsets = [5, 0], sizes = [1, 8], strides = [1, 1]} : vector<8x8xf32> to vector<1x8xf32>
      %972 = vector.broadcast %971 : vector<1x8xf32> to vector<8x8xf32>
      %973 = arith.mulf %23, %972 : vector<8x8xf32>
      %974 = arith.addf %970, %973 : vector<8x8xf32>
      %975 = arith.addf %967, %974 : vector<8x8xf32>
      %976 = vector.extract_strided_slice %952 {offsets = [6, 0], sizes = [1, 8], strides = [1, 1]} : vector<8x8xf32> to vector<1x8xf32>
      %977 = vector.broadcast %976 : vector<1x8xf32> to vector<8x8xf32>
      %978 = arith.mulf %26, %977 : vector<8x8xf32>
      %979 = vector.extract_strided_slice %952 {offsets = [7, 0], sizes = [1, 8], strides = [1, 1]} : vector<8x8xf32> to vector<1x8xf32>
      %980 = vector.broadcast %979 : vector<1x8xf32> to vector<8x8xf32>
      %981 = arith.mulf %29, %980 : vector<8x8xf32>
      %982 = arith.addf %978, %981 : vector<8x8xf32>
      %983 = arith.addf %975, %982 : vector<8x8xf32>
      %984 = vector.broadcast %3 : vector<8x1xf32> to vector<8x8xf32>
      %985 = arith.addf %947, %984 : vector<8x8xf32>
      %986 = math.log %983 : vector<8x8xf32>
      %987 = vector.broadcast %949 : vector<1x8xf32> to vector<8x8xf32>
      %988 = arith.addf %987, %986 : vector<8x8xf32>
      %989 = arith.addf %985, %988 : vector<8x8xf32>
      %c0_i32_272 = arith.constant 0 : i32
      %990 = arith.cmpi sgt, %943, %c0_i32_272 : i32
      %991 = vector.broadcast %943 : i32 to vector<1x8xi32>
      %992 = arith.cmpi slt, %991, %1 : vector<1x8xi32>
      %993 = vector.broadcast %990 : i1 to vector<1x8xi1>
      %994 = arith.andi %993, %992 : vector<1x8xi1>
      %995 = vector.shape_cast %994 : vector<1x8xi1> to vector<1x8xi1>
      %996 = vector.broadcast %995 : vector<1x8xi1> to vector<8x8xi1>
      %997 = arith.select %996, %989, %941 : vector<8x8xi1>, vector<8x8xf32>
      scf.yield %997, %549 : vector<8x8xf32>, vector<1x8xf32>
    }
    %c2_i32_15 = arith.constant 2 : i32
    %c0_16 = arith.constant 0 : index
    %c0_17 = arith.constant 0 : index
    %37 = vector.load %arg12[%c0_16, %c0_17] : memref<8x8xf32, #tpu.memory_space<vmem>>, vector<8x8xf32>
    tpu.vector_store %arg12[%c0_16, %c0_17], %36#0 {strides = array<i32>} : memref<8x8xf32, #tpu.memory_space<vmem>>, vector<8x8xf32>,
    %c0_18 = arith.constant 0 : index
    %c0_19 = arith.constant 0 : index
    %38 = vector.load %arg13[%c0_18, %c0_19] : memref<1x8xf32, #tpu.memory_space<vmem>>, vector<1x8xf32>
    tpu.vector_store %arg13[%c0_18, %c0_19], %36#1 {strides = array<i32>} : memref<1x8xf32, #tpu.memory_space<vmem>>, vector<1x8xf32>,
    %c0_i32_20 = arith.constant 0 : i32
    %39 = arith.cmpi eq, %arg1, %c0_i32_20 : i32
    %40 = arith.extui %39 : i1 to i32
    %c0_i32_21 = arith.constant 0 : i32
    %41 = arith.cmpi ne, %40, %c0_i32_21 : i32
    scf.if %41 {
      %42 = vector.broadcast %5 : vector<8x1xf32> to vector<8x8xf32>
      %43 = arith.addf %36#0, %42 : vector<8x8xf32>
      %cst = arith.constant dense<0xFF800000> : vector<8xf32>
      %44 = vector.multi_reduction <maximumf>, %43, %cst [0] : vector<8x8xf32> to vector<8xf32>
      %45 = vector.shape_cast %44 : vector<8xf32> to vector<1x8xf32>
      %46 = vector.broadcast %45 : vector<1x8xf32> to vector<8x8xf32>
      %47 = arith.subf %43, %46 : vector<8x8xf32>
      %48 = math.exp %47 : vector<8x8xf32>
      %cst_22 = arith.constant dense<0.000000e+00> : vector<8xf32>
      %49 = vector.multi_reduction <add>, %48, %cst_22 [0] : vector<8x8xf32> to vector<8xf32>
      %50 = vector.shape_cast %49 : vector<8xf32> to vector<1x8xf32>
      %51 = math.log %50 : vector<1x8xf32>
      %52 = arith.addf %45, %51 : vector<1x8xf32>
      %53 = arith.subf %52, %36#1 : vector<1x8xf32>
      %c0_23 = arith.constant 0 : index
      %c0_24 = arith.constant 0 : index
      %54 = vector.load %arg11[%c0_23, %c0_24] : memref<1x8xf32, #tpu.memory_space<vmem>>, vector<1x8xf32>
      tpu.vector_store %arg11[%c0_23, %c0_24], %53 {strides = array<i32>} : memref<1x8xf32, #tpu.memory_space<vmem>>, vector<1x8xf32>,
    } else {
    }
    return
  }
  func.func @transform_0(%arg0: i32, %arg1: i32) -> (i32, i32, i32) {
    %c0_i32 = arith.constant 0 : i32
    %c0_i32_0 = arith.constant 0 : i32
    return %arg1, %c0_i32, %arg0 : i32, i32, i32
  }
  func.func @transform_1(%arg0: i32, %arg1: i32) -> (i32, i32) {
    %c0_i32 = arith.constant 0 : i32
    return %arg1, %arg0 : i32, i32
  }
  func.func @transform_2(%arg0: i32, %arg1: i32) -> (i32, i32) {
    %c0_i32 = arith.constant 0 : i32
    return %arg1, %arg0 : i32, i32
  }
  func.func @transform_3(%arg0: i32, %arg1: i32) -> (i32, i32) {
    %c0_i32 = arith.constant 0 : i32
    %c0_i32_0 = arith.constant 0 : i32
    return %c0_i32, %arg0 : i32, i32
  }
  func.func @transform_4(%arg0: i32, %arg1: i32) -> (i32, i32) {
    %c0_i32 = arith.constant 0 : i32
    %c0_i32_0 = arith.constant 0 : i32
    %c0_i32_1 = arith.constant 0 : i32
    return %c0_i32, %c0_i32_0 : i32, i32
  }
  func.func @transform_5(%arg0: i32, %arg1: i32) -> (i32, i32) {
    %c0_i32 = arith.constant 0 : i32
    %c0_i32_0 = arith.constant 0 : i32
    %c0_i32_1 = arith.constant 0 : i32
    return %c0_i32, %c0_i32_0 : i32, i32
  }
  func.func @transform_6(%arg0: i32, %arg1: i32) -> (i32, i32) {
    %c0_i32 = arith.constant 0 : i32
    %c0_i32_0 = arith.constant 0 : i32
    %c0_i32_1 = arith.constant 0 : i32
    return %c0_i32, %c0_i32_0 : i32, i32
  }
  func.func @transform_7(%arg0: i32, %arg1: i32) -> (i32, i32) {
    %c0_i32 = arith.constant 0 : i32
    %c0_i32_0 = arith.constant 0 : i32
    %c0_i32_1 = arith.constant 0 : i32
    return %c0_i32, %c0_i32_0 : i32, i32
  }
  func.func @transform_8(%arg0: i32, %arg1: i32) -> (i32, i32) {
    %c0_i32 = arith.constant 0 : i32
    %c0_i32_0 = arith.constant 0 : i32
    %c0_i32_1 = arith.constant 0 : i32
    return %c0_i32, %c0_i32_0 : i32, i32
  }
  func.func @transform_9(%arg0: i32, %arg1: i32) -> (i32, i32) {
    %c0_i32 = arith.constant 0 : i32
    %c0_i32_0 = arith.constant 0 : i32
    return %c0_i32, %arg0 : i32, i32
  }
}

</mosaic_0001>

<llo_original>
// kernel: tpu_custom_call.1
$region0: #{tpu_custom_call.1}
  #allocation0 [shape = 'u32[]', space=smem, size = 0x4, offset = 0x4, fixed_abs, tag = 'smem constant byte address 0x4 - core index']
  #allocation1 [shape = 'u32[144,128]{1,0:T(1,128)}', space=vmem, size = 0x12000, scoped, tag = 'internal scratch']
  #allocation2 [shape = 'f32[8,8]{1,0:T(8,128)}', space=vmem, size = 0x1000, scoped, tag = 'scratch operand']
  #allocation3 [shape = 'f32[1,8]{1,0:T(1,128)}', space=vmem, size = 0x200, scoped, tag = 'scratch operand']
  %s0 = inlined_call_operand.vmem [shape: f32[16,8,8], index: 0, kind: input, shape index: {}]
  %s1 = inlined_call_operand.vmem [shape: s32[16,8], index: 1, kind: input, shape index: {}]
  %s2 = inlined_call_operand.vmem [shape: s32[16,8], index: 2, kind: input, shape index: {}]
  %s3 = inlined_call_operand.vmem [shape: s32[1,8], index: 3, kind: input, shape index: {}]
  %s4 = inlined_call_operand.vmem [shape: f32[8,8], index: 4, kind: input, shape index: {}]
  %s5 = inlined_call_operand.vmem [shape: f32[8,8], index: 5, kind: input, shape index: {}]
  %s6 = inlined_call_operand.vmem [shape: f32[8,1], index: 6, kind: input, shape index: {}]
  %s7 = inlined_call_operand.vmem [shape: f32[8,1], index: 7, kind: input, shape index: {}]
  %s8 = inlined_call_operand.vmem [shape: f32[8,1], index: 8, kind: input, shape index: {}]
  %s9 = inlined_call_operand.hbm [shape: f32[1,8], index: 9, kind: output, shape index: {}]
  %s10 = sld [smem:[#allocation0]]
  $region65: #{tpu_custom_call.1} parent=0
    _
  %s12 = ssub.s32 1, %s10
  %s13 = scalar_select 0, %s12, %s10
  $region1: #{tpu_custom_call.1} parent=0
    #allocation4 [shape = 'u8[4096]{0}', space=smem, size = 0x1000, scoped, tag = 'input window, operand 4, single buffered']
    #allocation5 [shape = 's32[1]{0}', space=sflag, size = 0x4, scoped, tag = 'scoped memory for tpu_custom_call.1']
    #allocation6 [shape = 's32[1]{0}', space=sflag, size = 0x4, scoped, tag = 'scoped memory for tpu_custom_call.1']
    #allocation7 [shape = 'u8[512]{0}', space=vmem, size = 0x400, scoped, tag = 'output window, operand 0, single buffered']
    %14 = vsyncpa [#allocation6], 0
    %15 = vsyncpa [#allocation5], 0
    // Predicated region
    $region2: #{tpu_custom_call.1} parent=1 // pred_check
      _
    $region3: #{tpu_custom_call.1} parent=1 // pred_check_branch
      %17 = sbr.rel (0) target = $region5
    $region4: #{tpu_custom_call.1} parent=1 // pred_region
      _
    $region5: #{tpu_custom_call.1} parent=1 // pred_fallthru
      _
    // Predicated region
    $region6: #{tpu_custom_call.1} parent=1 // pred_check
      _
    $region7: #{tpu_custom_call.1} parent=1 // pred_check_branch
      %19 = sbr.rel (0) target = $region9
    $region8: #{tpu_custom_call.1} parent=1 // pred_region
      _
    $region9: #{tpu_custom_call.1} parent=1 // pred_fallthru
      _
    // Predicated region
    $region10: #{tpu_custom_call.1} parent=1 // pred_check
      _
    $region11: #{tpu_custom_call.1} parent=1 // pred_check_branch
      %21 = sbr.rel (0) target = $region13
    $region12: #{tpu_custom_call.1} parent=1 // pred_region
      _
    $region13: #{tpu_custom_call.1} parent=1 // pred_fallthru
      _
    // Predicated region
    $region14: #{tpu_custom_call.1} parent=1 // pred_check
      _
    $region15: #{tpu_custom_call.1} parent=1 // pred_check_branch
      %23 = sbr.rel (0) target = $region17
    $region16: #{tpu_custom_call.1} parent=1 // pred_region
      _
    $region17: #{tpu_custom_call.1} parent=1 // pred_fallthru
      _
    // Predicated region
    $region18: #{tpu_custom_call.1} parent=1 // pred_check
      _
    $region19: #{tpu_custom_call.1} parent=1 // pred_check_branch
      %25 = sbr.rel (0) target = $region21
    $region20: #{tpu_custom_call.1} parent=1 // pred_region
      %s27 = ssub.s32 128, 128
      %28 = vsyncadd [#allocation6], %s27
      %s30 = sshll.u32 %s4, 4
      %s31 = int_to_ptr.vmem [resolvable:$true] %s30
      %33 = dma.vmem_to_smem %s31, 128, [#allocation4], [#allocation6]
    $region21: #{tpu_custom_call.1} parent=1 // pred_fallthru
      _
    // Predicated region
    $region22: #{tpu_custom_call.1} parent=1 // pred_check
      _
    $region23: #{tpu_custom_call.1} parent=1 // pred_check_branch
      %35 = sbr.rel (0) target = $region25
    $region24: #{tpu_custom_call.1} parent=1 // pred_region
      _
    $region25: #{tpu_custom_call.1} parent=1 // pred_fallthru
      _
    // Predicated region
    $region26: #{tpu_custom_call.1} parent=1 // pred_check
      _
    $region27: #{tpu_custom_call.1} parent=1 // pred_check_branch
      %37 = sbr.rel (0) target = $region29
    $region28: #{tpu_custom_call.1} parent=1 // pred_region
      _
    $region29: #{tpu_custom_call.1} parent=1 // pred_fallthru
      _
    // Predicated region
    $region30: #{tpu_custom_call.1} parent=1 // pred_check
      _
    $region31: #{tpu_custom_call.1} parent=1 // pred_check_branch
      %39 = sbr.rel (0) target = $region33
    $region32: #{tpu_custom_call.1} parent=1 // pred_region
      _
    $region33: #{tpu_custom_call.1} parent=1 // pred_fallthru
      _
    // Predicated region
    $region34: #{tpu_custom_call.1} parent=1 // pred_check
      _
    $region35: #{tpu_custom_call.1} parent=1 // pred_check_branch
      %41 = sbr.rel (0) target = $region37
    $region36: #{tpu_custom_call.1} parent=1 // pred_region
      _
    $region37: #{tpu_custom_call.1} parent=1 // pred_fallthru
      _
    // Predicated region
    $region38: #{tpu_custom_call.1} parent=1 // pred_check
      _
    $region39: #{tpu_custom_call.1} parent=1 // pred_check_branch
      %43 = sbr.rel (0) target = $region41
    $region40: #{tpu_custom_call.1} parent=1 // pred_region
      %44 = dma.done [#allocation6], 128
    $region41: #{tpu_custom_call.1} parent=1 // pred_fallthru
      _
    %45 = sfence
    %s46 = smul.u32 0, 16
    %v47 = vld [vmem:[%s3] sm:$0x1]
    %v48 = vld [vmem:[%s5] sm:$0xff]
    %v49 = vld [vmem:[%s6] sm:$0xff]
    %v50 = vld [vmem:[%s7] sm:$0xff]
    %v51 = vld [vmem:[%s8] sm:$0xff]
    %53 = vset.pattern.permute.xlu0 0
    %54 = vperm.xlu0 %53, %v48
    %v55 = vpop.permute.xlu0 %54
    %57 = vset.pattern.permute.xlu0 1
    %58 = vperm.xlu0 %57, %v48
    %v59 = vpop.permute.xlu0 %58
    %61 = vset.pattern.permute.xlu0 2
    %62 = vperm.xlu0 %61, %v48
    %v63 = vpop.permute.xlu0 %62
    %65 = vset.pattern.permute.xlu0 3
    %66 = vperm.xlu0 %65, %v48
    %v67 = vpop.permute.xlu0 %66
    %69 = vset.pattern.permute.xlu0 4
    %70 = vperm.xlu0 %69, %v48
    %v71 = vpop.permute.xlu0 %70
    %73 = vset.pattern.permute.xlu0 5
    %74 = vperm.xlu0 %73, %v48
    %v75 = vpop.permute.xlu0 %74
    %77 = vset.pattern.permute.xlu0 6
    %78 = vperm.xlu0 %77, %v48
    %v79 = vpop.permute.xlu0 %78
    %81 = vset.pattern.permute.xlu0 7
    %82 = vperm.xlu0 %81, %v48
    %v83 = vpop.permute.xlu0 %82
    %p85 = scmp.eq.s32.totalorder 0, 0
    // Predicated region
    $region42: #{tpu_custom_call.1} parent=1 // pred_check
      %p86 = pneg %p85
    $region43: #{tpu_custom_call.1} parent=1 // pred_check_branch
      %88 = sbr.rel (%p86) target = $region45
    $region44: #{tpu_custom_call.1} parent=1 // pred_region
      %v89 = vld [vmem:[%s0] sm:$0xff]
      %91 = vset.pattern.permute.xlu0 0
      %92 = vperm.xlu0 %91, %v50
      %v93 = vpop.permute.xlu0 %92
      %v95 = vadd.f32 %v93, %v89
      %vm96 = vcmask 64512
      %97 = vst.msk [vmem:[#allocation2] sm:$0xff] %vm96, %v95
      %vm98 = vcmask 57344
      %99 = vst.msk [vmem:[#allocation3] sm:$0x1] %vm98, 0.0
    $region45: #{tpu_custom_call.1} parent=1 // pred_fallthru
      _
    %v100 = vld [vmem:[#allocation2] sm:$0xff]
    %v101 = vld [vmem:[#allocation3] sm:$0x1]
    loop: start=0, step=1, limit=2
    $region46: #{tpu_custom_call.1} parent=1 // loop_pre_header
      _
    $region47: #{tpu_custom_call.1} parent=1 // loop_header
      %s103 = sphi 0, %s107
      %p104 = scmp.ge.s32.totalorder %s103, 2
      %v108 = vphi %v100, %v1578
      %v109 = vphi %v101, %v930
    $region48: #{tpu_custom_call.1} parent=1 // loop_header_branch
      %106 = sbr.rel (%p104) target = $region52
    $region49: #{tpu_custom_call.1} parent=1 // loop_body
      %s110 = smul.u32 %s103, 8
      %s111 = smul.u32 %s110, 8
      %s112 = scalar_lea.vmem %s0, %s111
      %v113 = vld [vmem:[%s112] sm:$0xff]
      %v114 = vld [vmem:[%s112 + $0x8] sm:$0xff]
      %v115 = vld [vmem:[%s112 + $0x10] sm:$0xff]
      %v116 = vld [vmem:[%s112 + $0x18] sm:$0xff]
      %v117 = vld [vmem:[%s112 + $0x20] sm:$0xff]
      %v118 = vld [vmem:[%s112 + $0x28] sm:$0xff]
      %v119 = vld [vmem:[%s112 + $0x30] sm:$0xff]
      %v120 = vld [vmem:[%s112 + $0x38] sm:$0xff]
      %s121 = scalar_lea.vmem %s1, %s110
      %v122 = vld [vmem:[%s121] sm:$0xff]
      %s123 = scalar_lea.vmem %s2, %s110
      %v124 = vld [vmem:[%s123] sm:$0xff]
      %s125 = sadd.s32 %s46, %s110
      %v126 = vlaneseq
      %v127 = vshrl.u32 %v126, 7
      %v128 = vstv %s125
      %v129 = vadd.s32 %v128, %v127
      %v130 = vlaneseq
      %v131 = vshrl.u32 %v130, 7
      %v132 = vsub.s32 0, %v131
      %v133 = vrot.slane %v47, %v132
      %vm134 = vcmp.lt.s32.totalorder %v129, %v133
      %v135 = vsel %vm134, 1, 0
      %v136 = vcvt.s32.f32 %v135
      %vm137 = vcmp.ge.s32.totalorder %v129, 1
      %v138 = vsel %vm137, %v136, 0.0
      %vm139 = vcmp.eq.s32.totalorder %v129, 0
      %v140 = vsel %vm139, 1, 0
      %v141 = vcvt.s32.f32 %v140
      %v142 = vsub.s32 %v47, 1
      %v143 = vlaneseq
      %v144 = vshrl.u32 %v143, 7
      %v145 = vsub.s32 0, %v144
      %v146 = vrot.slane %v142, %v145
      %vm147 = vcmp.eq.s32.totalorder %v129, %v146
      %v148 = vsel %vm147, 1, 0
      %v149 = vcvt.s32.f32 %v148
      %v150 = vcombine.high %v122, %v122
      %v152 = vunpack.c.l.s4 1966171168
      %v153 = vunpack.c.0.s8 %v152
      %v154 = vlaneseq
      %v155 = vshrl.u32 %v154, 7
      %v156 = vsub.s32 %v153, %v155
      %v157 = vrot.slane %v122, %v156
      %v159 = vunpack.c.l.s4 1966171168
      %v160 = vunpack.c.0.s8 %v159
      %v161 = vlaneseq
      %v162 = vshrl.u32 %v161, 7
      %v163 = vsub.s32 %v160, %v162
      %v164 = vrot.slane %v150, %v163
      %v165 = vcombine.high %v157, %v157
      %v166 = vcombine.high %v164, %v164
      %v168 = vunpack.c.l.s4 1966171168
      %v169 = vunpack.c.0.s8 %v168
      %v170 = vlaneseq
      %v171 = vshrl.u32 %v170, 7
      %v172 = vsub.s32 %v169, %v171
      %v173 = vrot.slane %v157, %v172
      %v175 = vunpack.c.l.s4 1966171168
      %v176 = vunpack.c.0.s8 %v175
      %v177 = vlaneseq
      %v178 = vshrl.u32 %v177, 7
      %v179 = vsub.s32 %v176, %v178
      %v180 = vrot.slane %v164, %v179
      %v182 = vunpack.c.l.s4 1966171168
      %v183 = vunpack.c.0.s8 %v182
      %v184 = vlaneseq
      %v185 = vshrl.u32 %v184, 7
      %v186 = vsub.s32 %v183, %v185
      %v187 = vrot.slane %v165, %v186
      %v189 = vunpack.c.l.s4 1966171168
      %v190 = vunpack.c.0.s8 %v189
      %v191 = vlaneseq
      %v192 = vshrl.u32 %v191, 7
      %v193 = vsub.s32 %v190, %v192
      %v194 = vrot.slane %v166, %v193
      %v195 = vcombine.high %v173, %v173
      %v196 = vcombine.high %v180, %v180
      %v197 = vcombine.high %v187, %v187
      %v198 = vcombine.high %v194, %v194
      %v199 = vlaneseq
      %v200 = vshrl.u32 %v199, 7
      %v201 = vsub.s32 0, %v200
      %v202 = vrot.slane %v173, %v201
      %v203 = vlaneseq
      %v204 = vshrl.u32 %v203, 7
      %v205 = vsub.s32 0, %v204
      %v206 = vrot.slane %v187, %v205
      %v207 = vlaneseq
      %v208 = vshrl.u32 %v207, 7
      %v209 = vsub.s32 0, %v208
      %v210 = vrot.slane %v195, %v209
      %v211 = vlaneseq
      %v212 = vshrl.u32 %v211, 7
      %v213 = vsub.s32 0, %v212
      %v214 = vrot.slane %v197, %v213
      %v215 = vlaneseq
      %v216 = vshrl.u32 %v215, 7
      %v217 = vsub.s32 0, %v216
      %v218 = vrot.slane %v180, %v217
      %v219 = vlaneseq
      %v220 = vshrl.u32 %v219, 7
      %v221 = vsub.s32 0, %v220
      %v222 = vrot.slane %v194, %v221
      %v223 = vlaneseq
      %v224 = vshrl.u32 %v223, 7
      %v225 = vsub.s32 0, %v224
      %v226 = vrot.slane %v196, %v225
      %v227 = vlaneseq
      %v228 = vshrl.u32 %v227, 7
      %v229 = vsub.s32 0, %v228
      %v230 = vrot.slane %v198, %v229
      %vm231 = vcmp.eq.s32.totalorder %v127, %v202
      %vm232 = vcmp.eq.s32.totalorder %v127, %v206
      %vm233 = vcmp.eq.s32.totalorder %v127, %v210
      %vm234 = vcmp.eq.s32.totalorder %v127, %v214
      %vm235 = vcmp.eq.s32.totalorder %v127, %v218
      %vm236 = vcmp.eq.s32.totalorder %v127, %v222
      %vm237 = vcmp.eq.s32.totalorder %v127, %v226
      %vm238 = vcmp.eq.s32.totalorder %v127, %v230
      %v239 = vsel %vm231, 1, 0
      %v240 = vsel %vm232, 1, 0
      %v241 = vsel %vm233, 1, 0
      %v242 = vsel %vm234, 1, 0
      %v243 = vsel %vm235, 1, 0
      %v244 = vsel %vm236, 1, 0
      %v245 = vsel %vm237, 1, 0
      %v246 = vsel %vm238, 1, 0
      %v247 = vcvt.s32.f32 %v239
      %v248 = vcvt.s32.f32 %v240
      %v249 = vcvt.s32.f32 %v241
      %v250 = vcvt.s32.f32 %v242
      %v251 = vcvt.s32.f32 %v243
      %v252 = vcvt.s32.f32 %v244
      %v253 = vcvt.s32.f32 %v245
      %v254 = vcvt.s32.f32 %v246
      %v255 = vmul.f32 %v113, %v247
      %v256 = vmul.f32 %v114, %v248
      %v257 = vmul.f32 %v115, %v249
      %v258 = vmul.f32 %v116, %v250
      %v259 = vmul.f32 %v117, %v251
      %v260 = vmul.f32 %v118, %v252
      %v261 = vmul.f32 %v119, %v253
      %v262 = vmul.f32 %v120, %v254
      %vm263 = vcmask 64512
      %v264 = vsel %vm263, %v255, 0.0
      %v265 = vrot.slane %v264, 4
      %v266 = vadd.f32 %v264, %v265
      %v267 = vrot.slane %v266, 2
      %v268 = vadd.f32 %v266, %v267
      %v269 = vrot.slane %v268, 1
      %v270 = vadd.f32 %v268, %v269
      %v271 = vsel %vm263, %v256, 0.0
      %v272 = vrot.slane %v271, 4
      %v273 = vadd.f32 %v271, %v272
      %v274 = vrot.slane %v273, 2
      %v275 = vadd.f32 %v273, %v274
      %v276 = vrot.slane %v275, 1
      %v277 = vadd.f32 %v275, %v276
      %v278 = vsel %vm263, %v257, 0.0
      %v279 = vrot.slane %v278, 4
      %v280 = vadd.f32 %v278, %v279
      %v281 = vrot.slane %v280, 2
      %v282 = vadd.f32 %v280, %v281
      %v283 = vrot.slane %v282, 1
      %v284 = vadd.f32 %v282, %v283
      %v285 = vsel %vm263, %v258, 0.0
      %v286 = vrot.slane %v285, 4
      %v287 = vadd.f32 %v285, %v286
      %v288 = vrot.slane %v287, 2
      %v289 = vadd.f32 %v287, %v288
      %v290 = vrot.slane %v289, 1
      %v291 = vadd.f32 %v289, %v290
      %v292 = vsel %vm263, %v259, 0.0
      %v293 = vrot.slane %v292, 4
      %v294 = vadd.f32 %v292, %v293
      %v295 = vrot.slane %v294, 2
      %v296 = vadd.f32 %v294, %v295
      %v297 = vrot.slane %v296, 1
      %v298 = vadd.f32 %v296, %v297
      %v299 = vsel %vm263, %v260, 0.0
      %v300 = vrot.slane %v299, 4
      %v301 = vadd.f32 %v299, %v300
      %v302 = vrot.slane %v301, 2
      %v303 = vadd.f32 %v301, %v302
      %v304 = vrot.slane %v303, 1
      %v305 = vadd.f32 %v303, %v304
      %v306 = vsel %vm263, %v261, 0.0
      %v307 = vrot.slane %v306, 4
      %v308 = vadd.f32 %v306, %v307
      %v309 = vrot.slane %v308, 2
      %v310 = vadd.f32 %v308, %v309
      %v311 = vrot.slane %v310, 1
      %v312 = vadd.f32 %v310, %v311
      %v313 = vsel %vm263, %v262, 0.0
      %v314 = vrot.slane %v313, 4
      %v315 = vadd.f32 %v313, %v314
      %v316 = vrot.slane %v315, 2
      %v317 = vadd.f32 %v315, %v316
      %v318 = vrot.slane %v317, 1
      %v319 = vadd.f32 %v317, %v318
      %321 = vset.pattern.permute.xlu0 0
      %322 = vperm.xlu0 %321, %v50
      %v323 = vpop.permute.xlu0 %322
      %v325 = vmul.f32 %v323, %v247
      %v326 = vmul.f32 %v323, %v248
      %v327 = vmul.f32 %v323, %v249
      %v328 = vmul.f32 %v323, %v250
      %v329 = vmul.f32 %v323, %v251
      %v330 = vmul.f32 %v323, %v252
      %v331 = vmul.f32 %v323, %v253
      %v332 = vmul.f32 %v323, %v254
      %v333 = vsel %vm263, %v325, 0.0
      %v334 = vrot.slane %v333, 4
      %v335 = vadd.f32 %v333, %v334
      %v336 = vrot.slane %v335, 2
      %v337 = vadd.f32 %v335, %v336
      %v338 = vrot.slane %v337, 1
      %v339 = vadd.f32 %v337, %v338
      %v340 = vsel %vm263, %v326, 0.0
      %v341 = vrot.slane %v340, 4
      %v342 = vadd.f32 %v340, %v341
      %v343 = vrot.slane %v342, 2
      %v344 = vadd.f32 %v342, %v343
      %v345 = vrot.slane %v344, 1
      %v346 = vadd.f32 %v344, %v345
      %v347 = vsel %vm263, %v327, 0.0
      %v348 = vrot.slane %v347, 4
      %v349 = vadd.f32 %v347, %v348
      %v350 = vrot.slane %v349, 2
      %v351 = vadd.f32 %v349, %v350
      %v352 = vrot.slane %v351, 1
      %v353 = vadd.f32 %v351, %v352
      %v354 = vsel %vm263, %v328, 0.0
      %v355 = vrot.slane %v354, 4
      %v356 = vadd.f32 %v354, %v355
      %v357 = vrot.slane %v356, 2
      %v358 = vadd.f32 %v356, %v357
      %v359 = vrot.slane %v358, 1
      %v360 = vadd.f32 %v358, %v359
      %v361 = vsel %vm263, %v329, 0.0
      %v362 = vrot.slane %v361, 4
      %v363 = vadd.f32 %v361, %v362
      %v364 = vrot.slane %v363, 2
      %v365 = vadd.f32 %v363, %v364
      %v366 = vrot.slane %v365, 1
      %v367 = vadd.f32 %v365, %v366
      %v368 = vsel %vm263, %v330, 0.0
      %v369 = vrot.slane %v368, 4
      %v370 = vadd.f32 %v368, %v369
      %v371 = vrot.slane %v370, 2
      %v372 = vadd.f32 %v370, %v371
      %v373 = vrot.slane %v372, 1
      %v374 = vadd.f32 %v372, %v373
      %v375 = vsel %vm263, %v331, 0.0
      %v376 = vrot.slane %v375, 4
      %v377 = vadd.f32 %v375, %v376
      %v378 = vrot.slane %v377, 2
      %v379 = vadd.f32 %v377, %v378
      %v380 = vrot.slane %v379, 1
      %v381 = vadd.f32 %v379, %v380
      %v382 = vsel %vm263, %v332, 0.0
      %v383 = vrot.slane %v382, 4
      %v384 = vadd.f32 %v382, %v383
      %v385 = vrot.slane %v384, 2
      %v386 = vadd.f32 %v384, %v385
      %v387 = vrot.slane %v386, 1
      %v388 = vadd.f32 %v386, %v387
      %390 = vset.pattern.permute.xlu0 0
      %391 = vperm.xlu0 %390, %v51
      %v392 = vpop.permute.xlu0 %391
      %v394 = vmul.f32 %v392, %v247
      %v395 = vmul.f32 %v392, %v248
      %v396 = vmul.f32 %v392, %v249
      %v397 = vmul.f32 %v392, %v250
      %v398 = vmul.f32 %v392, %v251
      %v399 = vmul.f32 %v392, %v252
      %v400 = vmul.f32 %v392, %v253
      %v401 = vmul.f32 %v392, %v254
      %v402 = vsel %vm263, %v394, 0.0
      %v403 = vrot.slane %v402, 4
      %v404 = vadd.f32 %v402, %v403
      %v405 = vrot.slane %v404, 2
      %v406 = vadd.f32 %v404, %v405
      %v407 = vrot.slane %v406, 1
      %v408 = vadd.f32 %v406, %v407
      %v409 = vsel %vm263, %v395, 0.0
      %v410 = vrot.slane %v409, 4
      %v411 = vadd.f32 %v409, %v410
      %v412 = vrot.slane %v411, 2
      %v413 = vadd.f32 %v411, %v412
      %v414 = vrot.slane %v413, 1
      %v415 = vadd.f32 %v413, %v414
      %v416 = vsel %vm263, %v396, 0.0
      %v417 = vrot.slane %v416, 4
      %v418 = vadd.f32 %v416, %v417
      %v419 = vrot.slane %v418, 2
      %v420 = vadd.f32 %v418, %v419
      %v421 = vrot.slane %v420, 1
      %v422 = vadd.f32 %v420, %v421
      %v423 = vsel %vm263, %v397, 0.0
      %v424 = vrot.slane %v423, 4
      %v425 = vadd.f32 %v423, %v424
      %v426 = vrot.slane %v425, 2
      %v427 = vadd.f32 %v425, %v426
      %v428 = vrot.slane %v427, 1
      %v429 = vadd.f32 %v427, %v428
      %v430 = vsel %vm263, %v398, 0.0
      %v431 = vrot.slane %v430, 4
      %v432 = vadd.f32 %v430, %v431
      %v433 = vrot.slane %v432, 2
      %v434 = vadd.f32 %v432, %v433
      %v435 = vrot.slane %v434, 1
      %v436 = vadd.f32 %v434, %v435
      %v437 = vsel %vm263, %v399, 0.0
      %v438 = vrot.slane %v437, 4
      %v439 = vadd.f32 %v437, %v438
      %v440 = vrot.slane %v439, 2
      %v441 = vadd.f32 %v439, %v440
      %v442 = vrot.slane %v441, 1
      %v443 = vadd.f32 %v441, %v442
      %v444 = vsel %vm263, %v400, 0.0
      %v445 = vrot.slane %v444, 4
      %v446 = vadd.f32 %v444, %v445
      %v447 = vrot.slane %v446, 2
      %v448 = vadd.f32 %v446, %v447
      %v449 = vrot.slane %v448, 1
      %v450 = vadd.f32 %v448, %v449
      %v451 = vsel %vm263, %v401, 0.0
      %v452 = vrot.slane %v451, 4
      %v453 = vadd.f32 %v451, %v452
      %v454 = vrot.slane %v453, 2
      %v455 = vadd.f32 %v453, %v454
      %v456 = vrot.slane %v455, 1
      %v457 = vadd.f32 %v455, %v456
      %v458 = vmul.u32 %v124, 8
      %v459 = vadd.s32 %v458, %v122
      %vm460 = vcmp.eq.s32.totalorder %v459, 0
      %s461 = sld [smem:[#allocation4]]
      %v462 = vstv %s461
      %v463 = vsel %vm460, %v462, 0.0
      %v464 = vadd.f32 %v463, 0.0
      %vm465 = vcmp.eq.s32.totalorder %v459, 1
      %s466 = sld [smem:[#allocation4 + $0x1]]
      %v467 = vstv %s466
      %v468 = vsel %vm465, %v467, 0.0
      %v469 = vadd.f32 %v464, %v468
      %vm470 = vcmp.eq.s32.totalorder %v459, 2
      %s471 = sld [smem:[#allocation4 + $0x2]]
      %v472 = vstv %s471
      %v473 = vsel %vm470, %v472, 0.0
      %v474 = vadd.f32 %v469, %v473
      %vm475 = vcmp.eq.s32.totalorder %v459, 3
      %s476 = sld [smem:[#allocation4 + $0x3]]
      %v477 = vstv %s476
      %v478 = vsel %vm475, %v477, 0.0
      %v479 = vadd.f32 %v474, %v478
      %vm480 = vcmp.eq.s32.totalorder %v459, 4
      %s481 = sld [smem:[#allocation4 + $0x4]]
      %v482 = vstv %s481
      %v483 = vsel %vm480, %v482, 0.0
      %v484 = vadd.f32 %v479, %v483
      %vm485 = vcmp.eq.s32.totalorder %v459, 5
      %s486 = sld [smem:[#allocation4 + $0x5]]
      %v487 = vstv %s486
      %v488 = vsel %vm485, %v487, 0.0
      %v489 = vadd.f32 %v484, %v488
      %vm490 = vcmp.eq.s32.totalorder %v459, 6
      %s491 = sld [smem:[#allocation4 + $0x6]]
      %v492 = vstv %s491
      %v493 = vsel %vm490, %v492, 0.0
      %v494 = vadd.f32 %v489, %v493
      %vm495 = vcmp.eq.s32.totalorder %v459, 7
      %s496 = sld [smem:[#allocation4 + $0x7]]
      %v497 = vstv %s496
      %v498 = vsel %vm495, %v497, 0.0
      %v499 = vadd.f32 %v494, %v498
      %vm500 = vcmp.eq.s32.totalorder %v459, 8
      %s501 = sld [smem:[#allocation4 + $0x80]]
      %v502 = vstv %s501
      %v503 = vsel %vm500, %v502, 0.0
      %v504 = vadd.f32 %v499, %v503
      %vm505 = vcmp.eq.s32.totalorder %v459, 9
      %s506 = sld [smem:[#allocation4 + $0x81]]
      %v507 = vstv %s506
      %v508 = vsel %vm505, %v507, 0.0
      %v509 = vadd.f32 %v504, %v508
      %vm510 = vcmp.eq.s32.totalorder %v459, 10
      %s511 = sld [smem:[#allocation4 + $0x82]]
      %v512 = vstv %s511
      %v513 = vsel %vm510, %v512, 0.0
      %v514 = vadd.f32 %v509, %v513
      %vm515 = vcmp.eq.s32.totalorder %v459, 11
      %s516 = sld [smem:[#allocation4 + $0x83]]
      %v517 = vstv %s516
      %v518 = vsel %vm515, %v517, 0.0
      %v519 = vadd.f32 %v514, %v518
      %vm520 = vcmp.eq.s32.totalorder %v459, 12
      %s521 = sld [smem:[#allocation4 + $0x84]]
      %v522 = vstv %s521
      %v523 = vsel %vm520, %v522, 0.0
      %v524 = vadd.f32 %v519, %v523
      %vm525 = vcmp.eq.s32.totalorder %v459, 13
      %s526 = sld [smem:[#allocation4 + $0x85]]
      %v527 = vstv %s526
      %v528 = vsel %vm525, %v527, 0.0
      %v529 = vadd.f32 %v524, %v528
      %vm530 = vcmp.eq.s32.totalorder %v459, 14
      %s531 = sld [smem:[#allocation4 + $0x86]]
      %v532 = vstv %s531
      %v533 = vsel %vm530, %v532, 0.0
      %v534 = vadd.f32 %v529, %v533
      %vm535 = vcmp.eq.s32.totalorder %v459, 15
      %s536 = sld [smem:[#allocation4 + $0x87]]
      %v537 = vstv %s536
      %v538 = vsel %vm535, %v537, 0.0
      %v539 = vadd.f32 %v534, %v538
      %vm540 = vcmp.eq.s32.totalorder %v459, 16
      %s541 = sld [smem:[#allocation4 + $0x100]]
      %v542 = vstv %s541
      %v543 = vsel %vm540, %v542, 0.0
      %v544 = vadd.f32 %v539, %v543
      %vm545 = vcmp.eq.s32.totalorder %v459, 17
      %s546 = sld [smem:[#allocation4 + $0x101]]
      %v547 = vstv %s546
      %v548 = vsel %vm545, %v547, 0.0
      %v549 = vadd.f32 %v544, %v548
      %vm550 = vcmp.eq.s32.totalorder %v459, 18
      %s551 = sld [smem:[#allocation4 + $0x102]]
      %v552 = vstv %s551
      %v553 = vsel %vm550, %v552, 0.0
      %v554 = vadd.f32 %v549, %v553
      %vm555 = vcmp.eq.s32.totalorder %v459, 19
      %s556 = sld [smem:[#allocation4 + $0x103]]
      %v557 = vstv %s556
      %v558 = vsel %vm555, %v557, 0.0
      %v559 = vadd.f32 %v554, %v558
      %vm560 = vcmp.eq.s32.totalorder %v459, 20
      %s561 = sld [smem:[#allocation4 + $0x104]]
      %v562 = vstv %s561
      %v563 = vsel %vm560, %v562, 0.0
      %v564 = vadd.f32 %v559, %v563
      %vm565 = vcmp.eq.s32.totalorder %v459, 21
      %s566 = sld [smem:[#allocation4 + $0x105]]
      %v567 = vstv %s566
      %v568 = vsel %vm565, %v567, 0.0
      %v569 = vadd.f32 %v564, %v568
      %vm570 = vcmp.eq.s32.totalorder %v459, 22
      %s571 = sld [smem:[#allocation4 + $0x106]]
      %v572 = vstv %s571
      %v573 = vsel %vm570, %v572, 0.0
      %v574 = vadd.f32 %v569, %v573
      %vm575 = vcmp.eq.s32.totalorder %v459, 23
      %s576 = sld [smem:[#allocation4 + $0x107]]
      %v577 = vstv %s576
      %v578 = vsel %vm575, %v577, 0.0
      %v579 = vadd.f32 %v574, %v578
      %vm580 = vcmp.eq.s32.totalorder %v459, 24
      %s581 = sld [smem:[#allocation4 + $0x180]]
      %v582 = vstv %s581
      %v583 = vsel %vm580, %v582, 0.0
      %v584 = vadd.f32 %v579, %v583
      %vm585 = vcmp.eq.s32.totalorder %v459, 25
      %s586 = sld [smem:[#allocation4 + $0x181]]
      %v587 = vstv %s586
      %v588 = vsel %vm585, %v587, 0.0
      %v589 = vadd.f32 %v584, %v588
      %vm590 = vcmp.eq.s32.totalorder %v459, 26
      %s591 = sld [smem:[#allocation4 + $0x182]]
      %v592 = vstv %s591
      %v593 = vsel %vm590, %v592, 0.0
      %v594 = vadd.f32 %v589, %v593
      %vm595 = vcmp.eq.s32.totalorder %v459, 27
      %s596 = sld [smem:[#allocation4 + $0x183]]
      %v597 = vstv %s596
      %v598 = vsel %vm595, %v597, 0.0
      %v599 = vadd.f32 %v594, %v598
      %vm600 = vcmp.eq.s32.totalorder %v459, 28
      %s601 = sld [smem:[#allocation4 + $0x184]]
      %v602 = vstv %s601
      %v603 = vsel %vm600, %v602, 0.0
      %v604 = vadd.f32 %v599, %v603
      %vm605 = vcmp.eq.s32.totalorder %v459, 29
      %s606 = sld [smem:[#allocation4 + $0x185]]
      %v607 = vstv %s606
      %v608 = vsel %vm605, %v607, 0.0
      %v609 = vadd.f32 %v604, %v608
      %vm610 = vcmp.eq.s32.totalorder %v459, 30
      %s611 = sld [smem:[#allocation4 + $0x186]]
      %v612 = vstv %s611
      %v613 = vsel %vm610, %v612, 0.0
      %v614 = vadd.f32 %v609, %v613
      %vm615 = vcmp.eq.s32.totalorder %v459, 31
      %s616 = sld [smem:[#allocation4 + $0x187]]
      %v617 = vstv %s616
      %v618 = vsel %vm615, %v617, 0.0
      %v619 = vadd.f32 %v614, %v618
      %vm620 = vcmp.eq.s32.totalorder %v459, 32
      %s621 = sld [smem:[#allocation4 + $0x200]]
      %v622 = vstv %s621
      %v623 = vsel %vm620, %v622, 0.0
      %v624 = vadd.f32 %v619, %v623
      %vm625 = vcmp.eq.s32.totalorder %v459, 33
      %s626 = sld [smem:[#allocation4 + $0x201]]
      %v627 = vstv %s626
      %v628 = vsel %vm625, %v627, 0.0
      %v629 = vadd.f32 %v624, %v628
      %vm630 = vcmp.eq.s32.totalorder %v459, 34
      %s631 = sld [smem:[#allocation4 + $0x202]]
      %v632 = vstv %s631
      %v633 = vsel %vm630, %v632, 0.0
      %v634 = vadd.f32 %v629, %v633
      %vm635 = vcmp.eq.s32.totalorder %v459, 35
      %s636 = sld [smem:[#allocation4 + $0x203]]
      %v637 = vstv %s636
      %v638 = vsel %vm635, %v637, 0.0
      %v639 = vadd.f32 %v634, %v638
      %vm640 = vcmp.eq.s32.totalorder %v459, 36
      %s641 = sld [smem:[#allocation4 + $0x204]]
      %v642 = vstv %s641
      %v643 = vsel %vm640, %v642, 0.0
      %v644 = vadd.f32 %v639, %v643
      %vm645 = vcmp.eq.s32.totalorder %v459, 37
      %s646 = sld [smem:[#allocation4 + $0x205]]
      %v647 = vstv %s646
      %v648 = vsel %vm645, %v647, 0.0
      %v649 = vadd.f32 %v644, %v648
      %vm650 = vcmp.eq.s32.totalorder %v459, 38
      %s651 = sld [smem:[#allocation4 + $0x206]]
      %v652 = vstv %s651
      %v653 = vsel %vm650, %v652, 0.0
      %v654 = vadd.f32 %v649, %v653
      %vm655 = vcmp.eq.s32.totalorder %v459, 39
      %s656 = sld [smem:[#allocation4 + $0x207]]
      %v657 = vstv %s656
      %v658 = vsel %vm655, %v657, 0.0
      %v659 = vadd.f32 %v654, %v658
      %vm660 = vcmp.eq.s32.totalorder %v459, 40
      %s661 = sld [smem:[#allocation4 + $0x280]]
      %v662 = vstv %s661
      %v663 = vsel %vm660, %v662, 0.0
      %v664 = vadd.f32 %v659, %v663
      %vm665 = vcmp.eq.s32.totalorder %v459, 41
      %s666 = sld [smem:[#allocation4 + $0x281]]
      %v667 = vstv %s666
      %v668 = vsel %vm665, %v667, 0.0
      %v669 = vadd.f32 %v664, %v668
      %vm670 = vcmp.eq.s32.totalorder %v459, 42
      %s671 = sld [smem:[#allocation4 + $0x282]]
      %v672 = vstv %s671
      %v673 = vsel %vm670, %v672, 0.0
      %v674 = vadd.f32 %v669, %v673
      %vm675 = vcmp.eq.s32.totalorder %v459, 43
      %s676 = sld [smem:[#allocation4 + $0x283]]
      %v677 = vstv %s676
      %v678 = vsel %vm675, %v677, 0.0
      %v679 = vadd.f32 %v674, %v678
      %vm680 = vcmp.eq.s32.totalorder %v459, 44
      %s681 = sld [smem:[#allocation4 + $0x284]]
      %v682 = vstv %s681
      %v683 = vsel %vm680, %v682, 0.0
      %v684 = vadd.f32 %v679, %v683
      %vm685 = vcmp.eq.s32.totalorder %v459, 45
      %s686 = sld [smem:[#allocation4 + $0x285]]
      %v687 = vstv %s686
      %v688 = vsel %vm685, %v687, 0.0
      %v689 = vadd.f32 %v684, %v688
      %vm690 = vcmp.eq.s32.totalorder %v459, 46
      %s691 = sld [smem:[#allocation4 + $0x286]]
      %v692 = vstv %s691
      %v693 = vsel %vm690, %v692, 0.0
      %v694 = vadd.f32 %v689, %v693
      %vm695 = vcmp.eq.s32.totalorder %v459, 47
      %s696 = sld [smem:[#allocation4 + $0x287]]
      %v697 = vstv %s696
      %v698 = vsel %vm695, %v697, 0.0
      %v699 = vadd.f32 %v694, %v698
      %vm700 = vcmp.eq.s32.totalorder %v459, 48
      %s701 = sld [smem:[#allocation4 + $0x300]]
      %v702 = vstv %s701
      %v703 = vsel %vm700, %v702, 0.0
      %v704 = vadd.f32 %v699, %v703
      %vm705 = vcmp.eq.s32.totalorder %v459, 49
      %s706 = sld [smem:[#allocation4 + $0x301]]
      %v707 = vstv %s706
      %v708 = vsel %vm705, %v707, 0.0
      %v709 = vadd.f32 %v704, %v708
      %vm710 = vcmp.eq.s32.totalorder %v459, 50
      %s711 = sld [smem:[#allocation4 + $0x302]]
      %v712 = vstv %s711
      %v713 = vsel %vm710, %v712, 0.0
      %v714 = vadd.f32 %v709, %v713
      %vm715 = vcmp.eq.s32.totalorder %v459, 51
      %s716 = sld [smem:[#allocation4 + $0x303]]
      %v717 = vstv %s716
      %v718 = vsel %vm715, %v717, 0.0
      %v719 = vadd.f32 %v714, %v718
      %vm720 = vcmp.eq.s32.totalorder %v459, 52
      %s721 = sld [smem:[#allocation4 + $0x304]]
      %v722 = vstv %s721
      %v723 = vsel %vm720, %v722, 0.0
      %v724 = vadd.f32 %v719, %v723
      %vm725 = vcmp.eq.s32.totalorder %v459, 53
      %s726 = sld [smem:[#allocation4 + $0x305]]
      %v727 = vstv %s726
      %v728 = vsel %vm725, %v727, 0.0
      %v729 = vadd.f32 %v724, %v728
      %vm730 = vcmp.eq.s32.totalorder %v459, 54
      %s731 = sld [smem:[#allocation4 + $0x306]]
      %v732 = vstv %s731
      %v733 = vsel %vm730, %v732, 0.0
      %v734 = vadd.f32 %v729, %v733
      %vm735 = vcmp.eq.s32.totalorder %v459, 55
      %s736 = sld [smem:[#allocation4 + $0x307]]
      %v737 = vstv %s736
      %v738 = vsel %vm735, %v737, 0.0
      %v739 = vadd.f32 %v734, %v738
      %vm740 = vcmp.eq.s32.totalorder %v459, 56
      %s741 = sld [smem:[#allocation4 + $0x380]]
      %v742 = vstv %s741
      %v743 = vsel %vm740, %v742, 0.0
      %v744 = vadd.f32 %v739, %v743
      %vm745 = vcmp.eq.s32.totalorder %v459, 57
      %s746 = sld [smem:[#allocation4 + $0x381]]
      %v747 = vstv %s746
      %v748 = vsel %vm745, %v747, 0.0
      %v749 = vadd.f32 %v744, %v748
      %vm750 = vcmp.eq.s32.totalorder %v459, 58
      %s751 = sld [smem:[#allocation4 + $0x382]]
      %v752 = vstv %s751
      %v753 = vsel %vm750, %v752, 0.0
      %v754 = vadd.f32 %v749, %v753
      %vm755 = vcmp.eq.s32.totalorder %v459, 59
      %s756 = sld [smem:[#allocation4 + $0x383]]
      %v757 = vstv %s756
      %v758 = vsel %vm755, %v757, 0.0
      %v759 = vadd.f32 %v754, %v758
      %vm760 = vcmp.eq.s32.totalorder %v459, 60
      %s761 = sld [smem:[#allocation4 + $0x384]]
      %v762 = vstv %s761
      %v763 = vsel %vm760, %v762, 0.0
      %v764 = vadd.f32 %v759, %v763
      %vm765 = vcmp.eq.s32.totalorder %v459, 61
      %s766 = sld [smem:[#allocation4 + $0x385]]
      %v767 = vstv %s766
      %v768 = vsel %vm765, %v767, 0.0
      %v769 = vadd.f32 %v764, %v768
      %vm770 = vcmp.eq.s32.totalorder %v459, 62
      %s771 = sld [smem:[#allocation4 + $0x386]]
      %v772 = vstv %s771
      %v773 = vsel %vm770, %v772, 0.0
      %v774 = vadd.f32 %v769, %v773
      %vm775 = vcmp.eq.s32.totalorder %v459, 63
      %s776 = sld [smem:[#allocation4 + $0x387]]
      %v777 = vstv %s776
      %v778 = vsel %vm775, %v777, 0.0
      %v779 = vadd.f32 %v774, %v778
      %v781 = vrot.slane %v136, 1
      %v782 = vrot.slane %v136, 2
      %v783 = vrot.slane %v136, 3
      %v784 = vrot.slane %v136, 4
      %v785 = vrot.slane %v136, 5
      %v786 = vrot.slane %v136, 6
      %v787 = vrot.slane %v136, 7
      %v796 = vmul.f32 %v270, %v136
      %v797 = vmul.f32 %v277, %v781
      %v798 = vmul.f32 %v284, %v782
      %v799 = vmul.f32 %v291, %v783
      %v800 = vmul.f32 %v298, %v784
      %v801 = vmul.f32 %v305, %v785
      %v802 = vmul.f32 %v312, %v786
      %v803 = vmul.f32 %v319, %v787
      %v804 = vmul.f32 %v779, %v138
      %v806 = vrot.slane %v804, 1
      %v807 = vrot.slane %v804, 2
      %v808 = vrot.slane %v804, 3
      %v809 = vrot.slane %v804, 4
      %v810 = vrot.slane %v804, 5
      %v811 = vrot.slane %v804, 6
      %v812 = vrot.slane %v804, 7
      %v821 = vadd.f32 %v796, %v804
      %v822 = vadd.f32 %v797, %v806
      %v823 = vadd.f32 %v798, %v807
      %v824 = vadd.f32 %v799, %v808
      %v825 = vadd.f32 %v800, %v809
      %v826 = vadd.f32 %v801, %v810
      %v827 = vadd.f32 %v802, %v811
      %v828 = vadd.f32 %v803, %v812
      %v830 = vrot.slane %v141, 1
      %v831 = vrot.slane %v141, 2
      %v832 = vrot.slane %v141, 3
      %v833 = vrot.slane %v141, 4
      %v834 = vrot.slane %v141, 5
      %v835 = vrot.slane %v141, 6
      %v836 = vrot.slane %v141, 7
      %v845 = vmul.f32 %v339, %v141
      %v846 = vmul.f32 %v346, %v830
      %v847 = vmul.f32 %v353, %v831
      %v848 = vmul.f32 %v360, %v832
      %v849 = vmul.f32 %v367, %v833
      %v850 = vmul.f32 %v374, %v834
      %v851 = vmul.f32 %v381, %v835
      %v852 = vmul.f32 %v388, %v836
      %v853 = vadd.f32 %v821, %v845
      %v854 = vadd.f32 %v822, %v846
      %v855 = vadd.f32 %v823, %v847
      %v856 = vadd.f32 %v824, %v848
      %v857 = vadd.f32 %v825, %v849
      %v858 = vadd.f32 %v826, %v850
      %v859 = vadd.f32 %v827, %v851
      %v860 = vadd.f32 %v828, %v852
      %v862 = vrot.slane %v149, 1
      %v863 = vrot.slane %v149, 2
      %v864 = vrot.slane %v149, 3
      %v865 = vrot.slane %v149, 4
      %v866 = vrot.slane %v149, 5
      %v867 = vrot.slane %v149, 6
      %v868 = vrot.slane %v149, 7
      %v877 = vmul.f32 %v408, %v149
      %v878 = vmul.f32 %v415, %v862
      %v879 = vmul.f32 %v422, %v863
      %v880 = vmul.f32 %v429, %v864
      %v881 = vmul.f32 %v436, %v865
      %v882 = vmul.f32 %v443, %v866
      %v883 = vmul.f32 %v450, %v867
      %v884 = vmul.f32 %v457, %v868
      %v885 = vadd.f32 %v853, %v877
      %v886 = vadd.f32 %v854, %v878
      %v887 = vadd.f32 %v855, %v879
      %v888 = vadd.f32 %v856, %v880
      %v889 = vadd.f32 %v857, %v881
      %v890 = vadd.f32 %v858, %v882
      %v891 = vadd.f32 %v859, %v883
      %v892 = vadd.f32 %v860, %v884
      %v901 = vrot.slane %v886, 7
      %vm902 = vcmask 1041409
      %v903 = vsel %vm902, %v901, %v885
      %v904 = vrot.slane %v887, 6
      %vm905 = vcmask 1042434
      %v906 = vsel %vm905, %v904, %v903
      %v907 = vrot.slane %v888, 5
      %vm908 = vcmask 1043459
      %v909 = vsel %vm908, %v907, %v906
      %v910 = vrot.slane %v889, 4
      %vm911 = vcmask 1044484
      %v912 = vsel %vm911, %v910, %v909
      %v913 = vrot.slane %v890, 3
      %vm914 = vcmask 1045509
      %v915 = vsel %vm914, %v913, %v912
      %v916 = vrot.slane %v891, 2
      %vm917 = vcmask 1046534
      %v918 = vsel %vm917, %v916, %v915
      %v919 = vrot.slane %v892, 1
      %vm920 = vcmask 1047559
      %v921 = vsel %vm920, %v919, %v918
      %v923 = vsel %vm263, %v921, 0.0
      %v924 = vrot.slane %v923, 4
      %v925 = vadd.f32 %v923, %v924
      %v926 = vrot.slane %v925, 2
      %v927 = vadd.f32 %v925, %v926
      %v928 = vrot.slane %v927, 1
      %v929 = vadd.f32 %v927, %v928
      %v930 = vadd.f32 %v109, %v929
      %v931 = vld [vmem:[%s112] sm:$0xff]
      %v932 = vsel %vm263, %v108, -inf
      %v933 = vrot.slane %v932, 4
      %v934 = vmax.f32 %v932, %v933
      %v935 = vrot.slane %v934, 2
      %v936 = vmax.f32 %v934, %v935
      %v937 = vrot.slane %v936, 1
      %v938 = vmax.f32 %v936, %v937
      %v939 = vsub.f32 %v108, %v938
      %v940 = vmul.f32 %v939, 1.442695
      %v941 = vpow.pop %v940
      %v942 = vlaneseq
      %v943 = vshrl.u32 %v942, 7
      %v944 = vsub.s32 0, %v943
      %v945 = vrot.slane %v941, %v944
      %v946 = vmul.f32 %v55, %v945
      %v947 = vlaneseq
      %v948 = vshrl.u32 %v947, 7
      %v949 = vsub.s32 1, %v948
      %v950 = vrot.slane %v941, %v949
      %v951 = vmul.f32 %v59, %v950
      %v952 = vadd.f32 %v946, %v951
      %v953 = vlaneseq
      %v954 = vshrl.u32 %v953, 7
      %v955 = vsub.s32 2, %v954
      %v956 = vrot.slane %v941, %v955
      %v957 = vmul.f32 %v63, %v956
      %v958 = vlaneseq
      %v959 = vshrl.u32 %v958, 7
      %v960 = vsub.s32 3, %v959
      %v961 = vrot.slane %v941, %v960
      %v962 = vmul.f32 %v67, %v961
      %v963 = vadd.f32 %v957, %v962
      %v964 = vadd.f32 %v952, %v963
      %v965 = vlaneseq
      %v966 = vshrl.u32 %v965, 7
      %v967 = vsub.s32 4, %v966
      %v968 = vrot.slane %v941, %v967
      %v969 = vmul.f32 %v71, %v968
      %v970 = vlaneseq
      %v971 = vshrl.u32 %v970, 7
      %v972 = vsub.s32 5, %v971
      %v973 = vrot.slane %v941, %v972
      %v974 = vmul.f32 %v75, %v973
      %v975 = vadd.f32 %v969, %v974
      %v976 = vadd.f32 %v964, %v975
      %v977 = vlaneseq
      %v978 = vshrl.u32 %v977, 7
      %v979 = vsub.s32 6, %v978
      %v980 = vrot.slane %v941, %v979
      %v981 = vmul.f32 %v79, %v980
      %v982 = vlaneseq
      %v983 = vshrl.u32 %v982, 7
      %v984 = vsub.s32 7, %v983
      %v985 = vrot.slane %v941, %v984
      %v986 = vmul.f32 %v83, %v985
      %v987 = vadd.f32 %v981, %v986
      %v988 = vadd.f32 %v976, %v987
      %990 = vset.pattern.permute.xlu0 0
      %991 = vperm.xlu0 %990, %v49
      %v992 = vpop.permute.xlu0 %991
      %v994 = vadd.f32 %v931, %v992
      %v995 = vlog2.pop %v988
      %v996 = vmul.f32 %v995, 0.6931472
      %v997 = vadd.f32 %v938, %v996
      %v998 = vadd.f32 %v994, %v997
      %p999 = scmp.gt.s32.totalorder %s125, 0
      %vm1000 = vcmp.lt.s32.totalorder %v128, %v47
      %s1001 = scalar_select %p999, 1, 0
      %v1002 = vstv %s1001
      %vm1003 = vcmp.eq.s32.totalorder %v1002, 1
      %vm1004 = vmand %vm1003, %vm1000
      %v1005 = vsel %vm1004, 1, 0
      %v1006 = vlaneseq
      %v1007 = vshrl.u32 %v1006, 7
      %v1008 = vsub.s32 0, %v1007
      %v1009 = vrot.slane %v1005, %v1008
      %vm1010 = vcmp.eq.s32.totalorder %v1009, 1
      %v1011 = vsel %vm1010, %v998, %v108
      %s1012 = sadd.s32 %s125, 1
      %s1013 = sadd.s32 %s110, 1
      %s1014 = smul.u32 %s1013, 8
      %s1015 = scalar_lea.vmem %s0, %s1014
      %v1016 = vld [vmem:[%s1015] sm:$0xff]
      %v1017 = vsel %vm263, %v1011, -inf
      %v1018 = vrot.slane %v1017, 4
      %v1019 = vmax.f32 %v1017, %v1018
      %v1020 = vrot.slane %v1019, 2
      %v1021 = vmax.f32 %v1019, %v1020
      %v1022 = vrot.slane %v1021, 1
      %v1023 = vmax.f32 %v1021, %v1022
      %v1024 = vsub.f32 %v1011, %v1023
      %v1025 = vmul.f32 %v1024, 1.442695
      %v1026 = vpow.pop %v1025
      %v1027 = vlaneseq
      %v1028 = vshrl.u32 %v1027, 7
      %v1029 = vsub.s32 0, %v1028
      %v1030 = vrot.slane %v1026, %v1029
      %v1031 = vmul.f32 %v55, %v1030
      %v1032 = vlaneseq
      %v1033 = vshrl.u32 %v1032, 7
      %v1034 = vsub.s32 1, %v1033
      %v1035 = vrot.slane %v1026, %v1034
      %v1036 = vmul.f32 %v59, %v1035
      %v1037 = vadd.f32 %v1031, %v1036
      %v1038 = vlaneseq
      %v1039 = vshrl.u32 %v1038, 7
      %v1040 = vsub.s32 2, %v1039
      %v1041 = vrot.slane %v1026, %v1040
      %v1042 = vmul.f32 %v63, %v1041
      %v1043 = vlaneseq
      %v1044 = vshrl.u32 %v1043, 7
      %v1045 = vsub.s32 3, %v1044
      %v1046 = vrot.slane %v1026, %v1045
      %v1047 = vmul.f32 %v67, %v1046
      %v1048 = vadd.f32 %v1042, %v1047
      %v1049 = vadd.f32 %v1037, %v1048
      %v1050 = vlaneseq
      %v1051 = vshrl.u32 %v1050, 7
      %v1052 = vsub.s32 4, %v1051
      %v1053 = vrot.slane %v1026, %v1052
      %v1054 = vmul.f32 %v71, %v1053
      %v1055 = vlaneseq
      %v1056 = vshrl.u32 %v1055, 7
      %v1057 = vsub.s32 5, %v1056
      %v1058 = vrot.slane %v1026, %v1057
      %v1059 = vmul.f32 %v75, %v1058
      %v1060 = vadd.f32 %v1054, %v1059
      %v1061 = vadd.f32 %v1049, %v1060
      %v1062 = vlaneseq
      %v1063 = vshrl.u32 %v1062, 7
      %v1064 = vsub.s32 6, %v1063
      %v1065 = vrot.slane %v1026, %v1064
      %v1066 = vmul.f32 %v79, %v1065
      %v1067 = vlaneseq
      %v1068 = vshrl.u32 %v1067, 7
      %v1069 = vsub.s32 7, %v1068
      %v1070 = vrot.slane %v1026, %v1069
      %v1071 = vmul.f32 %v83, %v1070
      %v1072 = vadd.f32 %v1066, %v1071
      %v1073 = vadd.f32 %v1061, %v1072
      %v1074 = vadd.f32 %v1016, %v992
      %v1075 = vlog2.pop %v1073
      %v1076 = vmul.f32 %v1075, 0.6931472
      %v1077 = vadd.f32 %v1023, %v1076
      %v1078 = vadd.f32 %v1074, %v1077
      %p1079 = scmp.gt.s32.totalorder %s1012, 0
      %v1080 = vstv %s1012
      %vm1081 = vcmp.lt.s32.totalorder %v1080, %v47
      %s1082 = scalar_select %p1079, 1, 0
      %v1083 = vstv %s1082
      %vm1084 = vcmp.eq.s32.totalorder %v1083, 1
      %vm1085 = vmand %vm1084, %vm1081
      %v1086 = vsel %vm1085, 1, 0
      %v1087 = vlaneseq
      %v1088 = vshrl.u32 %v1087, 7
      %v1089 = vsub.s32 0, %v1088
      %v1090 = vrot.slane %v1086, %v1089
      %vm1091 = vcmp.eq.s32.totalorder %v1090, 1
      %v1092 = vsel %vm1091, %v1078, %v1011
      %s1093 = sadd.s32 %s125, 2
      %s1094 = sadd.s32 %s110, 2
      %s1095 = smul.u32 %s1094, 8
      %s1096 = scalar_lea.vmem %s0, %s1095
      %v1097 = vld [vmem:[%s1096] sm:$0xff]
      %v1098 = vsel %vm263, %v1092, -inf
      %v1099 = vrot.slane %v1098, 4
      %v1100 = vmax.f32 %v1098, %v1099
      %v1101 = vrot.slane %v1100, 2
      %v1102 = vmax.f32 %v1100, %v1101
      %v1103 = vrot.slane %v1102, 1
      %v1104 = vmax.f32 %v1102, %v1103
      %v1105 = vsub.f32 %v1092, %v1104
      %v1106 = vmul.f32 %v1105, 1.442695
      %v1107 = vpow.pop %v1106
      %v1108 = vlaneseq
      %v1109 = vshrl.u32 %v1108, 7
      %v1110 = vsub.s32 0, %v1109
      %v1111 = vrot.slane %v1107, %v1110
      %v1112 = vmul.f32 %v55, %v1111
      %v1113 = vlaneseq
      %v1114 = vshrl.u32 %v1113, 7
      %v1115 = vsub.s32 1, %v1114
      %v1116 = vrot.slane %v1107, %v1115
      %v1117 = vmul.f32 %v59, %v1116
      %v1118 = vadd.f32 %v1112, %v1117
      %v1119 = vlaneseq
      %v1120 = vshrl.u32 %v1119, 7
      %v1121 = vsub.s32 2, %v1120
      %v1122 = vrot.slane %v1107, %v1121
      %v1123 = vmul.f32 %v63, %v1122
      %v1124 = vlaneseq
      %v1125 = vshrl.u32 %v1124, 7
      %v1126 = vsub.s32 3, %v1125
      %v1127 = vrot.slane %v1107, %v1126
      %v1128 = vmul.f32 %v67, %v1127
      %v1129 = vadd.f32 %v1123, %v1128
      %v1130 = vadd.f32 %v1118, %v1129
      %v1131 = vlaneseq
      %v1132 = vshrl.u32 %v1131, 7
      %v1133 = vsub.s32 4, %v1132
      %v1134 = vrot.slane %v1107, %v1133
      %v1135 = vmul.f32 %v71, %v1134
      %v1136 = vlaneseq
      %v1137 = vshrl.u32 %v1136, 7
      %v1138 = vsub.s32 5, %v1137
      %v1139 = vrot.slane %v1107, %v1138
      %v1140 = vmul.f32 %v75, %v1139
      %v1141 = vadd.f32 %v1135, %v1140
      %v1142 = vadd.f32 %v1130, %v1141
      %v1143 = vlaneseq
      %v1144 = vshrl.u32 %v1143, 7
      %v1145 = vsub.s32 6, %v1144
      %v1146 = vrot.slane %v1107, %v1145
      %v1147 = vmul.f32 %v79, %v1146
      %v1148 = vlaneseq
      %v1149 = vshrl.u32 %v1148, 7
      %v1150 = vsub.s32 7, %v1149
      %v1151 = vrot.slane %v1107, %v1150
      %v1152 = vmul.f32 %v83, %v1151
      %v1153 = vadd.f32 %v1147, %v1152
      %v1154 = vadd.f32 %v1142, %v1153
      %v1155 = vadd.f32 %v1097, %v992
      %v1156 = vlog2.pop %v1154
      %v1157 = vmul.f32 %v1156, 0.6931472
      %v1158 = vadd.f32 %v1104, %v1157
      %v1159 = vadd.f32 %v1155, %v1158
      %p1160 = scmp.gt.s32.totalorder %s1093, 0
      %v1161 = vstv %s1093
      %vm1162 = vcmp.lt.s32.totalorder %v1161, %v47
      %s1163 = scalar_select %p1160, 1, 0
      %v1164 = vstv %s1163
      %vm1165 = vcmp.eq.s32.totalorder %v1164, 1
      %vm1166 = vmand %vm1165, %vm1162
      %v1167 = vsel %vm1166, 1, 0
      %v1168 = vlaneseq
      %v1169 = vshrl.u32 %v1168, 7
      %v1170 = vsub.s32 0, %v1169
      %v1171 = vrot.slane %v1167, %v1170
      %vm1172 = vcmp.eq.s32.totalorder %v1171, 1
      %v1173 = vsel %vm1172, %v1159, %v1092
      %s1174 = sadd.s32 %s125, 3
      %s1175 = sadd.s32 %s110, 3
      %s1176 = smul.u32 %s1175, 8
      %s1177 = scalar_lea.vmem %s0, %s1176
      %v1178 = vld [vmem:[%s1177] sm:$0xff]
      %v1179 = vsel %vm263, %v1173, -inf
      %v1180 = vrot.slane %v1179, 4
      %v1181 = vmax.f32 %v1179, %v1180
      %v1182 = vrot.slane %v1181, 2
      %v1183 = vmax.f32 %v1181, %v1182
      %v1184 = vrot.slane %v1183, 1
      %v1185 = vmax.f32 %v1183, %v1184
      %v1186 = vsub.f32 %v1173, %v1185
      %v1187 = vmul.f32 %v1186, 1.442695
      %v1188 = vpow.pop %v1187
      %v1189 = vlaneseq
      %v1190 = vshrl.u32 %v1189, 7
      %v1191 = vsub.s32 0, %v1190
      %v1192 = vrot.slane %v1188, %v1191
      %v1193 = vmul.f32 %v55, %v1192
      %v1194 = vlaneseq
      %v1195 = vshrl.u32 %v1194, 7
      %v1196 = vsub.s32 1, %v1195
      %v1197 = vrot.slane %v1188, %v1196
      %v1198 = vmul.f32 %v59, %v1197
      %v1199 = vadd.f32 %v1193, %v1198
      %v1200 = vlaneseq
      %v1201 = vshrl.u32 %v1200, 7
      %v1202 = vsub.s32 2, %v1201
      %v1203 = vrot.slane %v1188, %v1202
      %v1204 = vmul.f32 %v63, %v1203
      %v1205 = vlaneseq
      %v1206 = vshrl.u32 %v1205, 7
      %v1207 = vsub.s32 3, %v1206
      %v1208 = vrot.slane %v1188, %v1207
      %v1209 = vmul.f32 %v67, %v1208
      %v1210 = vadd.f32 %v1204, %v1209
      %v1211 = vadd.f32 %v1199, %v1210
      %v1212 = vlaneseq
      %v1213 = vshrl.u32 %v1212, 7
      %v1214 = vsub.s32 4, %v1213
      %v1215 = vrot.slane %v1188, %v1214
      %v1216 = vmul.f32 %v71, %v1215
      %v1217 = vlaneseq
      %v1218 = vshrl.u32 %v1217, 7
      %v1219 = vsub.s32 5, %v1218
      %v1220 = vrot.slane %v1188, %v1219
      %v1221 = vmul.f32 %v75, %v1220
      %v1222 = vadd.f32 %v1216, %v1221
      %v1223 = vadd.f32 %v1211, %v1222
      %v1224 = vlaneseq
      %v1225 = vshrl.u32 %v1224, 7
      %v1226 = vsub.s32 6, %v1225
      %v1227 = vrot.slane %v1188, %v1226
      %v1228 = vmul.f32 %v79, %v1227
      %v1229 = vlaneseq
      %v1230 = vshrl.u32 %v1229, 7
      %v1231 = vsub.s32 7, %v1230
      %v1232 = vrot.slane %v1188, %v1231
      %v1233 = vmul.f32 %v83, %v1232
      %v1234 = vadd.f32 %v1228, %v1233
      %v1235 = vadd.f32 %v1223, %v1234
      %v1236 = vadd.f32 %v1178, %v992
      %v1237 = vlog2.pop %v1235
      %v1238 = vmul.f32 %v1237, 0.6931472
      %v1239 = vadd.f32 %v1185, %v1238
      %v1240 = vadd.f32 %v1236, %v1239
      %p1241 = scmp.gt.s32.totalorder %s1174, 0
      %v1242 = vstv %s1174
      %vm1243 = vcmp.lt.s32.totalorder %v1242, %v47
      %s1244 = scalar_select %p1241, 1, 0
      %v1245 = vstv %s1244
      %vm1246 = vcmp.eq.s32.totalorder %v1245, 1
      %vm1247 = vmand %vm1246, %vm1243
      %v1248 = vsel %vm1247, 1, 0
      %v1249 = vlaneseq
      %v1250 = vshrl.u32 %v1249, 7
      %v1251 = vsub.s32 0, %v1250
      %v1252 = vrot.slane %v1248, %v1251
      %vm1253 = vcmp.eq.s32.totalorder %v1252, 1
      %v1254 = vsel %vm1253, %v1240, %v1173
      %s1255 = sadd.s32 %s125, 4
      %s1256 = sadd.s32 %s110, 4
      %s1257 = smul.u32 %s1256, 8
      %s1258 = scalar_lea.vmem %s0, %s1257
      %v1259 = vld [vmem:[%s1258] sm:$0xff]
      %v1260 = vsel %vm263, %v1254, -inf
      %v1261 = vrot.slane %v1260, 4
      %v1262 = vmax.f32 %v1260, %v1261
      %v1263 = vrot.slane %v1262, 2
      %v1264 = vmax.f32 %v1262, %v1263
      %v1265 = vrot.slane %v1264, 1
      %v1266 = vmax.f32 %v1264, %v1265
      %v1267 = vsub.f32 %v1254, %v1266
      %v1268 = vmul.f32 %v1267, 1.442695
      %v1269 = vpow.pop %v1268
      %v1270 = vlaneseq
      %v1271 = vshrl.u32 %v1270, 7
      %v1272 = vsub.s32 0, %v1271
      %v1273 = vrot.slane %v1269, %v1272
      %v1274 = vmul.f32 %v55, %v1273
      %v1275 = vlaneseq
      %v1276 = vshrl.u32 %v1275, 7
      %v1277 = vsub.s32 1, %v1276
      %v1278 = vrot.slane %v1269, %v1277
      %v1279 = vmul.f32 %v59, %v1278
      %v1280 = vadd.f32 %v1274, %v1279
      %v1281 = vlaneseq
      %v1282 = vshrl.u32 %v1281, 7
      %v1283 = vsub.s32 2, %v1282
      %v1284 = vrot.slane %v1269, %v1283
      %v1285 = vmul.f32 %v63, %v1284
      %v1286 = vlaneseq
      %v1287 = vshrl.u32 %v1286, 7
      %v1288 = vsub.s32 3, %v1287
      %v1289 = vrot.slane %v1269, %v1288
      %v1290 = vmul.f32 %v67, %v1289
      %v1291 = vadd.f32 %v1285, %v1290
      %v1292 = vadd.f32 %v1280, %v1291
      %v1293 = vlaneseq
      %v1294 = vshrl.u32 %v1293, 7
      %v1295 = vsub.s32 4, %v1294
      %v1296 = vrot.slane %v1269, %v1295
      %v1297 = vmul.f32 %v71, %v1296
      %v1298 = vlaneseq
      %v1299 = vshrl.u32 %v1298, 7
      %v1300 = vsub.s32 5, %v1299
      %v1301 = vrot.slane %v1269, %v1300
      %v1302 = vmul.f32 %v75, %v1301
      %v1303 = vadd.f32 %v1297, %v1302
      %v1304 = vadd.f32 %v1292, %v1303
      %v1305 = vlaneseq
      %v1306 = vshrl.u32 %v1305, 7
      %v1307 = vsub.s32 6, %v1306
      %v1308 = vrot.slane %v1269, %v1307
      %v1309 = vmul.f32 %v79, %v1308
      %v1310 = vlaneseq
      %v1311 = vshrl.u32 %v1310, 7
      %v1312 = vsub.s32 7, %v1311
      %v1313 = vrot.slane %v1269, %v1312
      %v1314 = vmul.f32 %v83, %v1313
      %v1315 = vadd.f32 %v1309, %v1314
      %v1316 = vadd.f32 %v1304, %v1315
      %v1317 = vadd.f32 %v1259, %v992
      %v1318 = vlog2.pop %v1316
      %v1319 = vmul.f32 %v1318, 0.6931472
      %v1320 = vadd.f32 %v1266, %v1319
      %v1321 = vadd.f32 %v1317, %v1320
      %p1322 = scmp.gt.s32.totalorder %s1255, 0
      %v1323 = vstv %s1255
      %vm1324 = vcmp.lt.s32.totalorder %v1323, %v47
      %s1325 = scalar_select %p1322, 1, 0
      %v1326 = vstv %s1325
      %vm1327 = vcmp.eq.s32.totalorder %v1326, 1
      %vm1328 = vmand %vm1327, %vm1324
      %v1329 = vsel %vm1328, 1, 0
      %v1330 = vlaneseq
      %v1331 = vshrl.u32 %v1330, 7
      %v1332 = vsub.s32 0, %v1331
      %v1333 = vrot.slane %v1329, %v1332
      %vm1334 = vcmp.eq.s32.totalorder %v1333, 1
      %v1335 = vsel %vm1334, %v1321, %v1254
      %s1336 = sadd.s32 %s125, 5
      %s1337 = sadd.s32 %s110, 5
      %s1338 = smul.u32 %s1337, 8
      %s1339 = scalar_lea.vmem %s0, %s1338
      %v1340 = vld [vmem:[%s1339] sm:$0xff]
      %v1341 = vsel %vm263, %v1335, -inf
      %v1342 = vrot.slane %v1341, 4
      %v1343 = vmax.f32 %v1341, %v1342
      %v1344 = vrot.slane %v1343, 2
      %v1345 = vmax.f32 %v1343, %v1344
      %v1346 = vrot.slane %v1345, 1
      %v1347 = vmax.f32 %v1345, %v1346
      %v1348 = vsub.f32 %v1335, %v1347
      %v1349 = vmul.f32 %v1348, 1.442695
      %v1350 = vpow.pop %v1349
      %v1351 = vlaneseq
      %v1352 = vshrl.u32 %v1351, 7
      %v1353 = vsub.s32 0, %v1352
      %v1354 = vrot.slane %v1350, %v1353
      %v1355 = vmul.f32 %v55, %v1354
      %v1356 = vlaneseq
      %v1357 = vshrl.u32 %v1356, 7
      %v1358 = vsub.s32 1, %v1357
      %v1359 = vrot.slane %v1350, %v1358
      %v1360 = vmul.f32 %v59, %v1359
      %v1361 = vadd.f32 %v1355, %v1360
      %v1362 = vlaneseq
      %v1363 = vshrl.u32 %v1362, 7
      %v1364 = vsub.s32 2, %v1363
      %v1365 = vrot.slane %v1350, %v1364
      %v1366 = vmul.f32 %v63, %v1365
      %v1367 = vlaneseq
      %v1368 = vshrl.u32 %v1367, 7
      %v1369 = vsub.s32 3, %v1368
      %v1370 = vrot.slane %v1350, %v1369
      %v1371 = vmul.f32 %v67, %v1370
      %v1372 = vadd.f32 %v1366, %v1371
      %v1373 = vadd.f32 %v1361, %v1372
      %v1374 = vlaneseq
      %v1375 = vshrl.u32 %v1374, 7
      %v1376 = vsub.s32 4, %v1375
      %v1377 = vrot.slane %v1350, %v1376
      %v1378 = vmul.f32 %v71, %v1377
      %v1379 = vlaneseq
      %v1380 = vshrl.u32 %v1379, 7
      %v1381 = vsub.s32 5, %v1380
      %v1382 = vrot.slane %v1350, %v1381
      %v1383 = vmul.f32 %v75, %v1382
      %v1384 = vadd.f32 %v1378, %v1383
      %v1385 = vadd.f32 %v1373, %v1384
      %v1386 = vlaneseq
      %v1387 = vshrl.u32 %v1386, 7
      %v1388 = vsub.s32 6, %v1387
      %v1389 = vrot.slane %v1350, %v1388
      %v1390 = vmul.f32 %v79, %v1389
      %v1391 = vlaneseq
      %v1392 = vshrl.u32 %v1391, 7
      %v1393 = vsub.s32 7, %v1392
      %v1394 = vrot.slane %v1350, %v1393
      %v1395 = vmul.f32 %v83, %v1394
      %v1396 = vadd.f32 %v1390, %v1395
      %v1397 = vadd.f32 %v1385, %v1396
      %v1398 = vadd.f32 %v1340, %v992
      %v1399 = vlog2.pop %v1397
      %v1400 = vmul.f32 %v1399, 0.6931472
      %v1401 = vadd.f32 %v1347, %v1400
      %v1402 = vadd.f32 %v1398, %v1401
      %p1403 = scmp.gt.s32.totalorder %s1336, 0
      %v1404 = vstv %s1336
      %vm1405 = vcmp.lt.s32.totalorder %v1404, %v47
      %s1406 = scalar_select %p1403, 1, 0
      %v1407 = vstv %s1406
      %vm1408 = vcmp.eq.s32.totalorder %v1407, 1
      %vm1409 = vmand %vm1408, %vm1405
      %v1410 = vsel %vm1409, 1, 0
      %v1411 = vlaneseq
      %v1412 = vshrl.u32 %v1411, 7
      %v1413 = vsub.s32 0, %v1412
      %v1414 = vrot.slane %v1410, %v1413
      %vm1415 = vcmp.eq.s32.totalorder %v1414, 1
      %v1416 = vsel %vm1415, %v1402, %v1335
      %s1417 = sadd.s32 %s125, 6
      %s1418 = sadd.s32 %s110, 6
      %s1419 = smul.u32 %s1418, 8
      %s1420 = scalar_lea.vmem %s0, %s1419
      %v1421 = vld [vmem:[%s1420] sm:$0xff]
      %v1422 = vsel %vm263, %v1416, -inf
      %v1423 = vrot.slane %v1422, 4
      %v1424 = vmax.f32 %v1422, %v1423
      %v1425 = vrot.slane %v1424, 2
      %v1426 = vmax.f32 %v1424, %v1425
      %v1427 = vrot.slane %v1426, 1
      %v1428 = vmax.f32 %v1426, %v1427
      %v1429 = vsub.f32 %v1416, %v1428
      %v1430 = vmul.f32 %v1429, 1.442695
      %v1431 = vpow.pop %v1430
      %v1432 = vlaneseq
      %v1433 = vshrl.u32 %v1432, 7
      %v1434 = vsub.s32 0, %v1433
      %v1435 = vrot.slane %v1431, %v1434
      %v1436 = vmul.f32 %v55, %v1435
      %v1437 = vlaneseq
      %v1438 = vshrl.u32 %v1437, 7
      %v1439 = vsub.s32 1, %v1438
      %v1440 = vrot.slane %v1431, %v1439
      %v1441 = vmul.f32 %v59, %v1440
      %v1442 = vadd.f32 %v1436, %v1441
      %v1443 = vlaneseq
      %v1444 = vshrl.u32 %v1443, 7
      %v1445 = vsub.s32 2, %v1444
      %v1446 = vrot.slane %v1431, %v1445
      %v1447 = vmul.f32 %v63, %v1446
      %v1448 = vlaneseq
      %v1449 = vshrl.u32 %v1448, 7
      %v1450 = vsub.s32 3, %v1449
      %v1451 = vrot.slane %v1431, %v1450
      %v1452 = vmul.f32 %v67, %v1451
      %v1453 = vadd.f32 %v1447, %v1452
      %v1454 = vadd.f32 %v1442, %v1453
      %v1455 = vlaneseq
      %v1456 = vshrl.u32 %v1455, 7
      %v1457 = vsub.s32 4, %v1456
      %v1458 = vrot.slane %v1431, %v1457
      %v1459 = vmul.f32 %v71, %v1458
      %v1460 = vlaneseq
      %v1461 = vshrl.u32 %v1460, 7
      %v1462 = vsub.s32 5, %v1461
      %v1463 = vrot.slane %v1431, %v1462
      %v1464 = vmul.f32 %v75, %v1463
      %v1465 = vadd.f32 %v1459, %v1464
      %v1466 = vadd.f32 %v1454, %v1465
      %v1467 = vlaneseq
      %v1468 = vshrl.u32 %v1467, 7
      %v1469 = vsub.s32 6, %v1468
      %v1470 = vrot.slane %v1431, %v1469
      %v1471 = vmul.f32 %v79, %v1470
      %v1472 = vlaneseq
      %v1473 = vshrl.u32 %v1472, 7
      %v1474 = vsub.s32 7, %v1473
      %v1475 = vrot.slane %v1431, %v1474
      %v1476 = vmul.f32 %v83, %v1475
      %v1477 = vadd.f32 %v1471, %v1476
      %v1478 = vadd.f32 %v1466, %v1477
      %v1479 = vadd.f32 %v1421, %v992
      %v1480 = vlog2.pop %v1478
      %v1481 = vmul.f32 %v1480, 0.6931472
      %v1482 = vadd.f32 %v1428, %v1481
      %v1483 = vadd.f32 %v1479, %v1482
      %p1484 = scmp.gt.s32.totalorder %s1417, 0
      %v1485 = vstv %s1417
      %vm1486 = vcmp.lt.s32.totalorder %v1485, %v47
      %s1487 = scalar_select %p1484, 1, 0
      %v1488 = vstv %s1487
      %vm1489 = vcmp.eq.s32.totalorder %v1488, 1
      %vm1490 = vmand %vm1489, %vm1486
      %v1491 = vsel %vm1490, 1, 0
      %v1492 = vlaneseq
      %v1493 = vshrl.u32 %v1492, 7
      %v1494 = vsub.s32 0, %v1493
      %v1495 = vrot.slane %v1491, %v1494
      %vm1496 = vcmp.eq.s32.totalorder %v1495, 1
      %v1497 = vsel %vm1496, %v1483, %v1416
      %s1498 = sadd.s32 %s125, 7
      %s1499 = sadd.s32 %s110, 7
      %s1500 = smul.u32 %s1499, 8
      %s1501 = scalar_lea.vmem %s0, %s1500
      %v1502 = vld [vmem:[%s1501] sm:$0xff]
      %v1503 = vsel %vm263, %v1497, -inf
      %v1504 = vrot.slane %v1503, 4
      %v1505 = vmax.f32 %v1503, %v1504
      %v1506 = vrot.slane %v1505, 2
      %v1507 = vmax.f32 %v1505, %v1506
      %v1508 = vrot.slane %v1507, 1
      %v1509 = vmax.f32 %v1507, %v1508
      %v1510 = vsub.f32 %v1497, %v1509
      %v1511 = vmul.f32 %v1510, 1.442695
      %v1512 = vpow.pop %v1511
      %v1513 = vlaneseq
      %v1514 = vshrl.u32 %v1513, 7
      %v1515 = vsub.s32 0, %v1514
      %v1516 = vrot.slane %v1512, %v1515
      %v1517 = vmul.f32 %v55, %v1516
      %v1518 = vlaneseq
      %v1519 = vshrl.u32 %v1518, 7
      %v1520 = vsub.s32 1, %v1519
      %v1521 = vrot.slane %v1512, %v1520
      %v1522 = vmul.f32 %v59, %v1521
      %v1523 = vadd.f32 %v1517, %v1522
      %v1524 = vlaneseq
      %v1525 = vshrl.u32 %v1524, 7
      %v1526 = vsub.s32 2, %v1525
      %v1527 = vrot.slane %v1512, %v1526
      %v1528 = vmul.f32 %v63, %v1527
      %v1529 = vlaneseq
      %v1530 = vshrl.u32 %v1529, 7
      %v1531 = vsub.s32 3, %v1530
      %v1532 = vrot.slane %v1512, %v1531
      %v1533 = vmul.f32 %v67, %v1532
      %v1534 = vadd.f32 %v1528, %v1533
      %v1535 = vadd.f32 %v1523, %v1534
      %v1536 = vlaneseq
      %v1537 = vshrl.u32 %v1536, 7
      %v1538 = vsub.s32 4, %v1537
      %v1539 = vrot.slane %v1512, %v1538
      %v1540 = vmul.f32 %v71, %v1539
      %v1541 = vlaneseq
      %v1542 = vshrl.u32 %v1541, 7
      %v1543 = vsub.s32 5, %v1542
      %v1544 = vrot.slane %v1512, %v1543
      %v1545 = vmul.f32 %v75, %v1544
      %v1546 = vadd.f32 %v1540, %v1545
      %v1547 = vadd.f32 %v1535, %v1546
      %v1548 = vlaneseq
      %v1549 = vshrl.u32 %v1548, 7
      %v1550 = vsub.s32 6, %v1549
      %v1551 = vrot.slane %v1512, %v1550
      %v1552 = vmul.f32 %v79, %v1551
      %v1553 = vlaneseq
      %v1554 = vshrl.u32 %v1553, 7
      %v1555 = vsub.s32 7, %v1554
      %v1556 = vrot.slane %v1512, %v1555
      %v1557 = vmul.f32 %v83, %v1556
      %v1558 = vadd.f32 %v1552, %v1557
      %v1559 = vadd.f32 %v1547, %v1558
      %v1560 = vadd.f32 %v1502, %v992
      %v1561 = vlog2.pop %v1559
      %v1562 = vmul.f32 %v1561, 0.6931472
      %v1563 = vadd.f32 %v1509, %v1562
      %v1564 = vadd.f32 %v1560, %v1563
      %p1565 = scmp.gt.s32.totalorder %s1498, 0
      %v1566 = vstv %s1498
      %vm1567 = vcmp.lt.s32.totalorder %v1566, %v47
      %s1568 = scalar_select %p1565, 1, 0
      %v1569 = vstv %s1568
      %vm1570 = vcmp.eq.s32.totalorder %v1569, 1
      %vm1571 = vmand %vm1570, %vm1567
      %v1572 = vsel %vm1571, 1, 0
      %v1573 = vlaneseq
      %v1574 = vshrl.u32 %v1573, 7
      %v1575 = vsub.s32 0, %v1574
      %v1576 = vrot.slane %v1572, %v1575
      %vm1577 = vcmp.eq.s32.totalorder %v1576, 1
      %v1578 = vsel %vm1577, %v1564, %v1497
    $region50: #{tpu_custom_call.1} parent=1 // loop_footer
      %s107 = sadd.s32 1, %s103
    $region51: #{tpu_custom_call.1} parent=1 // loop_footer_branch
      %102 = sbr.rel target = $region47
    $region52: #{tpu_custom_call.1} parent=1 // loop_exit
      _
    %vm1579 = vcmask 64512
    %1580 = vst.msk [vmem:[#allocation2] sm:$0xff] %vm1579, %v108
    %vm1581 = vcmask 57344
    %1582 = vst.msk [vmem:[#allocation3] sm:$0x1] %vm1581, %v109
    // Predicated region
    $region53: #{tpu_custom_call.1} parent=1 // pred_check
      %p1583 = pneg %p85
    $region54: #{tpu_custom_call.1} parent=1 // pred_check_branch
      %1585 = sbr.rel (%p1583) target = $region56
    $region55: #{tpu_custom_call.1} parent=1 // pred_region
      %1587 = vset.pattern.permute.xlu0 0
      %1588 = vperm.xlu0 %1587, %v51
      %v1589 = vpop.permute.xlu0 %1588
      %v1591 = vadd.f32 %v108, %v1589
      %v1592 = vsel %vm1579, %v1591, -inf
      %v1593 = vrot.slane %v1592, 4
      %v1594 = vmax.f32 %v1592, %v1593
      %v1595 = vrot.slane %v1594, 2
      %v1596 = vmax.f32 %v1594, %v1595
      %v1597 = vrot.slane %v1596, 1
      %v1598 = vmax.f32 %v1596, %v1597
      %v1599 = vsub.f32 %v1591, %v1598
      %v1600 = vmul.f32 %v1599, 1.442695
      %v1601 = vpow.pop %v1600
      %v1602 = vsel %vm1579, %v1601, 0.0
      %v1603 = vrot.slane %v1602, 4
      %v1604 = vadd.f32 %v1602, %v1603
      %v1605 = vrot.slane %v1604, 2
      %v1606 = vadd.f32 %v1604, %v1605
      %v1607 = vrot.slane %v1606, 1
      %v1608 = vadd.f32 %v1606, %v1607
      %v1609 = vlog2.pop %v1608
      %v1610 = vmul.f32 %v1609, 0.6931472
      %v1611 = vadd.f32 %v1598, %v1610
      %v1612 = vsub.f32 %v1611, %v109
      %1613 = vst.msk [vmem:[#allocation7] sm:$0x1] %vm1581, %v1612
    $region56: #{tpu_custom_call.1} parent=1 // pred_fallthru
      _
    // Predicated region
    $region57: #{tpu_custom_call.1} parent=1 // pred_check
      _
    $region58: #{tpu_custom_call.1} parent=1 // pred_check_branch
      %1615 = sbr.rel (0) target = $region60
    $region59: #{tpu_custom_call.1} parent=1 // pred_region
      %s1617 = ssub.s32 16, 16
      %1618 = vsyncadd [#allocation5], %s1617
      %s1620 = sshll.u32 [#allocation7], 4
      %s1621 = int_to_ptr.vmem [resolvable:$true] %s1620
      %1623 = dma.vmem_to_hbm [thread:$0]  %s1621, 16, %s9, [#allocation5]
    $region60: #{tpu_custom_call.1} parent=1 // pred_fallthru
      _
    // Predicated region
    $region61: #{tpu_custom_call.1} parent=1 // pred_check
      _
    $region62: #{tpu_custom_call.1} parent=1 // pred_check_branch
      %1625 = sbr.rel (0) target = $region64
    $region63: #{tpu_custom_call.1} parent=1 // pred_region
      %1626 = dma.done [#allocation5], 16
    $region64: #{tpu_custom_call.1} parent=1 // pred_fallthru
      _
    %1627 = vsyncpa [#allocation5], 1
    %1628 = vsyncpa [#allocation6], 1

</llo_original>
